<compile_context>
chip_gen: v7x
topology: tpu7x:2x2x1
jax: 0.10.0
libtpu: 0.0.40
codegen_flags: <defaults>
</compile_context>

<pallas_src>
import functools

import jax
import jax.numpy as jnp
import numpy as np
from jax.experimental import pallas as pl
from jax.experimental.pallas import tpu as pltpu

try:  # use scipy if present; otherwise the pure-python Hungarian fallback below
    from scipy.optimize import linear_sum_assignment as _scipy_lsa
except Exception:  # pragma: no cover
    _scipy_lsa = None


def _round_up(x, m):
    return ((x + m - 1) // m) * m


# ----------------------------------------------------------------------------------
# Pallas kernel: a block of batch elements per grid step -> (Bt, N_pad, T_pad) costs
# ----------------------------------------------------------------------------------
def _matcher_cost_kernel(logits_ref, boxes_ref, labels_ref, tgt_ref, cost_ref, *,
                         w_class, w_bbox, w_giou):
    # logits_ref : (Bt, N_pad, C_pad) f32  raw pred logits (padding filled with -1e9)
    # boxes_ref  : (Bt, N_pad, 4)     f32  pred boxes, normalized cxcywh
    # labels_ref : (Bt, 1, T_pad)     i32  target class ids (padded slots = 0)
    # tgt_ref    : (Bt, 16, T_pad)    f32  host-precomputed target rows:
    #                                      [cx, cy, w, h, x0, y0, x1, y1, area, 0...]
    # cost_ref   : (Bt, N_pad, T_pad) f32  output cost-matrix block

    # --- class cost: softmax over classes, one-hot gather as an MXU matmul ----------
    logits = logits_ref[...]                                       # (Bt, N, C)
    m = jnp.max(logits, axis=-1, keepdims=True)
    e = jnp.exp(logits - m)                                        # (Bt, N, C)
    inv_sum = pl.reciprocal(jnp.sum(e, axis=-1, keepdims=True),
                            approx=False)                          # (Bt, N, 1)

    labels = labels_ref[...]                                       # (Bt, 1, T) int32
    bt, _, c_pad = logits.shape
    t_pad = labels.shape[-1]
    class_iota = jax.lax.broadcasted_iota(jnp.int32, (bt, c_pad, t_pad), 1)
    onehot = (class_iota == labels).astype(jnp.float32)            # (Bt, C, T)

    gathered = jnp.einsum("bnc,bct->bnt", e, onehot,
                          preferred_element_type=jnp.float32,
                          precision=jax.lax.Precision.HIGHEST)     # e[:, :, tgt_ids]

    # running cost accumulator (single live full tile)
    cost = (-w_class) * gathered * inv_sum                         # == w_class * (-prob)

    # --- pred boxes as (Bt, N, 1) columns --------------------------------------------
    pb = boxes_ref[...]                                            # (Bt, N, 4) cxcywh
    p_cx = pb[:, :, 0:1]
    p_cy = pb[:, :, 1:2]
    p_w = pb[:, :, 2:3]
    p_h = pb[:, :, 3:4]
    p_x0 = p_cx - 0.5 * p_w
    p_y0 = p_cy - 0.5 * p_h
    p_x1 = p_cx + 0.5 * p_w
    p_y1 = p_cy + 0.5 * p_h

    # --- target rows (host-precomputed) as (Bt, 1, T) lane-broadcast rows -------------
    tg = tgt_ref[...]
    t_cx = tg[:, 0:1, :]
    t_cy = tg[:, 1:2, :]
    t_w = tg[:, 2:3, :]
    t_h = tg[:, 3:4, :]
    n_x0 = tg[:, 4:5, :]
    n_y0 = tg[:, 5:6, :]
    n_x1 = tg[:, 6:7, :]
    n_y1 = tg[:, 7:8, :]
    area_t = tg[:, 8:9, :]

    # --- L1 box cost (torch.cdist(..., p=1)) ------------------------------------------
    cost += w_bbox * (jnp.abs(p_cx - t_cx) + jnp.abs(p_cy - t_cy)
                      + jnp.abs(p_w - t_w) + jnp.abs(p_h - t_h))

    # --- generalized IoU cost -----------------------------------------------------------
    # The module's generalized_box_iou `iou - (area - iou*area)/area` is exactly
    # 2*iou - 1 (the enclosing-box area cancels), so only plain IoU is needed.
    area_p = (p_x1 - p_x0) * (p_y1 - p_y0)                          # (Bt, N, 1)
    ix0 = jnp.maximum(p_x0, n_x0)
    iy0 = jnp.maximum(p_y0, n_y0)
    ix1 = jnp.minimum(p_x1, n_x1)
    iy1 = jnp.minimum(p_y1, n_y1)
    inter = jnp.maximum(ix1 - ix0, 0.0) * jnp.maximum(iy1 - iy0, 0.0)
    union = area_p + area_t - inter
    iou = inter * pl.reciprocal(union, approx=False)                # (Bt, N, T)
    cost += w_giou * (1.0 - 2.0 * iou)                              # == w_giou*(-(2*iou-1))

    cost_ref[...] = cost.astype(cost_ref.dtype)


def _matcher_cost_pallas(logits_pad, boxes_pad, labels_pad, tgt_rows,
                         w_class, w_bbox, w_giou, block_b):
    B_pad, N_pad, C_pad = logits_pad.shape
    T_pad = labels_pad.shape[-1]
    R = tgt_rows.shape[1]
    kernel = functools.partial(_matcher_cost_kernel,
                               w_class=float(w_class),
                               w_bbox=float(w_bbox),
                               w_giou=float(w_giou))
    return pl.pallas_call(
        kernel,
        grid=(B_pad // block_b,),
        in_specs=[
            pl.BlockSpec((block_b, N_pad, C_pad), lambda b: (b, 0, 0)),
            pl.BlockSpec((block_b, N_pad, 4), lambda b: (b, 0, 0)),
            pl.BlockSpec((block_b, 1, T_pad), lambda b: (b, 0, 0)),
            pl.BlockSpec((block_b, R, T_pad), lambda b: (b, 0, 0)),
        ],
        out_specs=pl.BlockSpec((block_b, N_pad, T_pad), lambda b: (b, 0, 0)),
        out_shape=jax.ShapeDtypeStruct((B_pad, N_pad, T_pad), jnp.float32),
        compiler_params=pltpu.CompilerParams(dimension_semantics=("parallel",)),
    )(logits_pad, boxes_pad, labels_pad, tgt_rows)


# ----------------------------------------------------------------------------------
# Host-side Hungarian assignment (scipy if available, pure-python fallback otherwise)
# ----------------------------------------------------------------------------------
def _hungarian_lap(cost):
    """Rectangular min-cost assignment (shortest-augmenting-path Hungarian).
    Same contract as scipy.optimize.linear_sum_assignment."""
    c = np.asarray(cost, dtype=np.float64)
    transposed = c.shape[0] > c.shape[1]
    if transposed:
        c = c.T
    n, m = c.shape
    inf = float("inf")
    u = np.zeros(n + 1)
    v = np.zeros(m + 1)
    p = np.zeros(m + 1, dtype=np.int64)
    way = np.zeros(m + 1, dtype=np.int64)
    for i in range(1, n + 1):
        p[0] = i
        j0 = 0
        minv = np.full(m + 1, inf)
        used = np.zeros(m + 1, dtype=bool)
        while True:
            used[j0] = True
            i0 = p[j0]
            delta = inf
            j1 = 0
            for j in range(1, m + 1):
                if used[j]:
                    continue
                cur = c[i0 - 1, j - 1] - u[i0] - v[j]
                if cur < minv[j]:
                    minv[j] = cur
                    way[j] = j0
                if minv[j] < delta:
                    delta = minv[j]
                    j1 = j
            for j in range(m + 1):
                if used[j]:
                    u[p[j]] += delta
                    v[j] -= delta
                else:
                    minv[j] -= delta
            j0 = j1
            if p[j0] == 0:
                break
        while j0 != 0:
            j1 = way[j0]
            p[j0] = p[j1]
            j0 = j1
    rows, cols = [], []
    for j in range(1, m + 1):
        if p[j] != 0:
            rows.append(int(p[j]) - 1)
            cols.append(j - 1)
    rows = np.asarray(rows, dtype=np.int64)
    cols = np.asarray(cols, dtype=np.int64)
    if transposed:
        rows, cols = cols, rows
    order = np.argsort(rows, kind="stable")
    return rows[order], cols[order]


def _linear_sum_assignment(cost):
    if _scipy_lsa is not None:
        return _scipy_lsa(cost)
    return _hungarian_lap(cost)


# ----------------------------------------------------------------------------------
# HungarianMatcher forward: Pallas cost matrix + host-side assignment
# ----------------------------------------------------------------------------------
def hungarian_matcher(outputs, targets, *, cost_class=1.0, cost_bbox=5.0,
                      cost_giou=2.0):
    pred_logits = np.asarray(outputs["pred_logits"], np.float32)
    pred_boxes = np.asarray(outputs["pred_boxes"], np.float32)
    B, N, C = pred_logits.shape

    N_pad = _round_up(max(N, 8), 128)     # full-row tile, sublane/lane friendly
    C_pad = _round_up(C, 128)             # lane-dense class axis for the MXU gather
    T_pad = 128                           # lane-dense padded target axis
    ROWS = 16                             # sublane-aligned precomputed target rows

    # Batch blocking: amortize per-grid-step overhead, but keep >= 2 grid steps so
    # v7x's two TensorCores both get work. Bt <= 8 keeps VMEM << v5e's 16 MiB default.
    block_b = max(1, min(8, B // 2)) if B >= 2 else 1
    B_pad = _round_up(B, block_b)

    # Pad logits with a very negative value so padded classes contribute exp(...)=0.
    logits_pad = np.full((B_pad, N_pad, C_pad), -1e9, np.float32)
    logits_pad[:B, :N, :C] = pred_logits
    # Padded proposal rows / batches get a harmless valid box (sliced off on host).
    boxes_pad = np.full((B_pad, N_pad, 4), 0.5, np.float32)
    boxes_pad[:B, :N, :] = pred_boxes

    labels_pad = np.zeros((B_pad, 1, T_pad), np.int32)
    tgt_rows = np.zeros((B_pad, ROWS, T_pad), np.float32)
    # Default (padded) target box = full image: cxcywh (0.5,0.5,1,1), xyxy (0,0,1,1).
    tgt_rows[:, 0, :] = 0.5
    tgt_rows[:, 1, :] = 0.5
    tgt_rows[:, 2, :] = 1.0
    tgt_rows[:, 3, :] = 1.0
    tgt_rows[:, 6, :] = 1.0
    tgt_rows[:, 7, :] = 1.0
    tgt_rows[:, 8, :] = 1.0

    num_tgts = []
    for b, tgt in enumerate(targets):
        labels = np.asarray(tgt["labels"], np.int64).reshape(-1)
        boxes = np.asarray(tgt["boxes"], np.float32).reshape(-1, 4)
        Tb = labels.shape[0]
        assert Tb <= T_pad, "more targets than the padded target axis"
        num_tgts.append(Tb)
        if Tb == 0:
            continue
        labels_pad[b, 0, :Tb] = labels.astype(np.int32)
        # xyxy pixels -> cxcywh / 640 -> clamp(0, 1) -> back to xyxy + area.
        x0, y0, x1, y1 = boxes[:, 0], boxes[:, 1], boxes[:, 2], boxes[:, 3]
        cx = np.clip((x0 + x1) / 2.0 / 640.0, 0.0, 1.0)
        cy = np.clip((y0 + y1) / 2.0 / 640.0, 0.0, 1.0)
        w = np.clip((x1 - x0) / 640.0, 0.0, 1.0)
        h = np.clip((y1 - y0) / 640.0, 0.0, 1.0)
        nx0 = cx - 0.5 * w
        ny0 = cy - 0.5 * h
        nx1 = cx + 0.5 * w
        ny1 = cy + 0.5 * h
        tgt_rows[b, 0, :Tb] = cx
        tgt_rows[b, 1, :Tb] = cy
        tgt_rows[b, 2, :Tb] = w
        tgt_rows[b, 3, :Tb] = h
        tgt_rows[b, 4, :Tb] = nx0
        tgt_rows[b, 5, :Tb] = ny0
        tgt_rows[b, 6, :Tb] = nx1
        tgt_rows[b, 7, :Tb] = ny1
        tgt_rows[b, 8, :Tb] = (nx1 - nx0) * (ny1 - ny0)

    cost = _matcher_cost_pallas(
        jnp.asarray(logits_pad), jnp.asarray(boxes_pad),
        jnp.asarray(labels_pad), jnp.asarray(tgt_rows),
        cost_class, cost_bbox, cost_giou, block_b)
    cost = np.asarray(jax.block_until_ready(cost))

    indices = []
    for b, Tb in enumerate(num_tgts):
        if Tb == 0:
            indices.append((np.zeros((0,), np.int64), np.zeros((0,), np.int64)))
            continue
        # TODO(synk): linear_sum_assignment (Hungarian algorithm) is a sequential,
        # data-dependent host algorithm; it stays on the host exactly like the
        # PyTorch module's C.detach().cpu().numpy() -> scipy path.
        row, col = _linear_sum_assignment(cost[b, :N, :Tb])
        indices.append((np.asarray(row, np.int64), np.asarray(col, np.int64)))
    return indices, cost


# ----------------------------------------------------------------------------------
# Pure-numpy reference mirroring the PyTorch forward (for correctness checking)
# ----------------------------------------------------------------------------------
def _np_box_cxcywh_to_xyxy(x):
    cx, cy, w, h = x[..., 0], x[..., 1], x[..., 2], x[..., 3]
    return np.stack([cx - 0.5 * w, cy - 0.5 * h, cx + 0.5 * w, cy + 0.5 * h], -1)


def _np_box_iou(b1, b2):
    area1 = (b1[:, 2] - b1[:, 0]) * (b1[:, 3] - b1[:, 1])
    area2 = (b2[:, 2] - b2[:, 0]) * (b2[:, 3] - b2[:, 1])
    lt = np.maximum(b1[:, None, :2], b2[None, :, :2])
    rb = np.minimum(b1[:, None, 2:], b2[None, :, 2:])
    wh = np.clip(rb - lt, 0.0, None)
    inter = wh[..., 0] * wh[..., 1]
    union = area1[:, None] + area2[None, :] - inter
    return inter / union


def _np_generalized_box_iou(b1, b2):
    iou = _np_box_iou(b1, b2)
    lt = np.minimum(b1[:, None, :2], b2[None, :, :2])
    rb = np.maximum(b1[:, None, 2:], b2[None, :, 2:])
    wh = np.clip(rb - lt, 0.0, None)
    area = wh[..., 0] * wh[..., 1]
    return iou - (area - iou * area) / area


def reference_cost_matrices(pred_logits, pred_boxes, targets,
                            cost_class=1.0, cost_bbox=5.0, cost_giou=2.0):
    pred_logits = np.asarray(pred_logits, np.float32)
    pred_boxes = np.asarray(pred_boxes, np.float32)
    B = pred_logits.shape[0]
    m = pred_logits.max(-1, keepdims=True)
    e = np.exp(pred_logits - m)
    prob = e / e.sum(-1, keepdims=True)
    out = []
    for b in range(B):
        labels = np.asarray(targets[b]["labels"]).reshape(-1)
        if labels.size == 0:
            out.append(None)
            continue
        tboxes = np.asarray(targets[b]["boxes"], np.float32).reshape(-1, 4)
        x0, y0, x1, y1 = tboxes[:, 0], tboxes[:, 1], tboxes[:, 2], tboxes[:, 3]
        t_cxcywh = np.stack([(x0 + x1) / 2, (y0 + y1) / 2, x1 - x0, y1 - y0], -1)
        t_cxcywh = np.clip(t_cxcywh / 640.0, 0.0, 1.0)
        cc = -prob[b][:, labels]
        cb = np.abs(pred_boxes[b][:, None, :] - t_cxcywh[None, :, :]).sum(-1)
        cg = -_np_generalized_box_iou(_np_box_cxcywh_to_xyxy(pred_boxes[b]),
                                      _np_box_cxcywh_to_xyxy(t_cxcywh))
        out.append(cost_class * cc + cost_bbox * cb + cost_giou * cg)
    return out


# ----------------------------------------------------------------------------------
# Self-test
# ----------------------------------------------------------------------------------
def _make_inputs(B, N, num_classes, tgt_counts, key):
    k_logits, k_boxes, k_tgt = jax.random.split(key, 3)
    pred_logits = jax.random.normal(k_logits, (B, N, num_classes), jnp.float32)
    centers = jax.random.uniform(k_boxes, (B, N, 2), jnp.float32, 0.2, 0.8)
    sizes = jax.random.uniform(jax.random.fold_in(k_boxes, 1), (B, N, 2),
                               jnp.float32, 0.05, 0.3)
    pred_boxes = jnp.concatenate([centers, sizes], axis=-1)   # normalized cxcywh
    targets = []
    for b, Tb in enumerate(tgt_counts):
        kb = jax.random.fold_in(k_tgt, b)
        kl, kxy, kwh = jax.random.split(kb, 3)
        labels = jax.random.randint(kl, (Tb,), 0, max(num_classes - 1, 1))
        xy0 = jax.random.uniform(kxy, (Tb, 2), jnp.float32, 0.0, 500.0)
        wh = jax.random.uniform(kwh, (Tb, 2), jnp.float32, 20.0, 120.0)
        boxes = jnp.concatenate([xy0, jnp.minimum(xy0 + wh, 640.0)], axis=-1)
        targets.append({"labels": np.asarray(labels),
                        "boxes": np.asarray(boxes)})          # xyxy pixel coords
    return {"pred_logits": pred_logits, "pred_boxes": pred_boxes}, targets


def _run_case(B, N, num_classes, tgt_counts, key):
    outputs, targets = _make_inputs(B, N, num_classes, tgt_counts, key)
    indices, cost = hungarian_matcher(outputs, targets)
    ref_costs = reference_cost_matrices(outputs["pred_logits"],
                                        outputs["pred_boxes"], targets)
    for b in range(B):
        Tb = tgt_counts[b]
        if Tb == 0:
            assert indices[b][0].size == 0 and indices[b][1].size == 0
            continue
        assert np.all(np.isfinite(cost[b, :N, :Tb]))
        assert np.allclose(cost[b, :N, :Tb], ref_costs[b], atol=2e-4, rtol=2e-4)
        assert indices[b][0].shape == (min(N, Tb),)
        assert indices[b][1].shape == (min(N, Tb),)


if __name__ == "__main__":
    base_key = jax.random.PRNGKey(0)
    # DETR-like shapes; block_b=1 -> 2 parallel grid steps (one per batch element).
    _run_case(2, 100, 92, [3, 5], jax.random.fold_in(base_key, 0))
    # Larger batch exercises the batch-blocked path (block_b=4, 2 grid steps) and
    # the empty-target branch.
    _run_case(8, 64, 23, [0, 1, 2, 3, 4, 5, 6, 7], jax.random.fold_in(base_key, 1))
    print("KERNEL_OK")
</pallas_src>

<mosaic_0001>
module attributes {stable_mosaic.version = 11 : i64} {
  func.func @_matcher_cost_kernel(%arg0: i32, %arg1: memref<1x128x128xf32, #tpu.memory_space<vmem>>, %arg2: memref<1x128x4xf32, #tpu.memory_space<vmem>>, %arg3: memref<1x1x128xi32, #tpu.memory_space<vmem>>, %arg4: memref<1x16x128xf32, #tpu.memory_space<vmem>>, %arg5: memref<1x128x128xf32, #tpu.memory_space<vmem>>) attributes {dimension_semantics = [#tpu.dimension_semantics<parallel>], iteration_bounds = array<i64: 2>, scalar_prefetch = 0 : i64, scratch_operands = 0 : i64, tpu.core_type = #tpu.core_type<tc>, window_params = [{transform_indices = @transform_0, window_bounds = array<i64: 1, 128, 128>}, {transform_indices = @transform_1, window_bounds = array<i64: 1, 128, 4>}, {transform_indices = @transform_2, window_bounds = array<i64: 1, 1, 128>}, {transform_indices = @transform_3, window_bounds = array<i64: 1, 16, 128>}, {transform_indices = @transform_4, window_bounds = array<i64: 1, 128, 128>}]} {
    %c0 = arith.constant 0 : index
    %c0_0 = arith.constant 0 : index
    %c0_1 = arith.constant 0 : index
    %0 = vector.load %arg1[%c0, %c0_0, %c0_1] : memref<1x128x128xf32, #tpu.memory_space<vmem>>, vector<1x128x128xf32>
    %cst = arith.constant dense<0xFF800000> : vector<1x128xf32>
    %1 = vector.multi_reduction <maximumf>, %0, %cst [2] : vector<1x128x128xf32> to vector<1x128xf32>
    %2 = vector.shape_cast %1 : vector<1x128xf32> to vector<1x128x1xf32>
    %3 = vector.broadcast %2 : vector<1x128x1xf32> to vector<1x128x128xf32>
    %4 = arith.subf %0, %3 : vector<1x128x128xf32>
    %5 = math.exp %4 : vector<1x128x128xf32>
    %cst_2 = arith.constant dense<0.000000e+00> : vector<1x128xf32>
    %6 = vector.multi_reduction <add>, %5, %cst_2 [2] : vector<1x128x128xf32> to vector<1x128xf32>
    %7 = vector.shape_cast %6 : vector<1x128xf32> to vector<1x128x1xf32>
    %8 = tpu.reciprocal %7 : vector<1x128x1xf32> -> vector<1x128x1xf32>
    %c0_3 = arith.constant 0 : index
    %c0_4 = arith.constant 0 : index
    %c0_5 = arith.constant 0 : index
    %9 = vector.load %arg3[%c0_3, %c0_4, %c0_5] : memref<1x1x128xi32, #tpu.memory_space<vmem>>, vector<1x1x128xi32>
    %10 = tpu.iota {dimensions = array<i32: 1>} : vector<1x128x128xi32>
    %11 = vector.broadcast %9 : vector<1x1x128xi32> to vector<1x128x128xi32>
    %12 = arith.cmpi eq, %10, %11 : vector<1x128x128xi32>
    %13 = arith.extui %12 : vector<1x128x128xi1> to vector<1x128x128xi32>
    %14 = arith.sitofp %13 : vector<1x128x128xi32> to vector<1x128x128xf32>
    "tpu.trace_start"() <{level = 10 : i32, message = "bnc,bct->bnt"}> : () -> ()
    %cst_6 = arith.constant dense<0.000000e+00> : vector<1x128x128xf32>
    %15 = tpu.matmul %5, %14, %cst_6 {dimension_numbers = #tpu.dot_dimension_numbers<[2], [1], [1], [2], [0, 0, 0, 1, 1, 2], [0], [0]>, precision = #tpu.contract_precision<fp32>} : vector<1x128x128xf32>, vector<1x128x128xf32>, vector<1x128x128xf32> -> vector<1x128x128xf32>
    "tpu.trace_stop"() : () -> ()
    %cst_7 = arith.constant -1.000000e+00 : f32
    %16 = vector.broadcast %cst_7 : f32 to vector<1x128x128xf32>
    %17 = arith.mulf %16, %15 : vector<1x128x128xf32>
    %18 = vector.broadcast %8 : vector<1x128x1xf32> to vector<1x128x128xf32>
    %19 = arith.mulf %17, %18 : vector<1x128x128xf32>
    %c0_8 = arith.constant 0 : index
    %c0_9 = arith.constant 0 : index
    %c0_10 = arith.constant 0 : index
    %20 = vector.load %arg2[%c0_8, %c0_9, %c0_10] : memref<1x128x4xf32, #tpu.memory_space<vmem>>, vector<1x128x4xf32>
    %21 = vector.extract_strided_slice %20 {offsets = [0, 0, 0], sizes = [1, 128, 1], strides = [1, 1, 1]} : vector<1x128x4xf32> to vector<1x128x1xf32>
    %22 = vector.extract_strided_slice %20 {offsets = [0, 0, 1], sizes = [1, 128, 1], strides = [1, 1, 1]} : vector<1x128x4xf32> to vector<1x128x1xf32>
    %23 = vector.extract_strided_slice %20 {offsets = [0, 0, 2], sizes = [1, 128, 1], strides = [1, 1, 1]} : vector<1x128x4xf32> to vector<1x128x1xf32>
    %24 = vector.extract_strided_slice %20 {offsets = [0, 0, 3], sizes = [1, 128, 1], strides = [1, 1, 1]} : vector<1x128x4xf32> to vector<1x128x1xf32>
    %cst_11 = arith.constant 5.000000e-01 : f32
    %25 = vector.broadcast %cst_11 : f32 to vector<1x128x1xf32>
    %26 = arith.mulf %25, %23 : vector<1x128x1xf32>
    %27 = arith.subf %21, %26 : vector<1x128x1xf32>
    %cst_12 = arith.constant 5.000000e-01 : f32
    %28 = vector.broadcast %cst_12 : f32 to vector<1x128x1xf32>
    %29 = arith.mulf %28, %24 : vector<1x128x1xf32>
    %30 = arith.subf %22, %29 : vector<1x128x1xf32>
    %cst_13 = arith.constant 5.000000e-01 : f32
    %31 = vector.broadcast %cst_13 : f32 to vector<1x128x1xf32>
    %32 = arith.mulf %31, %23 : vector<1x128x1xf32>
    %33 = arith.addf %21, %32 : vector<1x128x1xf32>
    %cst_14 = arith.constant 5.000000e-01 : f32
    %34 = vector.broadcast %cst_14 : f32 to vector<1x128x1xf32>
    %35 = arith.mulf %34, %24 : vector<1x128x1xf32>
    %36 = arith.addf %22, %35 : vector<1x128x1xf32>
    %c0_15 = arith.constant 0 : index
    %c0_16 = arith.constant 0 : index
    %c0_17 = arith.constant 0 : index
    %37 = vector.load %arg4[%c0_15, %c0_16, %c0_17] : memref<1x16x128xf32, #tpu.memory_space<vmem>>, vector<1x16x128xf32>
    %38 = vector.extract_strided_slice %37 {offsets = [0, 0, 0], sizes = [1, 1, 128], strides = [1, 1, 1]} : vector<1x16x128xf32> to vector<1x1x128xf32>
    %39 = vector.extract_strided_slice %37 {offsets = [0, 1, 0], sizes = [1, 1, 128], strides = [1, 1, 1]} : vector<1x16x128xf32> to vector<1x1x128xf32>
    %40 = vector.extract_strided_slice %37 {offsets = [0, 2, 0], sizes = [1, 1, 128], strides = [1, 1, 1]} : vector<1x16x128xf32> to vector<1x1x128xf32>
    %41 = vector.extract_strided_slice %37 {offsets = [0, 3, 0], sizes = [1, 1, 128], strides = [1, 1, 1]} : vector<1x16x128xf32> to vector<1x1x128xf32>
    %42 = vector.extract_strided_slice %37 {offsets = [0, 4, 0], sizes = [1, 1, 128], strides = [1, 1, 1]} : vector<1x16x128xf32> to vector<1x1x128xf32>
    %43 = vector.extract_strided_slice %37 {offsets = [0, 5, 0], sizes = [1, 1, 128], strides = [1, 1, 1]} : vector<1x16x128xf32> to vector<1x1x128xf32>
    %44 = vector.extract_strided_slice %37 {offsets = [0, 6, 0], sizes = [1, 1, 128], strides = [1, 1, 1]} : vector<1x16x128xf32> to vector<1x1x128xf32>
    %45 = vector.extract_strided_slice %37 {offsets = [0, 7, 0], sizes = [1, 1, 128], strides = [1, 1, 1]} : vector<1x16x128xf32> to vector<1x1x128xf32>
    %46 = vector.extract_strided_slice %37 {offsets = [0, 8, 0], sizes = [1, 1, 128], strides = [1, 1, 1]} : vector<1x16x128xf32> to vector<1x1x128xf32>
    %47 = vector.broadcast %21 : vector<1x128x1xf32> to vector<1x128x128xf32>
    %48 = vector.broadcast %38 : vector<1x1x128xf32> to vector<1x128x128xf32>
    %49 = arith.subf %47, %48 : vector<1x128x128xf32>
    %50 = math.absf %49 : vector<1x128x128xf32>
    %51 = vector.broadcast %22 : vector<1x128x1xf32> to vector<1x128x128xf32>
    %52 = vector.broadcast %39 : vector<1x1x128xf32> to vector<1x128x128xf32>
    %53 = arith.subf %51, %52 : vector<1x128x128xf32>
    %54 = math.absf %53 : vector<1x128x128xf32>
    %55 = arith.addf %50, %54 : vector<1x128x128xf32>
    %56 = vector.broadcast %23 : vector<1x128x1xf32> to vector<1x128x128xf32>
    %57 = vector.broadcast %40 : vector<1x1x128xf32> to vector<1x128x128xf32>
    %58 = arith.subf %56, %57 : vector<1x128x128xf32>
    %59 = math.absf %58 : vector<1x128x128xf32>
    %60 = arith.addf %55, %59 : vector<1x128x128xf32>
    %61 = vector.broadcast %24 : vector<1x128x1xf32> to vector<1x128x128xf32>
    %62 = vector.broadcast %41 : vector<1x1x128xf32> to vector<1x128x128xf32>
    %63 = arith.subf %61, %62 : vector<1x128x128xf32>
    %64 = math.absf %63 : vector<1x128x128xf32>
    %65 = arith.addf %60, %64 : vector<1x128x128xf32>
    %cst_18 = arith.constant 5.000000e+00 : f32
    %66 = vector.broadcast %cst_18 : f32 to vector<1x128x128xf32>
    %67 = arith.mulf %66, %65 : vector<1x128x128xf32>
    %68 = arith.addf %19, %67 : vector<1x128x128xf32>
    %69 = arith.subf %33, %27 : vector<1x128x1xf32>
    %70 = arith.subf %36, %30 : vector<1x128x1xf32>
    %71 = arith.mulf %69, %70 : vector<1x128x1xf32>
    %72 = vector.broadcast %27 : vector<1x128x1xf32> to vector<1x128x128xf32>
    %73 = vector.broadcast %42 : vector<1x1x128xf32> to vector<1x128x128xf32>
    %74 = arith.maximumf %72, %73 : vector<1x128x128xf32>
    %75 = vector.broadcast %30 : vector<1x128x1xf32> to vector<1x128x128xf32>
    %76 = vector.broadcast %43 : vector<1x1x128xf32> to vector<1x128x128xf32>
    %77 = arith.maximumf %75, %76 : vector<1x128x128xf32>
    %78 = vector.broadcast %33 : vector<1x128x1xf32> to vector<1x128x128xf32>
    %79 = vector.broadcast %44 : vector<1x1x128xf32> to vector<1x128x128xf32>
    %80 = arith.minimumf %78, %79 : vector<1x128x128xf32>
    %81 = vector.broadcast %36 : vector<1x128x1xf32> to vector<1x128x128xf32>
    %82 = vector.broadcast %45 : vector<1x1x128xf32> to vector<1x128x128xf32>
    %83 = arith.minimumf %81, %82 : vector<1x128x128xf32>
    %84 = arith.subf %80, %74 : vector<1x128x128xf32>
    %cst_19 = arith.constant 0.000000e+00 : f32
    %85 = vector.broadcast %cst_19 : f32 to vector<1x128x128xf32>
    %86 = arith.maximumf %84, %85 : vector<1x128x128xf32>
    %87 = arith.subf %83, %77 : vector<1x128x128xf32>
    %cst_20 = arith.constant 0.000000e+00 : f32
    %88 = vector.broadcast %cst_20 : f32 to vector<1x128x128xf32>
    %89 = arith.maximumf %87, %88 : vector<1x128x128xf32>
    %90 = arith.mulf %86, %89 : vector<1x128x128xf32>
    %91 = vector.broadcast %71 : vector<1x128x1xf32> to vector<1x128x128xf32>
    %92 = vector.broadcast %46 : vector<1x1x128xf32> to vector<1x128x128xf32>
    %93 = arith.addf %91, %92 : vector<1x128x128xf32>
    %94 = arith.subf %93, %90 : vector<1x128x128xf32>
    %95 = tpu.reciprocal %94 : vector<1x128x128xf32> -> vector<1x128x128xf32>
    %96 = arith.mulf %90, %95 : vector<1x128x128xf32>
    %cst_21 = arith.constant 2.000000e+00 : f32
    %97 = vector.broadcast %cst_21 : f32 to vector<1x128x128xf32>
    %98 = arith.mulf %97, %96 : vector<1x128x128xf32>
    %cst_22 = arith.constant 1.000000e+00 : f32
    %99 = vector.broadcast %cst_22 : f32 to vector<1x128x128xf32>
    %100 = arith.subf %99, %98 : vector<1x128x128xf32>
    %cst_23 = arith.constant 2.000000e+00 : f32
    %101 = vector.broadcast %cst_23 : f32 to vector<1x128x128xf32>
    %102 = arith.mulf %101, %100 : vector<1x128x128xf32>
    %103 = arith.addf %68, %102 : vector<1x128x128xf32>
    %c0_24 = arith.constant 0 : index
    %c0_25 = arith.constant 0 : index
    %c0_26 = arith.constant 0 : index
    %104 = vector.load %arg5[%c0_24, %c0_25, %c0_26] : memref<1x128x128xf32, #tpu.memory_space<vmem>>, vector<1x128x128xf32>
    tpu.vector_store %arg5[%c0_24, %c0_25, %c0_26], %103 {strides = array<i32>} : memref<1x128x128xf32, #tpu.memory_space<vmem>>, vector<1x128x128xf32>,
    return
  }
  func.func @transform_0(%arg0: i32) -> (i32, i32, i32) {
    %c0_i32 = arith.constant 0 : i32
    %c0_i32_0 = arith.constant 0 : i32
    %c0_i32_1 = arith.constant 0 : i32
    return %arg0, %c0_i32, %c0_i32_0 : i32, i32, i32
  }
  func.func @transform_1(%arg0: i32) -> (i32, i32, i32) {
    %c0_i32 = arith.constant 0 : i32
    %c0_i32_0 = arith.constant 0 : i32
    %c0_i32_1 = arith.constant 0 : i32
    return %arg0, %c0_i32, %c0_i32_0 : i32, i32, i32
  }
  func.func @transform_2(%arg0: i32) -> (i32, i32, i32) {
    %c0_i32 = arith.constant 0 : i32
    %c0_i32_0 = arith.constant 0 : i32
    %c0_i32_1 = arith.constant 0 : i32
    return %arg0, %c0_i32, %c0_i32_0 : i32, i32, i32
  }
  func.func @transform_3(%arg0: i32) -> (i32, i32, i32) {
    %c0_i32 = arith.constant 0 : i32
    %c0_i32_0 = arith.constant 0 : i32
    %c0_i32_1 = arith.constant 0 : i32
    return %arg0, %c0_i32, %c0_i32_0 : i32, i32, i32
  }
  func.func @transform_4(%arg0: i32) -> (i32, i32, i32) {
    %c0_i32 = arith.constant 0 : i32
    %c0_i32_0 = arith.constant 0 : i32
    %c0_i32_1 = arith.constant 0 : i32
    return %arg0, %c0_i32, %c0_i32_0 : i32, i32, i32
  }
}

</mosaic_0001>

<llo_original>
// kernel: tpu_custom_call.1
$region0: #{tpu_custom_call.1}
  #allocation0 [shape = 'u32[]', space=smem, size = 0x4, offset = 0x4, fixed_abs, tag = 'smem constant byte address 0x4 - core index']
  #allocation1 [shape = 'u32[144,128]{1,0:T(1,128)}', space=vmem, size = 0x12000, scoped, tag = 'internal scratch']
  %s0 = inlined_call_operand.vmem [shape: f32[2,128,128], index: 0, kind: input, shape index: {}]
  %s1 = inlined_call_operand.vmem [shape: f32[2,128,4], index: 1, kind: input, shape index: {}]
  %s2 = inlined_call_operand.vmem [shape: s32[2,1,128], index: 2, kind: input, shape index: {}]
  %s3 = inlined_call_operand.hbm [shape: f32[2,16,128], index: 3, kind: input, shape index: {}]
  %s4 = inlined_call_operand.hbm [shape: f32[2,128,128], index: 4, kind: output, shape index: {}]
  %s5 = sld [smem:[#allocation0]]
  $region53: #{tpu_custom_call.1} parent=0
    _
  %s7 = ssub.s32 1, %s5
  %s8 = scalar_select 0, %s7, %s5
  $region1: #{tpu_custom_call.1} parent=0
    #allocation2 [shape = 'u8[16384]{0}', space=vmem, size = 0x4000, scoped, tag = 'input window, operand 3']
    #allocation3 [shape = 's32[2]{0}', space=sflag, size = 0x8, scoped, tag = 'scoped memory for tpu_custom_call.1']
    #allocation4 [shape = 's32[2]{0}', space=sflag, size = 0x8, scoped, tag = 'scoped memory for tpu_custom_call.1']
    #allocation5 [shape = 'u8[131072]{0}', space=vmem, size = 0x20000, scoped, tag = 'output window, operand 0']
    %9 = vsyncpa [#allocation3], 0
    %s10 = scalar_lea.sflag [#allocation3], 1
    %11 = vsyncpa %s10, 0
    %12 = vsyncpa [#allocation4], 0
    %s13 = scalar_lea.sflag [#allocation4], 1
    %14 = vsyncpa %s13, 0
    loop: start=0, step=1, limit=4
    $region2: #{tpu_custom_call.1} parent=1 // loop_pre_header
      _
    $region3: #{tpu_custom_call.1} parent=1 // loop_header
      %s16 = sphi 0, %s20
      %p17 = scmp.ge.s32.totalorder %s16, 4
      %s26 = sphi 0, %s28
      %s29 = sphi 0, %s26
      %s30 = sphi 0, %s29
      %s46 = sphi 0, %s30
      %s52 = sphi 0, %s54
      %s55 = sphi 0, %s52
      %s56 = sphi 0, %s55
      %s72 = sphi 0, %s56
      %s78 = sphi 0, %s80
      %s81 = sphi 0, %s78
      %s82 = sphi 0, %s81
      %s98 = sphi 0, %s82
      %s104 = sphi 0, %s106
      %s107 = sphi 0, %s104
      %s108 = sphi 0, %s107
      %s124 = sphi 0, %s108
      %s130 = sphi 0, %s132
      %s133 = sphi 0, %s130
      %s134 = sphi 0, %s133
      %s150 = sphi 0, %s134
    $region4: #{tpu_custom_call.1} parent=1 // loop_header_branch
      %19 = sbr.rel (%p17) target = $region8
    $region5: #{tpu_custom_call.1} parent=1 // loop_body
      %s21 = ssub.s32 %s16, 1
      %s22 = ssub.s32 %s16, 2
      %s23 = sadd.s32 %s16, 1
      %s24 = ssub.s32 %s16, %s23
      %p25 = scmp.eq.s32.totalorder %s24, 0
      %s27 = sadd.s32 %s26, 1
      %s28 = scalar_select %p25, %s26, %s27
      %p31 = pneg %p25
      %p32 = scmp.eq.s32.totalorder %s16, 1
      %p33 = por %p31, %p32
      %p34 = scmp.ne.s32.totalorder %s26, %s29
      %p35 = scmp.eq.s32.totalorder %s16, 0
      %p36 = por %p34, %p35
      %p37 = scmp.ne.s32.totalorder %s26, %s29
      %p38 = scmp.eq.s32.totalorder %s21, 1
      %p39 = por %p37, %p38
      %p40 = scmp.ne.s32.totalorder %s29, %s30
      %p41 = scmp.eq.s32.totalorder %s21, 0
      %p42 = por %p40, %p41
      %p43 = scmp.ne.s32.totalorder %s29, %s30
      %p44 = scmp.eq.s32.totalorder %s22, 1
      %p45 = por %p43, %p44
      %p47 = scmp.ne.s32.totalorder %s30, %s46
      %p48 = scmp.eq.s32.totalorder %s22, 0
      %p49 = por %p47, %p48
      %s50 = ssub.s32 %s16, %s23
      %p51 = scmp.eq.s32.totalorder %s50, 0
      %s53 = sadd.s32 %s52, 1
      %s54 = scalar_select %p51, %s52, %s53
      %p57 = pneg %p51
      %p58 = scmp.eq.s32.totalorder %s16, 1
      %p59 = por %p57, %p58
      %p60 = scmp.ne.s32.totalorder %s52, %s55
      %p61 = scmp.eq.s32.totalorder %s16, 0
      %p62 = por %p60, %p61
      %p63 = scmp.ne.s32.totalorder %s52, %s55
      %p64 = scmp.eq.s32.totalorder %s21, 1
      %p65 = por %p63, %p64
      %p66 = scmp.ne.s32.totalorder %s55, %s56
      %p67 = scmp.eq.s32.totalorder %s21, 0
      %p68 = por %p66, %p67
      %p69 = scmp.ne.s32.totalorder %s55, %s56
      %p70 = scmp.eq.s32.totalorder %s22, 1
      %p71 = por %p69, %p70
      %p73 = scmp.ne.s32.totalorder %s56, %s72
      %p74 = scmp.eq.s32.totalorder %s22, 0
      %p75 = por %p73, %p74
      %s76 = ssub.s32 %s16, %s23
      %p77 = scmp.eq.s32.totalorder %s76, 0
      %s79 = sadd.s32 %s78, 1
      %s80 = scalar_select %p77, %s78, %s79
      %p83 = pneg %p77
      %p84 = scmp.eq.s32.totalorder %s16, 1
      %p85 = por %p83, %p84
      %p86 = scmp.ne.s32.totalorder %s78, %s81
      %p87 = scmp.eq.s32.totalorder %s16, 0
      %p88 = por %p86, %p87
      %p89 = scmp.ne.s32.totalorder %s78, %s81
      %p90 = scmp.eq.s32.totalorder %s21, 1
      %p91 = por %p89, %p90
      %p92 = scmp.ne.s32.totalorder %s81, %s82
      %p93 = scmp.eq.s32.totalorder %s21, 0
      %p94 = por %p92, %p93
      %p95 = scmp.ne.s32.totalorder %s81, %s82
      %p96 = scmp.eq.s32.totalorder %s22, 1
      %p97 = por %p95, %p96
      %p99 = scmp.ne.s32.totalorder %s82, %s98
      %p100 = scmp.eq.s32.totalorder %s22, 0
      %p101 = por %p99, %p100
      %s102 = ssub.s32 %s16, %s23
      %p103 = scmp.eq.s32.totalorder %s102, 0
      %s105 = sadd.s32 %s104, 1
      %s106 = scalar_select %p103, %s104, %s105
      %p109 = pneg %p103
      %p110 = scmp.eq.s32.totalorder %s16, 1
      %p111 = por %p109, %p110
      %p112 = scmp.ne.s32.totalorder %s104, %s107
      %p113 = scmp.eq.s32.totalorder %s16, 0
      %p114 = por %p112, %p113
      %p115 = scmp.ne.s32.totalorder %s104, %s107
      %p116 = scmp.eq.s32.totalorder %s21, 1
      %p117 = por %p115, %p116
      %p118 = scmp.ne.s32.totalorder %s107, %s108
      %p119 = scmp.eq.s32.totalorder %s21, 0
      %p120 = por %p118, %p119
      %p121 = scmp.ne.s32.totalorder %s107, %s108
      %p122 = scmp.eq.s32.totalorder %s22, 1
      %p123 = por %p121, %p122
      %p125 = scmp.ne.s32.totalorder %s108, %s124
      %p126 = scmp.eq.s32.totalorder %s22, 0
      %p127 = por %p125, %p126
      %s128 = ssub.s32 %s16, %s23
      %p129 = scmp.eq.s32.totalorder %s128, 0
      %s131 = sadd.s32 %s130, 1
      %s132 = scalar_select %p129, %s130, %s131
      %p135 = pneg %p129
      %p136 = scmp.eq.s32.totalorder %s16, 1
      %p137 = por %p135, %p136
      %p138 = scmp.ne.s32.totalorder %s130, %s133
      %p139 = scmp.eq.s32.totalorder %s16, 0
      %p140 = por %p138, %p139
      %p141 = scmp.ne.s32.totalorder %s130, %s133
      %p142 = scmp.eq.s32.totalorder %s21, 1
      %p143 = por %p141, %p142
      %p144 = scmp.ne.s32.totalorder %s133, %s134
      %p145 = scmp.eq.s32.totalorder %s21, 0
      %p146 = por %p144, %p145
      %p147 = scmp.ne.s32.totalorder %s133, %s134
      %p148 = scmp.eq.s32.totalorder %s22, 1
      %p149 = por %p147, %p148
      %p151 = scmp.ne.s32.totalorder %s134, %s150
      %p152 = scmp.eq.s32.totalorder %s22, 0
      %p153 = por %p151, %p152
      %p154 = scmp.le.s32.totalorder 1, %s16
      %p155 = scmp.lt.s32.totalorder %s16, 3
      %p156 = pnand %p154, %p155
      %p157 = pneg %p156
      // Predicated region
      $region9: #{tpu_custom_call.1} parent=5 // pred_check
        _
      $region10: #{tpu_custom_call.1} parent=5 // pred_check_branch
        %159 = sbr.rel (%p156) target = $region12
      $region11: #{tpu_custom_call.1} parent=5 // pred_region
        %s160 = ssub.s32 %s16, 1
      $region12: #{tpu_custom_call.1} parent=5 // pred_fallthru
        _
      %p161 = scmp.lt.s32.totalorder %s16, 2
      // Predicated region
      $region13: #{tpu_custom_call.1} parent=5 // pred_check
        %p162 = pneg %p161
      $region14: #{tpu_custom_call.1} parent=5 // pred_check_branch
        %164 = sbr.rel (%p162) target = $region16
      $region15: #{tpu_custom_call.1} parent=5 // pred_region
        // Predicated region
        $region17: #{tpu_custom_call.1} parent=15 // pred_check
          %p165 = pneg %p36
        $region18: #{tpu_custom_call.1} parent=15 // pred_check_branch
          %167 = sbr.rel (%p165) target = $region20
        $region19: #{tpu_custom_call.1} parent=15 // pred_region
          %p168 = scmp.lt.s32.totalorder %s16, 1
          %s169 = scalar_select %p168, %s16, 1
          %s170 = smul.addr %s169, 16
          %s171 = smul.addr %s170, 8
          %s172 = scalar_lea.vmem %s0, %s171
        $region20: #{tpu_custom_call.1} parent=15 // pred_fallthru
          _
        // Predicated region
        $region21: #{tpu_custom_call.1} parent=15 // pred_check
          %p173 = pneg %p62
        $region22: #{tpu_custom_call.1} parent=15 // pred_check_branch
          %175 = sbr.rel (%p173) target = $region24
        $region23: #{tpu_custom_call.1} parent=15 // pred_region
          %p176 = scmp.lt.s32.totalorder %s16, 1
          %s177 = scalar_select %p176, %s16, 1
          %s178 = smul.addr %s177, 16
          %s179 = smul.addr %s178, 8
          %s180 = scalar_lea.vmem %s1, %s179
        $region24: #{tpu_custom_call.1} parent=15 // pred_fallthru
          _
        // Predicated region
        $region25: #{tpu_custom_call.1} parent=15 // pred_check
          %p181 = pneg %p88
        $region26: #{tpu_custom_call.1} parent=15 // pred_check_branch
          %183 = sbr.rel (%p181) target = $region28
        $region27: #{tpu_custom_call.1} parent=15 // pred_region
          %p184 = scmp.lt.s32.totalorder %s16, 1
          %s185 = scalar_select %p184, %s16, 1
          %s186 = scalar_lea.vmem %s2, %s185
        $region28: #{tpu_custom_call.1} parent=15 // pred_fallthru
          _
        // Predicated region
        $region29: #{tpu_custom_call.1} parent=15 // pred_check
          %p187 = pneg %p114
        $region30: #{tpu_custom_call.1} parent=15 // pred_check_branch
          %189 = sbr.rel (%p187) target = $region32
        $region31: #{tpu_custom_call.1} parent=15 // pred_region
          %s190 = sand.u32 %s104, 1
          %s191 = scalar_lea.sflag [#allocation3], %s190
          %s192 = sand.u32 %s104, 1
          %s193 = smul.addr %s192, 16
          %s194 = scalar_lea.vmem [#allocation2], %s193
          %s196 = ssub.s32 256, 256
          %197 = vsyncadd %s191, %s196
          %s198 = smul.addr %s16, 2
          %s199 = smul.addr %s198, 128
          %s200 = scalar_lea.hbm %s3, %s199
          %s201 = sshll.u32 %s194, 4
          %s202 = int_to_ptr.vmem [resolvable:$true] %s201
          %207 = dma.hbm_to_vmem [thread:$0]  %s200, 256, %s202, %s191, 128, 128, 8
        $region32: #{tpu_custom_call.1} parent=15 // pred_fallthru
          _
      $region16: #{tpu_custom_call.1} parent=5 // pred_fallthru
        _
      %p208 = scmp.le.s32.totalorder 1, %s16
      %p209 = scmp.lt.s32.totalorder %s16, 3
      %p210 = pnand %p208, %p209
      %p211 = pneg %p210
      // Predicated region
      $region33: #{tpu_custom_call.1} parent=5 // pred_check
        _
      $region34: #{tpu_custom_call.1} parent=5 // pred_check_branch
        %213 = sbr.rel (%p210) target = $region36
      $region35: #{tpu_custom_call.1} parent=5 // pred_region
        %s214 = ssub.s32 %s16, 1
        %s215 = sand.u32 %s107, 1
        %s216 = scalar_lea.sflag [#allocation3], %s215
        %s217 = sand.u32 %s107, 1
        %s218 = smul.addr %s217, 16
        %s219 = scalar_lea.vmem [#allocation2], %s218
        // Predicated region
        $region37: #{tpu_custom_call.1} parent=35 // pred_check
          %p220 = pneg %p120
        $region38: #{tpu_custom_call.1} parent=35 // pred_check_branch
          %222 = sbr.rel (%p220) target = $region40
        $region39: #{tpu_custom_call.1} parent=35 // pred_region
          %223 = dma.done %s216, 256
        $region40: #{tpu_custom_call.1} parent=35 // pred_fallthru
          _
        %p224 = scmp.lt.s32.totalorder %s21, 1
        %s225 = scalar_select %p224, %s21, 1
        %s226 = smul.addr %s225, 16
        %s227 = smul.addr %s226, 8
        %s228 = scalar_lea.vmem %s0, %s227
        %p229 = pneg %p42
        %p230 = pneg %p39
        %p231 = scmp.lt.s32.totalorder %s21, 1
        %s232 = scalar_select %p231, %s21, 1
        %s233 = smul.addr %s232, 16
        %s234 = smul.addr %s233, 8
        %s235 = scalar_lea.vmem %s1, %s234
        %p236 = pneg %p68
        %p237 = pneg %p65
        %p238 = scmp.lt.s32.totalorder %s21, 1
        %s239 = scalar_select %p238, %s21, 1
        %s240 = scalar_lea.vmem %s2, %s239
        %p241 = pneg %p94
        %p242 = pneg %p91
        %s243 = sand.u32 %s107, 1
        %s244 = scalar_lea.sflag [#allocation3], %s243
        %s245 = sand.u32 %s107, 1
        %s246 = smul.addr %s245, 16
        %s247 = scalar_lea.vmem [#allocation2], %s246
        %p248 = pneg %p120
        %p249 = pneg %p117
        %p250 = pneg %p146
        %p251 = pneg %p143
        %s252 = sand.u32 %s133, 1
        %s253 = scalar_lea.sflag [#allocation4], %s252
        %s254 = sand.u32 %s133, 1
        %s255 = smul.addr %s254, 128
        %s256 = scalar_lea.vmem [#allocation5], %s255
        %p257 = scmp.lt.s32.totalorder %s21, 1
        %s258 = scalar_select %p257, %s21, 1
        %s259 = smul.addr %s258, 16
        %s260 = smul.addr %s259, 8
        %s261 = scalar_lea.vmem %s0, %s260
        %p262 = scmp.lt.s32.totalorder %s21, 1
        %s263 = scalar_select %p262, %s21, 1
        %s264 = smul.addr %s263, 16
        %s265 = smul.addr %s264, 8
        %s266 = scalar_lea.vmem %s1, %s265
        %p267 = scmp.lt.s32.totalorder %s21, 1
        %s268 = scalar_select %p267, %s21, 1
        %s269 = scalar_lea.vmem %s2, %s268
        %v270 = vld [vmem:[%s261] sm:$0xff]
        %v271 = vld [vmem:[%s261 + $0x8] sm:$0xff]
        %v272 = vld [vmem:[%s261 + $0x10] sm:$0xff]
        %v273 = vld [vmem:[%s261 + $0x18] sm:$0xff]
        %v274 = vld [vmem:[%s261 + $0x20] sm:$0xff]
        %v275 = vld [vmem:[%s261 + $0x28] sm:$0xff]
        %v276 = vld [vmem:[%s261 + $0x30] sm:$0xff]
        %v277 = vld [vmem:[%s261 + $0x38] sm:$0xff]
        %v278 = vld [vmem:[%s261 + $0x40] sm:$0xff]
        %v279 = vld [vmem:[%s261 + $0x48] sm:$0xff]
        %v280 = vld [vmem:[%s261 + $0x50] sm:$0xff]
        %v281 = vld [vmem:[%s261 + $0x58] sm:$0xff]
        %v282 = vld [vmem:[%s261 + $0x60] sm:$0xff]
        %v283 = vld [vmem:[%s261 + $0x68] sm:$0xff]
        %v284 = vld [vmem:[%s261 + $0x70] sm:$0xff]
        %v285 = vld [vmem:[%s261 + $0x78] sm:$0xff]
        %286 = vmax.xlane.f32.xlu0 %v270
        %v287 = vpop.xlane.xlu0 %286
        %288 = vmax.xlane.f32.xlu0 %v271
        %v289 = vpop.xlane.xlu0 %288
        %290 = vmax.xlane.f32.xlu0 %v272
        %v291 = vpop.xlane.xlu0 %290
        %292 = vmax.xlane.f32.xlu0 %v273
        %v293 = vpop.xlane.xlu0 %292
        %294 = vmax.xlane.f32.xlu0 %v274
        %v295 = vpop.xlane.xlu0 %294
        %296 = vmax.xlane.f32.xlu0 %v275
        %v297 = vpop.xlane.xlu0 %296
        %298 = vmax.xlane.f32.xlu0 %v276
        %v299 = vpop.xlane.xlu0 %298
        %300 = vmax.xlane.f32.xlu0 %v277
        %v301 = vpop.xlane.xlu0 %300
        %302 = vmax.xlane.f32.xlu0 %v278
        %v303 = vpop.xlane.xlu0 %302
        %304 = vmax.xlane.f32.xlu0 %v279
        %v305 = vpop.xlane.xlu0 %304
        %306 = vmax.xlane.f32.xlu0 %v280
        %v307 = vpop.xlane.xlu0 %306
        %308 = vmax.xlane.f32.xlu0 %v281
        %v309 = vpop.xlane.xlu0 %308
        %310 = vmax.xlane.f32.xlu0 %v282
        %v311 = vpop.xlane.xlu0 %310
        %312 = vmax.xlane.f32.xlu0 %v283
        %v313 = vpop.xlane.xlu0 %312
        %314 = vmax.xlane.f32.xlu0 %v284
        %v315 = vpop.xlane.xlu0 %314
        %316 = vmax.xlane.f32.xlu0 %v285
        %v317 = vpop.xlane.xlu0 %316
        %v318 = vsub.f32 %v270, %v287
        %v319 = vsub.f32 %v271, %v289
        %v320 = vsub.f32 %v272, %v291
        %v321 = vsub.f32 %v273, %v293
        %v322 = vsub.f32 %v274, %v295
        %v323 = vsub.f32 %v275, %v297
        %v324 = vsub.f32 %v276, %v299
        %v325 = vsub.f32 %v277, %v301
        %v326 = vsub.f32 %v278, %v303
        %v327 = vsub.f32 %v279, %v305
        %v328 = vsub.f32 %v280, %v307
        %v329 = vsub.f32 %v281, %v309
        %v330 = vsub.f32 %v282, %v311
        %v331 = vsub.f32 %v283, %v313
        %v332 = vsub.f32 %v284, %v315
        %v333 = vsub.f32 %v285, %v317
        %v334 = vmul.f32 %v318, 1.442695
        %v335 = vpow.pop %v334
        %v336 = vmul.f32 %v319, 1.442695
        %v337 = vpow.pop %v336
        %v338 = vmul.f32 %v320, 1.442695
        %v339 = vpow.pop %v338
        %v340 = vmul.f32 %v321, 1.442695
        %v341 = vpow.pop %v340
        %v342 = vmul.f32 %v322, 1.442695
        %v343 = vpow.pop %v342
        %v344 = vmul.f32 %v323, 1.442695
        %v345 = vpow.pop %v344
        %v346 = vmul.f32 %v324, 1.442695
        %v347 = vpow.pop %v346
        %v348 = vmul.f32 %v325, 1.442695
        %v349 = vpow.pop %v348
        %v350 = vmul.f32 %v326, 1.442695
        %v351 = vpow.pop %v350
        %v352 = vmul.f32 %v327, 1.442695
        %v353 = vpow.pop %v352
        %v354 = vmul.f32 %v328, 1.442695
        %v355 = vpow.pop %v354
        %v356 = vmul.f32 %v329, 1.442695
        %v357 = vpow.pop %v356
        %v358 = vmul.f32 %v330, 1.442695
        %v359 = vpow.pop %v358
        %v360 = vmul.f32 %v331, 1.442695
        %v361 = vpow.pop %v360
        %v362 = vmul.f32 %v332, 1.442695
        %v363 = vpow.pop %v362
        %v364 = vmul.f32 %v333, 1.442695
        %v365 = vpow.pop %v364
        %366 = vadd.xlane.f32.xlu0 %v335
        %v367 = vpop.xlane.xlu0 %366
        %368 = vadd.xlane.f32.xlu0 %v337
        %v369 = vpop.xlane.xlu0 %368
        %370 = vadd.xlane.f32.xlu0 %v339
        %v371 = vpop.xlane.xlu0 %370
        %372 = vadd.xlane.f32.xlu0 %v341
        %v373 = vpop.xlane.xlu0 %372
        %374 = vadd.xlane.f32.xlu0 %v343
        %v375 = vpop.xlane.xlu0 %374
        %376 = vadd.xlane.f32.xlu0 %v345
        %v377 = vpop.xlane.xlu0 %376
        %378 = vadd.xlane.f32.xlu0 %v347
        %v379 = vpop.xlane.xlu0 %378
        %380 = vadd.xlane.f32.xlu0 %v349
        %v381 = vpop.xlane.xlu0 %380
        %382 = vadd.xlane.f32.xlu0 %v351
        %v383 = vpop.xlane.xlu0 %382
        %384 = vadd.xlane.f32.xlu0 %v353
        %v385 = vpop.xlane.xlu0 %384
        %386 = vadd.xlane.f32.xlu0 %v355
        %v387 = vpop.xlane.xlu0 %386
        %388 = vadd.xlane.f32.xlu0 %v357
        %v389 = vpop.xlane.xlu0 %388
        %390 = vadd.xlane.f32.xlu0 %v359
        %v391 = vpop.xlane.xlu0 %390
        %392 = vadd.xlane.f32.xlu0 %v361
        %v393 = vpop.xlane.xlu0 %392
        %394 = vadd.xlane.f32.xlu0 %v363
        %v395 = vpop.xlane.xlu0 %394
        %396 = vadd.xlane.f32.xlu0 %v365
        %v397 = vpop.xlane.xlu0 %396
        %v398 = vrcp.pop %v367
        %v399 = vrcp.pop %v369
        %v400 = vrcp.pop %v371
        %v401 = vrcp.pop %v373
        %v402 = vrcp.pop %v375
        %v403 = vrcp.pop %v377
        %v404 = vrcp.pop %v379
        %v405 = vrcp.pop %v381
        %v406 = vrcp.pop %v383
        %v407 = vrcp.pop %v385
        %v408 = vrcp.pop %v387
        %v409 = vrcp.pop %v389
        %v410 = vrcp.pop %v391
        %v411 = vrcp.pop %v393
        %v412 = vrcp.pop %v395
        %v413 = vrcp.pop %v397
        %v414 = vld [vmem:[%s269] sm:$0x1]
        %v415 = vlaneseq
        %v416 = vshrl.u32 %v415, 7
        %v417 = vadd.s32 %v416, 8
        %v418 = vadd.s32 %v416, 16
        %v419 = vadd.s32 %v416, 24
        %v420 = vadd.s32 %v416, 32
        %v421 = vadd.s32 %v416, 40
        %v422 = vadd.s32 %v416, 48
        %v423 = vadd.s32 %v416, 56
        %v424 = vadd.s32 %v416, 64
        %v425 = vadd.s32 %v416, 72
        %v426 = vadd.s32 %v416, 80
        %v427 = vadd.s32 %v416, 88
        %v428 = vadd.s32 %v416, 96
        %v429 = vadd.s32 %v416, 104
        %v430 = vadd.s32 %v416, 112
        %v431 = vadd.s32 %v416, 120
        %v432 = vlaneseq
        %v433 = vshrl.u32 %v432, 7
        %v434 = vsub.s32 0, %v433
        %v435 = vrot.slane %v414, %v434
        %vm436 = vcmp.eq.s32.totalorder %v416, %v435
        %vm437 = vcmp.eq.s32.totalorder %v417, %v435
        %vm438 = vcmp.eq.s32.totalorder %v418, %v435
        %vm439 = vcmp.eq.s32.totalorder %v419, %v435
        %vm440 = vcmp.eq.s32.totalorder %v420, %v435
        %vm441 = vcmp.eq.s32.totalorder %v421, %v435
        %vm442 = vcmp.eq.s32.totalorder %v422, %v435
        %vm443 = vcmp.eq.s32.totalorder %v423, %v435
        %vm444 = vcmp.eq.s32.totalorder %v424, %v435
        %vm445 = vcmp.eq.s32.totalorder %v425, %v435
        %vm446 = vcmp.eq.s32.totalorder %v426, %v435
        %vm447 = vcmp.eq.s32.totalorder %v427, %v435
        %vm448 = vcmp.eq.s32.totalorder %v428, %v435
        %vm449 = vcmp.eq.s32.totalorder %v429, %v435
        %vm450 = vcmp.eq.s32.totalorder %v430, %v435
        %vm451 = vcmp.eq.s32.totalorder %v431, %v435
        %v452 = vsel %vm436, 1, 0
        %v453 = vsel %vm437, 1, 0
        %v454 = vsel %vm438, 1, 0
        %v455 = vsel %vm439, 1, 0
        %v456 = vsel %vm440, 1, 0
        %v457 = vsel %vm441, 1, 0
        %v458 = vsel %vm442, 1, 0
        %v459 = vsel %vm443, 1, 0
        %v460 = vsel %vm444, 1, 0
        %v461 = vsel %vm445, 1, 0
        %v462 = vsel %vm446, 1, 0
        %v463 = vsel %vm447, 1, 0
        %v464 = vsel %vm448, 1, 0
        %v465 = vsel %vm449, 1, 0
        %v466 = vsel %vm450, 1, 0
        %v467 = vsel %vm451, 1, 0
        %v468 = vcvt.s32.f32 %v452
        %v469 = vcvt.s32.f32 %v453
        %v470 = vcvt.s32.f32 %v454
        %v471 = vcvt.s32.f32 %v455
        %v472 = vcvt.s32.f32 %v456
        %v473 = vcvt.s32.f32 %v457
        %v474 = vcvt.s32.f32 %v458
        %v475 = vcvt.s32.f32 %v459
        %v476 = vcvt.s32.f32 %v460
        %v477 = vcvt.s32.f32 %v461
        %v478 = vcvt.s32.f32 %v462
        %v479 = vcvt.s32.f32 %v463
        %v480 = vcvt.s32.f32 %v464
        %v481 = vcvt.s32.f32 %v465
        %v482 = vcvt.s32.f32 %v466
        %v483 = vcvt.s32.f32 %v467
        %484 = vmatprep.subr.mxu0 0.0
        %v485 = vand.u32 %v468, 4294901760
        %486 = vmatpush1.msra.mxu0 %v485
        %487 = vmatprep.subr.mxu0 0.0
        %v488 = vand.u32 %v469, 4294901760
        %489 = vmatpush1.msra.mxu0 %v488
        %490 = vmatprep.subr.mxu0 0.0
        %v491 = vand.u32 %v470, 4294901760
        %492 = vmatpush1.msra.mxu0 %v491
        %493 = vmatprep.subr.mxu0 0.0
        %v494 = vand.u32 %v471, 4294901760
        %495 = vmatpush1.msra.mxu0 %v494
        %496 = vmatprep.subr.mxu0 0.0
        %v497 = vand.u32 %v472, 4294901760
        %498 = vmatpush1.msra.mxu0 %v497
        %499 = vmatprep.subr.mxu0 0.0
        %v500 = vand.u32 %v473, 4294901760
        %501 = vmatpush1.msra.mxu0 %v500
        %502 = vmatprep.subr.mxu0 0.0
        %v503 = vand.u32 %v474, 4294901760
        %504 = vmatpush1.msra.mxu0 %v503
        %505 = vmatprep.subr.mxu0 0.0
        %v506 = vand.u32 %v475, 4294901760
        %507 = vmatpush1.msra.mxu0 %v506
        %508 = vmatprep.subr.mxu0 0.0
        %v509 = vand.u32 %v476, 4294901760
        %510 = vmatpush1.msra.mxu0 %v509
        %511 = vmatprep.subr.mxu0 0.0
        %v512 = vand.u32 %v477, 4294901760
        %513 = vmatpush1.msra.mxu0 %v512
        %514 = vmatprep.subr.mxu0 0.0
        %v515 = vand.u32 %v478, 4294901760
        %516 = vmatpush1.msra.mxu0 %v515
        %517 = vmatprep.subr.mxu0 0.0
        %v518 = vand.u32 %v479, 4294901760
        %519 = vmatpush1.msra.mxu0 %v518
        %520 = vmatprep.subr.mxu0 0.0
        %v521 = vand.u32 %v480, 4294901760
        %522 = vmatpush1.msra.mxu0 %v521
        %523 = vmatprep.subr.mxu0 0.0
        %v524 = vand.u32 %v481, 4294901760
        %525 = vmatpush1.msra.mxu0 %v524
        %526 = vmatprep.subr.mxu0 0.0
        %v527 = vand.u32 %v482, 4294901760
        %528 = vmatpush1.msra.mxu0 %v527
        %529 = vmatprep.subr.mxu0 0.0
        %v530 = vand.u32 %v483, 4294901760
        %531 = vmatpush1.msra.mxu0 %v530
        %532 = vmatprep.subr.mxu0 0.0
        %533 = vmatpush1.msra.mxu0 0.0
        %534 = vmatprep.subr.mxu0 0.0
        %535 = vmatpush1.msra.mxu0 0.0
        %536 = vmatprep.subr.mxu0 0.0
        %537 = vmatpush1.msra.mxu0 0.0
        %538 = vmatprep.subr.mxu0 0.0
        %539 = vmatpush1.msra.mxu0 0.0
        %540 = vmatprep.subr.mxu0 0.0
        %541 = vmatpush1.msra.mxu0 0.0
        %542 = vmatprep.subr.mxu0 0.0
        %543 = vmatpush1.msra.mxu0 0.0
        %544 = vmatprep.subr.mxu0 0.0
        %545 = vmatpush1.msra.mxu0 0.0
        %546 = vmatprep.subr.mxu0 0.0
        %547 = vmatpush1.msra.mxu0 0.0
        %548 = vmatprep.subr.mxu0 0.0
        %549 = vmatpush1.msra.mxu0 0.0
        %550 = vmatprep.subr.mxu0 0.0
        %551 = vmatpush1.msra.mxu0 0.0
        %552 = vmatprep.subr.mxu0 0.0
        %553 = vmatpush1.msra.mxu0 0.0
        %554 = vmatprep.subr.mxu0 0.0
        %555 = vmatpush1.msra.mxu0 0.0
        %556 = vmatprep.subr.mxu0 0.0
        %557 = vmatpush1.msra.mxu0 0.0
        %558 = vmatprep.subr.mxu0 0.0
        %559 = vmatpush1.msra.mxu0 0.0
        %560 = vmatprep.subr.mxu0 0.0
        %561 = vmatpush1.msra.mxu0 0.0
        %562 = vmatprep.subr.mxu0 0.0
        %563 = vmatpush1.msra.mxu0 0.0
        %564 = vmatprep.mubr.f32.mxu0 0.0
        %v565 = vand.u32 %v335, 4294901760
        %v566 = vsub.f32 %v335, %v565
        %v567 = vand.u32 %v566, 4294901760
        %v568 = vsub.f32 %v566, %v567
        %v569 = vand.u32 %v568, 4294901760
        %570 = vmatmul.mubr.f32.gmra.mrb[0].mxu0 %v569
        %v571 = vpop.f32.mrb[0].mxu0
        %v572 = vadd.f32 0.0, %v571
        %v573 = vpop.f32.mrb[0].mxu0
        %574 = vmatprep.mubr.f32.mxu0 0.0
        %v575 = vand.u32 %v337, 4294901760
        %v576 = vsub.f32 %v337, %v575
        %v577 = vand.u32 %v576, 4294901760
        %v578 = vsub.f32 %v576, %v577
        %v579 = vand.u32 %v578, 4294901760
        %580 = vmatmul.mubr.f32.gmra.mrb[0].mxu0 %v579
        %v581 = vpop.f32.mrb[0].mxu0
        %v582 = vadd.f32 0.0, %v581
        %v583 = vpop.f32.mrb[0].mxu0
        %584 = vmatprep.mubr.f32.mxu0 0.0
        %v585 = vand.u32 %v339, 4294901760
        %v586 = vsub.f32 %v339, %v585
        %v587 = vand.u32 %v586, 4294901760
        %v588 = vsub.f32 %v586, %v587
        %v589 = vand.u32 %v588, 4294901760
        %590 = vmatmul.mubr.f32.gmra.mrb[0].mxu0 %v589
        %v591 = vpop.f32.mrb[0].mxu0
        %v592 = vadd.f32 0.0, %v591
        %v593 = vpop.f32.mrb[0].mxu0
        %594 = vmatprep.mubr.f32.mxu0 0.0
        %v595 = vand.u32 %v341, 4294901760
        %v596 = vsub.f32 %v341, %v595
        %v597 = vand.u32 %v596, 4294901760
        %v598 = vsub.f32 %v596, %v597
        %v599 = vand.u32 %v598, 4294901760
        %600 = vmatmul.mubr.f32.gmra.mrb[0].mxu0 %v599
        %v601 = vpop.f32.mrb[0].mxu0
        %v602 = vadd.f32 0.0, %v601
        %v603 = vpop.f32.mrb[0].mxu0
        %604 = vmatprep.mubr.f32.mxu0 0.0
        %v605 = vand.u32 %v343, 4294901760
        %v606 = vsub.f32 %v343, %v605
        %v607 = vand.u32 %v606, 4294901760
        %v608 = vsub.f32 %v606, %v607
        %v609 = vand.u32 %v608, 4294901760
        %610 = vmatmul.mubr.f32.gmra.mrb[0].mxu0 %v609
        %v611 = vpop.f32.mrb[0].mxu0
        %v612 = vadd.f32 0.0, %v611
        %v613 = vpop.f32.mrb[0].mxu0
        %614 = vmatprep.mubr.f32.mxu0 0.0
        %v615 = vand.u32 %v345, 4294901760
        %v616 = vsub.f32 %v345, %v615
        %v617 = vand.u32 %v616, 4294901760
        %v618 = vsub.f32 %v616, %v617
        %v619 = vand.u32 %v618, 4294901760
        %620 = vmatmul.mubr.f32.gmra.mrb[0].mxu0 %v619
        %v621 = vpop.f32.mrb[0].mxu0
        %v622 = vadd.f32 0.0, %v621
        %v623 = vpop.f32.mrb[0].mxu0
        %624 = vmatprep.mubr.f32.mxu0 0.0
        %v625 = vand.u32 %v347, 4294901760
        %v626 = vsub.f32 %v347, %v625
        %v627 = vand.u32 %v626, 4294901760
        %v628 = vsub.f32 %v626, %v627
        %v629 = vand.u32 %v628, 4294901760
        %630 = vmatmul.mubr.f32.gmra.mrb[0].mxu0 %v629
        %v631 = vpop.f32.mrb[0].mxu0
        %v632 = vadd.f32 0.0, %v631
        %v633 = vpop.f32.mrb[0].mxu0
        %634 = vmatprep.mubr.f32.mxu0 0.0
        %v635 = vand.u32 %v349, 4294901760
        %v636 = vsub.f32 %v349, %v635
        %v637 = vand.u32 %v636, 4294901760
        %v638 = vsub.f32 %v636, %v637
        %v639 = vand.u32 %v638, 4294901760
        %640 = vmatmul.mubr.f32.gmra.mrb[0].mxu0 %v639
        %v641 = vpop.f32.mrb[0].mxu0
        %v642 = vadd.f32 0.0, %v641
        %v643 = vpop.f32.mrb[0].mxu0
        %644 = vmatprep.mubr.f32.mxu0 0.0
        %v645 = vand.u32 %v351, 4294901760
        %v646 = vsub.f32 %v351, %v645
        %v647 = vand.u32 %v646, 4294901760
        %v648 = vsub.f32 %v646, %v647
        %v649 = vand.u32 %v648, 4294901760
        %650 = vmatmul.mubr.f32.gmra.mrb[0].mxu0 %v649
        %v651 = vpop.f32.mrb[0].mxu0
        %v652 = vadd.f32 0.0, %v651
        %v653 = vpop.f32.mrb[0].mxu0
        %654 = vmatprep.mubr.f32.mxu0 0.0
        %v655 = vand.u32 %v353, 4294901760
        %v656 = vsub.f32 %v353, %v655
        %v657 = vand.u32 %v656, 4294901760
        %v658 = vsub.f32 %v656, %v657
        %v659 = vand.u32 %v658, 4294901760
        %660 = vmatmul.mubr.f32.gmra.mrb[0].mxu0 %v659
        %v661 = vpop.f32.mrb[0].mxu0
        %v662 = vadd.f32 0.0, %v661
        %v663 = vpop.f32.mrb[0].mxu0
        %664 = vmatprep.mubr.f32.mxu0 0.0
        %v665 = vand.u32 %v355, 4294901760
        %v666 = vsub.f32 %v355, %v665
        %v667 = vand.u32 %v666, 4294901760
        %v668 = vsub.f32 %v666, %v667
        %v669 = vand.u32 %v668, 4294901760
        %670 = vmatmul.mubr.f32.gmra.mrb[0].mxu0 %v669
        %v671 = vpop.f32.mrb[0].mxu0
        %v672 = vadd.f32 0.0, %v671
        %v673 = vpop.f32.mrb[0].mxu0
        %674 = vmatprep.mubr.f32.mxu0 0.0
        %v675 = vand.u32 %v357, 4294901760
        %v676 = vsub.f32 %v357, %v675
        %v677 = vand.u32 %v676, 4294901760
        %v678 = vsub.f32 %v676, %v677
        %v679 = vand.u32 %v678, 4294901760
        %680 = vmatmul.mubr.f32.gmra.mrb[0].mxu0 %v679
        %v681 = vpop.f32.mrb[0].mxu0
        %v682 = vadd.f32 0.0, %v681
        %v683 = vpop.f32.mrb[0].mxu0
        %684 = vmatprep.mubr.f32.mxu0 0.0
        %v685 = vand.u32 %v359, 4294901760
        %v686 = vsub.f32 %v359, %v685
        %v687 = vand.u32 %v686, 4294901760
        %v688 = vsub.f32 %v686, %v687
        %v689 = vand.u32 %v688, 4294901760
        %690 = vmatmul.mubr.f32.gmra.mrb[0].mxu0 %v689
        %v691 = vpop.f32.mrb[0].mxu0
        %v692 = vadd.f32 0.0, %v691
        %v693 = vpop.f32.mrb[0].mxu0
        %694 = vmatprep.mubr.f32.mxu0 0.0
        %v695 = vand.u32 %v361, 4294901760
        %v696 = vsub.f32 %v361, %v695
        %v697 = vand.u32 %v696, 4294901760
        %v698 = vsub.f32 %v696, %v697
        %v699 = vand.u32 %v698, 4294901760
        %700 = vmatmul.mubr.f32.gmra.mrb[0].mxu0 %v699
        %v701 = vpop.f32.mrb[0].mxu0
        %v702 = vadd.f32 0.0, %v701
        %v703 = vpop.f32.mrb[0].mxu0
        %704 = vmatprep.mubr.f32.mxu0 0.0
        %v705 = vand.u32 %v363, 4294901760
        %v706 = vsub.f32 %v363, %v705
        %v707 = vand.u32 %v706, 4294901760
        %v708 = vsub.f32 %v706, %v707
        %v709 = vand.u32 %v708, 4294901760
        %710 = vmatmul.mubr.f32.gmra.mrb[0].mxu0 %v709
        %v711 = vpop.f32.mrb[0].mxu0
        %v712 = vadd.f32 0.0, %v711
        %v713 = vpop.f32.mrb[0].mxu0
        %714 = vmatprep.mubr.f32.mxu0 0.0
        %v715 = vand.u32 %v365, 4294901760
        %v716 = vsub.f32 %v365, %v715
        %v717 = vand.u32 %v716, 4294901760
        %v718 = vsub.f32 %v716, %v717
        %v719 = vand.u32 %v718, 4294901760
        %720 = vmatmul.mubr.f32.gmra.mrb[0].mxu0 %v719
        %v721 = vpop.f32.mrb[0].mxu0
        %v722 = vadd.f32 0.0, %v721
        %v723 = vpop.f32.mrb[0].mxu0
        %724 = vdwg.mxu0
        %725 = vmatprep.subr.mxu0 0.0
        %v726 = vand.u32 %v468, 4294901760
        %v727 = vsub.f32 %v468, %v726
        %v728 = vand.u32 %v727, 4294901760
        %v729 = vsub.f32 %v727, %v728
        %v730 = vand.u32 %v729, 4294901760
        %731 = vmatpush1.msra.mxu0 %v730
        %732 = vmatprep.subr.mxu0 0.0
        %v733 = vand.u32 %v469, 4294901760
        %v734 = vsub.f32 %v469, %v733
        %v735 = vand.u32 %v734, 4294901760
        %v736 = vsub.f32 %v734, %v735
        %v737 = vand.u32 %v736, 4294901760
        %738 = vmatpush1.msra.mxu0 %v737
        %739 = vmatprep.subr.mxu0 0.0
        %v740 = vand.u32 %v470, 4294901760
        %v741 = vsub.f32 %v470, %v740
        %v742 = vand.u32 %v741, 4294901760
        %v743 = vsub.f32 %v741, %v742
        %v744 = vand.u32 %v743, 4294901760
        %745 = vmatpush1.msra.mxu0 %v744
        %746 = vmatprep.subr.mxu0 0.0
        %v747 = vand.u32 %v471, 4294901760
        %v748 = vsub.f32 %v471, %v747
        %v749 = vand.u32 %v748, 4294901760
        %v750 = vsub.f32 %v748, %v749
        %v751 = vand.u32 %v750, 4294901760
        %752 = vmatpush1.msra.mxu0 %v751
        %753 = vmatprep.subr.mxu0 0.0
        %v754 = vand.u32 %v472, 4294901760
        %v755 = vsub.f32 %v472, %v754
        %v756 = vand.u32 %v755, 4294901760
        %v757 = vsub.f32 %v755, %v756
        %v758 = vand.u32 %v757, 4294901760
        %759 = vmatpush1.msra.mxu0 %v758
        %760 = vmatprep.subr.mxu0 0.0
        %v761 = vand.u32 %v473, 4294901760
        %v762 = vsub.f32 %v473, %v761
        %v763 = vand.u32 %v762, 4294901760
        %v764 = vsub.f32 %v762, %v763
        %v765 = vand.u32 %v764, 4294901760
        %766 = vmatpush1.msra.mxu0 %v765
        %767 = vmatprep.subr.mxu0 0.0
        %v768 = vand.u32 %v474, 4294901760
        %v769 = vsub.f32 %v474, %v768
        %v770 = vand.u32 %v769, 4294901760
        %v771 = vsub.f32 %v769, %v770
        %v772 = vand.u32 %v771, 4294901760
        %773 = vmatpush1.msra.mxu0 %v772
        %774 = vmatprep.subr.mxu0 0.0
        %v775 = vand.u32 %v475, 4294901760
        %v776 = vsub.f32 %v475, %v775
        %v777 = vand.u32 %v776, 4294901760
        %v778 = vsub.f32 %v776, %v777
        %v779 = vand.u32 %v778, 4294901760
        %780 = vmatpush1.msra.mxu0 %v779
        %781 = vmatprep.subr.mxu0 0.0
        %v782 = vand.u32 %v476, 4294901760
        %v783 = vsub.f32 %v476, %v782
        %v784 = vand.u32 %v783, 4294901760
        %v785 = vsub.f32 %v783, %v784
        %v786 = vand.u32 %v785, 4294901760
        %787 = vmatpush1.msra.mxu0 %v786
        %788 = vmatprep.subr.mxu0 0.0
        %v789 = vand.u32 %v477, 4294901760
        %v790 = vsub.f32 %v477, %v789
        %v791 = vand.u32 %v790, 4294901760
        %v792 = vsub.f32 %v790, %v791
        %v793 = vand.u32 %v792, 4294901760
        %794 = vmatpush1.msra.mxu0 %v793
        %795 = vmatprep.subr.mxu0 0.0
        %v796 = vand.u32 %v478, 4294901760
        %v797 = vsub.f32 %v478, %v796
        %v798 = vand.u32 %v797, 4294901760
        %v799 = vsub.f32 %v797, %v798
        %v800 = vand.u32 %v799, 4294901760
        %801 = vmatpush1.msra.mxu0 %v800
        %802 = vmatprep.subr.mxu0 0.0
        %v803 = vand.u32 %v479, 4294901760
        %v804 = vsub.f32 %v479, %v803
        %v805 = vand.u32 %v804, 4294901760
        %v806 = vsub.f32 %v804, %v805
        %v807 = vand.u32 %v806, 4294901760
        %808 = vmatpush1.msra.mxu0 %v807
        %809 = vmatprep.subr.mxu0 0.0
        %v810 = vand.u32 %v480, 4294901760
        %v811 = vsub.f32 %v480, %v810
        %v812 = vand.u32 %v811, 4294901760
        %v813 = vsub.f32 %v811, %v812
        %v814 = vand.u32 %v813, 4294901760
        %815 = vmatpush1.msra.mxu0 %v814
        %816 = vmatprep.subr.mxu0 0.0
        %v817 = vand.u32 %v481, 4294901760
        %v818 = vsub.f32 %v481, %v817
        %v819 = vand.u32 %v818, 4294901760
        %v820 = vsub.f32 %v818, %v819
        %v821 = vand.u32 %v820, 4294901760
        %822 = vmatpush1.msra.mxu0 %v821
        %823 = vmatprep.subr.mxu0 0.0
        %v824 = vand.u32 %v482, 4294901760
        %v825 = vsub.f32 %v482, %v824
        %v826 = vand.u32 %v825, 4294901760
        %v827 = vsub.f32 %v825, %v826
        %v828 = vand.u32 %v827, 4294901760
        %829 = vmatpush1.msra.mxu0 %v828
        %830 = vmatprep.subr.mxu0 0.0
        %v831 = vand.u32 %v483, 4294901760
        %v832 = vsub.f32 %v483, %v831
        %v833 = vand.u32 %v832, 4294901760
        %v834 = vsub.f32 %v832, %v833
        %v835 = vand.u32 %v834, 4294901760
        %836 = vmatpush1.msra.mxu0 %v835
        %837 = vmatprep.subr.mxu0 0.0
        %838 = vmatpush1.msra.mxu0 0.0
        %839 = vmatprep.subr.mxu0 0.0
        %840 = vmatpush1.msra.mxu0 0.0
        %841 = vmatprep.subr.mxu0 0.0
        %842 = vmatpush1.msra.mxu0 0.0
        %843 = vmatprep.subr.mxu0 0.0
        %844 = vmatpush1.msra.mxu0 0.0
        %845 = vmatprep.subr.mxu0 0.0
        %846 = vmatpush1.msra.mxu0 0.0
        %847 = vmatprep.subr.mxu0 0.0
        %848 = vmatpush1.msra.mxu0 0.0
        %849 = vmatprep.subr.mxu0 0.0
        %850 = vmatpush1.msra.mxu0 0.0
        %851 = vmatprep.subr.mxu0 0.0
        %852 = vmatpush1.msra.mxu0 0.0
        %853 = vmatprep.subr.mxu0 0.0
        %854 = vmatpush1.msra.mxu0 0.0
        %855 = vmatprep.subr.mxu0 0.0
        %856 = vmatpush1.msra.mxu0 0.0
        %857 = vmatprep.subr.mxu0 0.0
        %858 = vmatpush1.msra.mxu0 0.0
        %859 = vmatprep.subr.mxu0 0.0
        %860 = vmatpush1.msra.mxu0 0.0
        %861 = vmatprep.subr.mxu0 0.0
        %862 = vmatpush1.msra.mxu0 0.0
        %863 = vmatprep.subr.mxu0 0.0
        %864 = vmatpush1.msra.mxu0 0.0
        %865 = vmatprep.subr.mxu0 0.0
        %866 = vmatpush1.msra.mxu0 0.0
        %867 = vmatprep.subr.mxu0 0.0
        %868 = vmatpush1.msra.mxu0 0.0
        %869 = vmatprep.mubr.f32.mxu0 0.0
        %v870 = vand.u32 %v335, 4294901760
        %871 = vmatmul.mubr.f32.gmra.mrb[0].mxu0 %v870
        %v872 = vpop.f32.mrb[0].mxu0
        %v873 = vadd.f32 %v572, %v872
        %v874 = vpop.f32.mrb[0].mxu0
        %875 = vmatprep.mubr.f32.mxu0 0.0
        %v876 = vand.u32 %v337, 4294901760
        %877 = vmatmul.mubr.f32.gmra.mrb[0].mxu0 %v876
        %v878 = vpop.f32.mrb[0].mxu0
        %v879 = vadd.f32 %v582, %v878
        %v880 = vpop.f32.mrb[0].mxu0
        %881 = vmatprep.mubr.f32.mxu0 0.0
        %v882 = vand.u32 %v339, 4294901760
        %883 = vmatmul.mubr.f32.gmra.mrb[0].mxu0 %v882
        %v884 = vpop.f32.mrb[0].mxu0
        %v885 = vadd.f32 %v592, %v884
        %v886 = vpop.f32.mrb[0].mxu0
        %887 = vmatprep.mubr.f32.mxu0 0.0
        %v888 = vand.u32 %v341, 4294901760
        %889 = vmatmul.mubr.f32.gmra.mrb[0].mxu0 %v888
        %v890 = vpop.f32.mrb[0].mxu0
        %v891 = vadd.f32 %v602, %v890
        %v892 = vpop.f32.mrb[0].mxu0
        %893 = vmatprep.mubr.f32.mxu0 0.0
        %v894 = vand.u32 %v343, 4294901760
        %895 = vmatmul.mubr.f32.gmra.mrb[0].mxu0 %v894
        %v896 = vpop.f32.mrb[0].mxu0
        %v897 = vadd.f32 %v612, %v896
        %v898 = vpop.f32.mrb[0].mxu0
        %899 = vmatprep.mubr.f32.mxu0 0.0
        %v900 = vand.u32 %v345, 4294901760
        %901 = vmatmul.mubr.f32.gmra.mrb[0].mxu0 %v900
        %v902 = vpop.f32.mrb[0].mxu0
        %v903 = vadd.f32 %v622, %v902
        %v904 = vpop.f32.mrb[0].mxu0
        %905 = vmatprep.mubr.f32.mxu0 0.0
        %v906 = vand.u32 %v347, 4294901760
        %907 = vmatmul.mubr.f32.gmra.mrb[0].mxu0 %v906
        %v908 = vpop.f32.mrb[0].mxu0
        %v909 = vadd.f32 %v632, %v908
        %v910 = vpop.f32.mrb[0].mxu0
        %911 = vmatprep.mubr.f32.mxu0 0.0
        %v912 = vand.u32 %v349, 4294901760
        %913 = vmatmul.mubr.f32.gmra.mrb[0].mxu0 %v912
        %v914 = vpop.f32.mrb[0].mxu0
        %v915 = vadd.f32 %v642, %v914
        %v916 = vpop.f32.mrb[0].mxu0
        %917 = vmatprep.mubr.f32.mxu0 0.0
        %v918 = vand.u32 %v351, 4294901760
        %919 = vmatmul.mubr.f32.gmra.mrb[0].mxu0 %v918
        %v920 = vpop.f32.mrb[0].mxu0
        %v921 = vadd.f32 %v652, %v920
        %v922 = vpop.f32.mrb[0].mxu0
        %923 = vmatprep.mubr.f32.mxu0 0.0
        %v924 = vand.u32 %v353, 4294901760
        %925 = vmatmul.mubr.f32.gmra.mrb[0].mxu0 %v924
        %v926 = vpop.f32.mrb[0].mxu0
        %v927 = vadd.f32 %v662, %v926
        %v928 = vpop.f32.mrb[0].mxu0
        %929 = vmatprep.mubr.f32.mxu0 0.0
        %v930 = vand.u32 %v355, 4294901760
        %931 = vmatmul.mubr.f32.gmra.mrb[0].mxu0 %v930
        %v932 = vpop.f32.mrb[0].mxu0
        %v933 = vadd.f32 %v672, %v932
        %v934 = vpop.f32.mrb[0].mxu0
        %935 = vmatprep.mubr.f32.mxu0 0.0
        %v936 = vand.u32 %v357, 4294901760
        %937 = vmatmul.mubr.f32.gmra.mrb[0].mxu0 %v936
        %v938 = vpop.f32.mrb[0].mxu0
        %v939 = vadd.f32 %v682, %v938
        %v940 = vpop.f32.mrb[0].mxu0
        %941 = vmatprep.mubr.f32.mxu0 0.0
        %v942 = vand.u32 %v359, 4294901760
        %943 = vmatmul.mubr.f32.gmra.mrb[0].mxu0 %v942
        %v944 = vpop.f32.mrb[0].mxu0
        %v945 = vadd.f32 %v692, %v944
        %v946 = vpop.f32.mrb[0].mxu0
        %947 = vmatprep.mubr.f32.mxu0 0.0
        %v948 = vand.u32 %v361, 4294901760
        %949 = vmatmul.mubr.f32.gmra.mrb[0].mxu0 %v948
        %v950 = vpop.f32.mrb[0].mxu0
        %v951 = vadd.f32 %v702, %v950
        %v952 = vpop.f32.mrb[0].mxu0
        %953 = vmatprep.mubr.f32.mxu0 0.0
        %v954 = vand.u32 %v363, 4294901760
        %955 = vmatmul.mubr.f32.gmra.mrb[0].mxu0 %v954
        %v956 = vpop.f32.mrb[0].mxu0
        %v957 = vadd.f32 %v712, %v956
        %v958 = vpop.f32.mrb[0].mxu0
        %959 = vmatprep.mubr.f32.mxu0 0.0
        %v960 = vand.u32 %v365, 4294901760
        %961 = vmatmul.mubr.f32.gmra.mrb[0].mxu0 %v960
        %v962 = vpop.f32.mrb[0].mxu0
        %v963 = vadd.f32 %v722, %v962
        %v964 = vpop.f32.mrb[0].mxu0
        %965 = vdwg.mxu0
        %966 = vmatprep.subr.mxu0 0.0
        %v967 = vand.u32 %v468, 4294901760
        %v968 = vsub.f32 %v468, %v967
        %969 = vmatpush1.msra.mxu0 %v968
        %970 = vmatprep.subr.mxu0 0.0
        %v971 = vand.u32 %v469, 4294901760
        %v972 = vsub.f32 %v469, %v971
        %973 = vmatpush1.msra.mxu0 %v972
        %974 = vmatprep.subr.mxu0 0.0
        %v975 = vand.u32 %v470, 4294901760
        %v976 = vsub.f32 %v470, %v975
        %977 = vmatpush1.msra.mxu0 %v976
        %978 = vmatprep.subr.mxu0 0.0
        %v979 = vand.u32 %v471, 4294901760
        %v980 = vsub.f32 %v471, %v979
        %981 = vmatpush1.msra.mxu0 %v980
        %982 = vmatprep.subr.mxu0 0.0
        %v983 = vand.u32 %v472, 4294901760
        %v984 = vsub.f32 %v472, %v983
        %985 = vmatpush1.msra.mxu0 %v984
        %986 = vmatprep.subr.mxu0 0.0
        %v987 = vand.u32 %v473, 4294901760
        %v988 = vsub.f32 %v473, %v987
        %989 = vmatpush1.msra.mxu0 %v988
        %990 = vmatprep.subr.mxu0 0.0
        %v991 = vand.u32 %v474, 4294901760
        %v992 = vsub.f32 %v474, %v991
        %993 = vmatpush1.msra.mxu0 %v992
        %994 = vmatprep.subr.mxu0 0.0
        %v995 = vand.u32 %v475, 4294901760
        %v996 = vsub.f32 %v475, %v995
        %997 = vmatpush1.msra.mxu0 %v996
        %998 = vmatprep.subr.mxu0 0.0
        %v999 = vand.u32 %v476, 4294901760
        %v1000 = vsub.f32 %v476, %v999
        %1001 = vmatpush1.msra.mxu0 %v1000
        %1002 = vmatprep.subr.mxu0 0.0
        %v1003 = vand.u32 %v477, 4294901760
        %v1004 = vsub.f32 %v477, %v1003
        %1005 = vmatpush1.msra.mxu0 %v1004
        %1006 = vmatprep.subr.mxu0 0.0
        %v1007 = vand.u32 %v478, 4294901760
        %v1008 = vsub.f32 %v478, %v1007
        %1009 = vmatpush1.msra.mxu0 %v1008
        %1010 = vmatprep.subr.mxu0 0.0
        %v1011 = vand.u32 %v479, 4294901760
        %v1012 = vsub.f32 %v479, %v1011
        %1013 = vmatpush1.msra.mxu0 %v1012
        %1014 = vmatprep.subr.mxu0 0.0
        %v1015 = vand.u32 %v480, 4294901760
        %v1016 = vsub.f32 %v480, %v1015
        %1017 = vmatpush1.msra.mxu0 %v1016
        %1018 = vmatprep.subr.mxu0 0.0
        %v1019 = vand.u32 %v481, 4294901760
        %v1020 = vsub.f32 %v481, %v1019
        %1021 = vmatpush1.msra.mxu0 %v1020
        %1022 = vmatprep.subr.mxu0 0.0
        %v1023 = vand.u32 %v482, 4294901760
        %v1024 = vsub.f32 %v482, %v1023
        %1025 = vmatpush1.msra.mxu0 %v1024
        %1026 = vmatprep.subr.mxu0 0.0
        %v1027 = vand.u32 %v483, 4294901760
        %v1028 = vsub.f32 %v483, %v1027
        %1029 = vmatpush1.msra.mxu0 %v1028
        %1030 = vmatprep.subr.mxu0 0.0
        %1031 = vmatpush1.msra.mxu0 0.0
        %1032 = vmatprep.subr.mxu0 0.0
        %1033 = vmatpush1.msra.mxu0 0.0
        %1034 = vmatprep.subr.mxu0 0.0
        %1035 = vmatpush1.msra.mxu0 0.0
        %1036 = vmatprep.subr.mxu0 0.0
        %1037 = vmatpush1.msra.mxu0 0.0
        %1038 = vmatprep.subr.mxu0 0.0
        %1039 = vmatpush1.msra.mxu0 0.0
        %1040 = vmatprep.subr.mxu0 0.0
        %1041 = vmatpush1.msra.mxu0 0.0
        %1042 = vmatprep.subr.mxu0 0.0
        %1043 = vmatpush1.msra.mxu0 0.0
        %1044 = vmatprep.subr.mxu0 0.0
        %1045 = vmatpush1.msra.mxu0 0.0
        %1046 = vmatprep.subr.mxu0 0.0
        %1047 = vmatpush1.msra.mxu0 0.0
        %1048 = vmatprep.subr.mxu0 0.0
        %1049 = vmatpush1.msra.mxu0 0.0
        %1050 = vmatprep.subr.mxu0 0.0
        %1051 = vmatpush1.msra.mxu0 0.0
        %1052 = vmatprep.subr.mxu0 0.0
        %1053 = vmatpush1.msra.mxu0 0.0
        %1054 = vmatprep.subr.mxu0 0.0
        %1055 = vmatpush1.msra.mxu0 0.0
        %1056 = vmatprep.subr.mxu0 0.0
        %1057 = vmatpush1.msra.mxu0 0.0
        %1058 = vmatprep.subr.mxu0 0.0
        %1059 = vmatpush1.msra.mxu0 0.0
        %1060 = vmatprep.subr.mxu0 0.0
        %1061 = vmatpush1.msra.mxu0 0.0
        %1062 = vmatprep.mubr.f32.mxu0 0.0
        %v1063 = vand.u32 %v335, 4294901760
        %v1064 = vsub.f32 %v335, %v1063
        %1065 = vmatmul.mubr.f32.gmra.mrb[0].mxu0 %v1064
        %v1066 = vpop.f32.mrb[0].mxu0
        %v1067 = vadd.f32 %v873, %v1066
        %v1068 = vpop.f32.mrb[0].mxu0
        %1069 = vmatprep.mubr.f32.mxu0 0.0
        %v1070 = vand.u32 %v337, 4294901760
        %v1071 = vsub.f32 %v337, %v1070
        %1072 = vmatmul.mubr.f32.gmra.mrb[0].mxu0 %v1071
        %v1073 = vpop.f32.mrb[0].mxu0
        %v1074 = vadd.f32 %v879, %v1073
        %v1075 = vpop.f32.mrb[0].mxu0
        %1076 = vmatprep.mubr.f32.mxu0 0.0
        %v1077 = vand.u32 %v339, 4294901760
        %v1078 = vsub.f32 %v339, %v1077
        %1079 = vmatmul.mubr.f32.gmra.mrb[0].mxu0 %v1078
        %v1080 = vpop.f32.mrb[0].mxu0
        %v1081 = vadd.f32 %v885, %v1080
        %v1082 = vpop.f32.mrb[0].mxu0
        %1083 = vmatprep.mubr.f32.mxu0 0.0
        %v1084 = vand.u32 %v341, 4294901760
        %v1085 = vsub.f32 %v341, %v1084
        %1086 = vmatmul.mubr.f32.gmra.mrb[0].mxu0 %v1085
        %v1087 = vpop.f32.mrb[0].mxu0
        %v1088 = vadd.f32 %v891, %v1087
        %v1089 = vpop.f32.mrb[0].mxu0
        %1090 = vmatprep.mubr.f32.mxu0 0.0
        %v1091 = vand.u32 %v343, 4294901760
        %v1092 = vsub.f32 %v343, %v1091
        %1093 = vmatmul.mubr.f32.gmra.mrb[0].mxu0 %v1092
        %v1094 = vpop.f32.mrb[0].mxu0
        %v1095 = vadd.f32 %v897, %v1094
        %v1096 = vpop.f32.mrb[0].mxu0
        %1097 = vmatprep.mubr.f32.mxu0 0.0
        %v1098 = vand.u32 %v345, 4294901760
        %v1099 = vsub.f32 %v345, %v1098
        %1100 = vmatmul.mubr.f32.gmra.mrb[0].mxu0 %v1099
        %v1101 = vpop.f32.mrb[0].mxu0
        %v1102 = vadd.f32 %v903, %v1101
        %v1103 = vpop.f32.mrb[0].mxu0
        %1104 = vmatprep.mubr.f32.mxu0 0.0
        %v1105 = vand.u32 %v347, 4294901760
        %v1106 = vsub.f32 %v347, %v1105
        %1107 = vmatmul.mubr.f32.gmra.mrb[0].mxu0 %v1106
        %v1108 = vpop.f32.mrb[0].mxu0
        %v1109 = vadd.f32 %v909, %v1108
        %v1110 = vpop.f32.mrb[0].mxu0
        %1111 = vmatprep.mubr.f32.mxu0 0.0
        %v1112 = vand.u32 %v349, 4294901760
        %v1113 = vsub.f32 %v349, %v1112
        %1114 = vmatmul.mubr.f32.gmra.mrb[0].mxu0 %v1113
        %v1115 = vpop.f32.mrb[0].mxu0
        %v1116 = vadd.f32 %v915, %v1115
        %v1117 = vpop.f32.mrb[0].mxu0
        %1118 = vmatprep.mubr.f32.mxu0 0.0
        %v1119 = vand.u32 %v351, 4294901760
        %v1120 = vsub.f32 %v351, %v1119
        %1121 = vmatmul.mubr.f32.gmra.mrb[0].mxu0 %v1120
        %v1122 = vpop.f32.mrb[0].mxu0
        %v1123 = vadd.f32 %v921, %v1122
        %v1124 = vpop.f32.mrb[0].mxu0
        %1125 = vmatprep.mubr.f32.mxu0 0.0
        %v1126 = vand.u32 %v353, 4294901760
        %v1127 = vsub.f32 %v353, %v1126
        %1128 = vmatmul.mubr.f32.gmra.mrb[0].mxu0 %v1127
        %v1129 = vpop.f32.mrb[0].mxu0
        %v1130 = vadd.f32 %v927, %v1129
        %v1131 = vpop.f32.mrb[0].mxu0
        %1132 = vmatprep.mubr.f32.mxu0 0.0
        %v1133 = vand.u32 %v355, 4294901760
        %v1134 = vsub.f32 %v355, %v1133
        %1135 = vmatmul.mubr.f32.gmra.mrb[0].mxu0 %v1134
        %v1136 = vpop.f32.mrb[0].mxu0
        %v1137 = vadd.f32 %v933, %v1136
        %v1138 = vpop.f32.mrb[0].mxu0
        %1139 = vmatprep.mubr.f32.mxu0 0.0
        %v1140 = vand.u32 %v357, 4294901760
        %v1141 = vsub.f32 %v357, %v1140
        %1142 = vmatmul.mubr.f32.gmra.mrb[0].mxu0 %v1141
        %v1143 = vpop.f32.mrb[0].mxu0
        %v1144 = vadd.f32 %v939, %v1143
        %v1145 = vpop.f32.mrb[0].mxu0
        %1146 = vmatprep.mubr.f32.mxu0 0.0
        %v1147 = vand.u32 %v359, 4294901760
        %v1148 = vsub.f32 %v359, %v1147
        %1149 = vmatmul.mubr.f32.gmra.mrb[0].mxu0 %v1148
        %v1150 = vpop.f32.mrb[0].mxu0
        %v1151 = vadd.f32 %v945, %v1150
        %v1152 = vpop.f32.mrb[0].mxu0
        %1153 = vmatprep.mubr.f32.mxu0 0.0
        %v1154 = vand.u32 %v361, 4294901760
        %v1155 = vsub.f32 %v361, %v1154
        %1156 = vmatmul.mubr.f32.gmra.mrb[0].mxu0 %v1155
        %v1157 = vpop.f32.mrb[0].mxu0
        %v1158 = vadd.f32 %v951, %v1157
        %v1159 = vpop.f32.mrb[0].mxu0
        %1160 = vmatprep.mubr.f32.mxu0 0.0
        %v1161 = vand.u32 %v363, 4294901760
        %v1162 = vsub.f32 %v363, %v1161
        %1163 = vmatmul.mubr.f32.gmra.mrb[0].mxu0 %v1162
        %v1164 = vpop.f32.mrb[0].mxu0
        %v1165 = vadd.f32 %v957, %v1164
        %v1166 = vpop.f32.mrb[0].mxu0
        %1167 = vmatprep.mubr.f32.mxu0 0.0
        %v1168 = vand.u32 %v365, 4294901760
        %v1169 = vsub.f32 %v365, %v1168
        %1170 = vmatmul.mubr.f32.gmra.mrb[0].mxu0 %v1169
        %v1171 = vpop.f32.mrb[0].mxu0
        %v1172 = vadd.f32 %v963, %v1171
        %v1173 = vpop.f32.mrb[0].mxu0
        %1174 = vdwg.mxu0
        %1175 = vmatprep.subr.mxu0 0.0
        %v1176 = vand.u32 %v468, 4294901760
        %1177 = vmatpush1.msra.mxu0 %v1176
        %1178 = vmatprep.subr.mxu0 0.0
        %v1179 = vand.u32 %v469, 4294901760
        %1180 = vmatpush1.msra.mxu0 %v1179
        %1181 = vmatprep.subr.mxu0 0.0
        %v1182 = vand.u32 %v470, 4294901760
        %1183 = vmatpush1.msra.mxu0 %v1182
        %1184 = vmatprep.subr.mxu0 0.0
        %v1185 = vand.u32 %v471, 4294901760
        %1186 = vmatpush1.msra.mxu0 %v1185
        %1187 = vmatprep.subr.mxu0 0.0
        %v1188 = vand.u32 %v472, 4294901760
        %1189 = vmatpush1.msra.mxu0 %v1188
        %1190 = vmatprep.subr.mxu0 0.0
        %v1191 = vand.u32 %v473, 4294901760
        %1192 = vmatpush1.msra.mxu0 %v1191
        %1193 = vmatprep.subr.mxu0 0.0
        %v1194 = vand.u32 %v474, 4294901760
        %1195 = vmatpush1.msra.mxu0 %v1194
        %1196 = vmatprep.subr.mxu0 0.0
        %v1197 = vand.u32 %v475, 4294901760
        %1198 = vmatpush1.msra.mxu0 %v1197
        %1199 = vmatprep.subr.mxu0 0.0
        %v1200 = vand.u32 %v476, 4294901760
        %1201 = vmatpush1.msra.mxu0 %v1200
        %1202 = vmatprep.subr.mxu0 0.0
        %v1203 = vand.u32 %v477, 4294901760
        %1204 = vmatpush1.msra.mxu0 %v1203
        %1205 = vmatprep.subr.mxu0 0.0
        %v1206 = vand.u32 %v478, 4294901760
        %1207 = vmatpush1.msra.mxu0 %v1206
        %1208 = vmatprep.subr.mxu0 0.0
        %v1209 = vand.u32 %v479, 4294901760
        %1210 = vmatpush1.msra.mxu0 %v1209
        %1211 = vmatprep.subr.mxu0 0.0
        %v1212 = vand.u32 %v480, 4294901760
        %1213 = vmatpush1.msra.mxu0 %v1212
        %1214 = vmatprep.subr.mxu0 0.0
        %v1215 = vand.u32 %v481, 4294901760
        %1216 = vmatpush1.msra.mxu0 %v1215
        %1217 = vmatprep.subr.mxu0 0.0
        %v1218 = vand.u32 %v482, 4294901760
        %1219 = vmatpush1.msra.mxu0 %v1218
        %1220 = vmatprep.subr.mxu0 0.0
        %v1221 = vand.u32 %v483, 4294901760
        %1222 = vmatpush1.msra.mxu0 %v1221
        %1223 = vmatprep.subr.mxu0 0.0
        %1224 = vmatpush1.msra.mxu0 0.0
        %1225 = vmatprep.subr.mxu0 0.0
        %1226 = vmatpush1.msra.mxu0 0.0
        %1227 = vmatprep.subr.mxu0 0.0
        %1228 = vmatpush1.msra.mxu0 0.0
        %1229 = vmatprep.subr.mxu0 0.0
        %1230 = vmatpush1.msra.mxu0 0.0
        %1231 = vmatprep.subr.mxu0 0.0
        %1232 = vmatpush1.msra.mxu0 0.0
        %1233 = vmatprep.subr.mxu0 0.0
        %1234 = vmatpush1.msra.mxu0 0.0
        %1235 = vmatprep.subr.mxu0 0.0
        %1236 = vmatpush1.msra.mxu0 0.0
        %1237 = vmatprep.subr.mxu0 0.0
        %1238 = vmatpush1.msra.mxu0 0.0
        %1239 = vmatprep.subr.mxu0 0.0
        %1240 = vmatpush1.msra.mxu0 0.0
        %1241 = vmatprep.subr.mxu0 0.0
        %1242 = vmatpush1.msra.mxu0 0.0
        %1243 = vmatprep.subr.mxu0 0.0
        %1244 = vmatpush1.msra.mxu0 0.0
        %1245 = vmatprep.subr.mxu0 0.0
        %1246 = vmatpush1.msra.mxu0 0.0
        %1247 = vmatprep.subr.mxu0 0.0
        %1248 = vmatpush1.msra.mxu0 0.0
        %1249 = vmatprep.subr.mxu0 0.0
        %1250 = vmatpush1.msra.mxu0 0.0
        %1251 = vmatprep.subr.mxu0 0.0
        %1252 = vmatpush1.msra.mxu0 0.0
        %1253 = vmatprep.subr.mxu0 0.0
        %1254 = vmatpush1.msra.mxu0 0.0
        %1255 = vmatprep.mubr.f32.mxu0 0.0
        %v1256 = vand.u32 %v335, 4294901760
        %v1257 = vsub.f32 %v335, %v1256
        %v1258 = vand.u32 %v1257, 4294901760
        %1259 = vmatmul.mubr.f32.gmra.mrb[0].mxu0 %v1258
        %v1260 = vpop.f32.mrb[0].mxu0
        %v1261 = vadd.f32 %v1067, %v1260
        %v1262 = vpop.f32.mrb[0].mxu0
        %1263 = vmatprep.mubr.f32.mxu0 0.0
        %v1264 = vand.u32 %v337, 4294901760
        %v1265 = vsub.f32 %v337, %v1264
        %v1266 = vand.u32 %v1265, 4294901760
        %1267 = vmatmul.mubr.f32.gmra.mrb[0].mxu0 %v1266
        %v1268 = vpop.f32.mrb[0].mxu0
        %v1269 = vadd.f32 %v1074, %v1268
        %v1270 = vpop.f32.mrb[0].mxu0
        %1271 = vmatprep.mubr.f32.mxu0 0.0
        %v1272 = vand.u32 %v339, 4294901760
        %v1273 = vsub.f32 %v339, %v1272
        %v1274 = vand.u32 %v1273, 4294901760
        %1275 = vmatmul.mubr.f32.gmra.mrb[0].mxu0 %v1274
        %v1276 = vpop.f32.mrb[0].mxu0
        %v1277 = vadd.f32 %v1081, %v1276
        %v1278 = vpop.f32.mrb[0].mxu0
        %1279 = vmatprep.mubr.f32.mxu0 0.0
        %v1280 = vand.u32 %v341, 4294901760
        %v1281 = vsub.f32 %v341, %v1280
        %v1282 = vand.u32 %v1281, 4294901760
        %1283 = vmatmul.mubr.f32.gmra.mrb[0].mxu0 %v1282
        %v1284 = vpop.f32.mrb[0].mxu0
        %v1285 = vadd.f32 %v1088, %v1284
        %v1286 = vpop.f32.mrb[0].mxu0
        %1287 = vmatprep.mubr.f32.mxu0 0.0
        %v1288 = vand.u32 %v343, 4294901760
        %v1289 = vsub.f32 %v343, %v1288
        %v1290 = vand.u32 %v1289, 4294901760
        %1291 = vmatmul.mubr.f32.gmra.mrb[0].mxu0 %v1290
        %v1292 = vpop.f32.mrb[0].mxu0
        %v1293 = vadd.f32 %v1095, %v1292
        %v1294 = vpop.f32.mrb[0].mxu0
        %1295 = vmatprep.mubr.f32.mxu0 0.0
        %v1296 = vand.u32 %v345, 4294901760
        %v1297 = vsub.f32 %v345, %v1296
        %v1298 = vand.u32 %v1297, 4294901760
        %1299 = vmatmul.mubr.f32.gmra.mrb[0].mxu0 %v1298
        %v1300 = vpop.f32.mrb[0].mxu0
        %v1301 = vadd.f32 %v1102, %v1300
        %v1302 = vpop.f32.mrb[0].mxu0
        %1303 = vmatprep.mubr.f32.mxu0 0.0
        %v1304 = vand.u32 %v347, 4294901760
        %v1305 = vsub.f32 %v347, %v1304
        %v1306 = vand.u32 %v1305, 4294901760
        %1307 = vmatmul.mubr.f32.gmra.mrb[0].mxu0 %v1306
        %v1308 = vpop.f32.mrb[0].mxu0
        %v1309 = vadd.f32 %v1109, %v1308
        %v1310 = vpop.f32.mrb[0].mxu0
        %1311 = vmatprep.mubr.f32.mxu0 0.0
        %v1312 = vand.u32 %v349, 4294901760
        %v1313 = vsub.f32 %v349, %v1312
        %v1314 = vand.u32 %v1313, 4294901760
        %1315 = vmatmul.mubr.f32.gmra.mrb[0].mxu0 %v1314
        %v1316 = vpop.f32.mrb[0].mxu0
        %v1317 = vadd.f32 %v1116, %v1316
        %v1318 = vpop.f32.mrb[0].mxu0
        %1319 = vmatprep.mubr.f32.mxu0 0.0
        %v1320 = vand.u32 %v351, 4294901760
        %v1321 = vsub.f32 %v351, %v1320
        %v1322 = vand.u32 %v1321, 4294901760
        %1323 = vmatmul.mubr.f32.gmra.mrb[0].mxu0 %v1322
        %v1324 = vpop.f32.mrb[0].mxu0
        %v1325 = vadd.f32 %v1123, %v1324
        %v1326 = vpop.f32.mrb[0].mxu0
        %1327 = vmatprep.mubr.f32.mxu0 0.0
        %v1328 = vand.u32 %v353, 4294901760
        %v1329 = vsub.f32 %v353, %v1328
        %v1330 = vand.u32 %v1329, 4294901760
        %1331 = vmatmul.mubr.f32.gmra.mrb[0].mxu0 %v1330
        %v1332 = vpop.f32.mrb[0].mxu0
        %v1333 = vadd.f32 %v1130, %v1332
        %v1334 = vpop.f32.mrb[0].mxu0
        %1335 = vmatprep.mubr.f32.mxu0 0.0
        %v1336 = vand.u32 %v355, 4294901760
        %v1337 = vsub.f32 %v355, %v1336
        %v1338 = vand.u32 %v1337, 4294901760
        %1339 = vmatmul.mubr.f32.gmra.mrb[0].mxu0 %v1338
        %v1340 = vpop.f32.mrb[0].mxu0
        %v1341 = vadd.f32 %v1137, %v1340
        %v1342 = vpop.f32.mrb[0].mxu0
        %1343 = vmatprep.mubr.f32.mxu0 0.0
        %v1344 = vand.u32 %v357, 4294901760
        %v1345 = vsub.f32 %v357, %v1344
        %v1346 = vand.u32 %v1345, 4294901760
        %1347 = vmatmul.mubr.f32.gmra.mrb[0].mxu0 %v1346
        %v1348 = vpop.f32.mrb[0].mxu0
        %v1349 = vadd.f32 %v1144, %v1348
        %v1350 = vpop.f32.mrb[0].mxu0
        %1351 = vmatprep.mubr.f32.mxu0 0.0
        %v1352 = vand.u32 %v359, 4294901760
        %v1353 = vsub.f32 %v359, %v1352
        %v1354 = vand.u32 %v1353, 4294901760
        %1355 = vmatmul.mubr.f32.gmra.mrb[0].mxu0 %v1354
        %v1356 = vpop.f32.mrb[0].mxu0
        %v1357 = vadd.f32 %v1151, %v1356
        %v1358 = vpop.f32.mrb[0].mxu0
        %1359 = vmatprep.mubr.f32.mxu0 0.0
        %v1360 = vand.u32 %v361, 4294901760
        %v1361 = vsub.f32 %v361, %v1360
        %v1362 = vand.u32 %v1361, 4294901760
        %1363 = vmatmul.mubr.f32.gmra.mrb[0].mxu0 %v1362
        %v1364 = vpop.f32.mrb[0].mxu0
        %v1365 = vadd.f32 %v1158, %v1364
        %v1366 = vpop.f32.mrb[0].mxu0
        %1367 = vmatprep.mubr.f32.mxu0 0.0
        %v1368 = vand.u32 %v363, 4294901760
        %v1369 = vsub.f32 %v363, %v1368
        %v1370 = vand.u32 %v1369, 4294901760
        %1371 = vmatmul.mubr.f32.gmra.mrb[0].mxu0 %v1370
        %v1372 = vpop.f32.mrb[0].mxu0
        %v1373 = vadd.f32 %v1165, %v1372
        %v1374 = vpop.f32.mrb[0].mxu0
        %1375 = vmatprep.mubr.f32.mxu0 0.0
        %v1376 = vand.u32 %v365, 4294901760
        %v1377 = vsub.f32 %v365, %v1376
        %v1378 = vand.u32 %v1377, 4294901760
        %1379 = vmatmul.mubr.f32.gmra.mrb[0].mxu0 %v1378
        %v1380 = vpop.f32.mrb[0].mxu0
        %v1381 = vadd.f32 %v1172, %v1380
        %v1382 = vpop.f32.mrb[0].mxu0
        %1383 = vdwg.mxu0
        %1384 = vmatprep.subr.mxu0 0.0
        %v1385 = vand.u32 %v468, 4294901760
        %v1386 = vsub.f32 %v468, %v1385
        %v1387 = vand.u32 %v1386, 4294901760
        %1388 = vmatpush1.msra.mxu0 %v1387
        %1389 = vmatprep.subr.mxu0 0.0
        %v1390 = vand.u32 %v469, 4294901760
        %v1391 = vsub.f32 %v469, %v1390
        %v1392 = vand.u32 %v1391, 4294901760
        %1393 = vmatpush1.msra.mxu0 %v1392
        %1394 = vmatprep.subr.mxu0 0.0
        %v1395 = vand.u32 %v470, 4294901760
        %v1396 = vsub.f32 %v470, %v1395
        %v1397 = vand.u32 %v1396, 4294901760
        %1398 = vmatpush1.msra.mxu0 %v1397
        %1399 = vmatprep.subr.mxu0 0.0
        %v1400 = vand.u32 %v471, 4294901760
        %v1401 = vsub.f32 %v471, %v1400
        %v1402 = vand.u32 %v1401, 4294901760
        %1403 = vmatpush1.msra.mxu0 %v1402
        %1404 = vmatprep.subr.mxu0 0.0
        %v1405 = vand.u32 %v472, 4294901760
        %v1406 = vsub.f32 %v472, %v1405
        %v1407 = vand.u32 %v1406, 4294901760
        %1408 = vmatpush1.msra.mxu0 %v1407
        %1409 = vmatprep.subr.mxu0 0.0
        %v1410 = vand.u32 %v473, 4294901760
        %v1411 = vsub.f32 %v473, %v1410
        %v1412 = vand.u32 %v1411, 4294901760
        %1413 = vmatpush1.msra.mxu0 %v1412
        %1414 = vmatprep.subr.mxu0 0.0
        %v1415 = vand.u32 %v474, 4294901760
        %v1416 = vsub.f32 %v474, %v1415
        %v1417 = vand.u32 %v1416, 4294901760
        %1418 = vmatpush1.msra.mxu0 %v1417
        %1419 = vmatprep.subr.mxu0 0.0
        %v1420 = vand.u32 %v475, 4294901760
        %v1421 = vsub.f32 %v475, %v1420
        %v1422 = vand.u32 %v1421, 4294901760
        %1423 = vmatpush1.msra.mxu0 %v1422
        %1424 = vmatprep.subr.mxu0 0.0
        %v1425 = vand.u32 %v476, 4294901760
        %v1426 = vsub.f32 %v476, %v1425
        %v1427 = vand.u32 %v1426, 4294901760
        %1428 = vmatpush1.msra.mxu0 %v1427
        %1429 = vmatprep.subr.mxu0 0.0
        %v1430 = vand.u32 %v477, 4294901760
        %v1431 = vsub.f32 %v477, %v1430
        %v1432 = vand.u32 %v1431, 4294901760
        %1433 = vmatpush1.msra.mxu0 %v1432
        %1434 = vmatprep.subr.mxu0 0.0
        %v1435 = vand.u32 %v478, 4294901760
        %v1436 = vsub.f32 %v478, %v1435
        %v1437 = vand.u32 %v1436, 4294901760
        %1438 = vmatpush1.msra.mxu0 %v1437
        %1439 = vmatprep.subr.mxu0 0.0
        %v1440 = vand.u32 %v479, 4294901760
        %v1441 = vsub.f32 %v479, %v1440
        %v1442 = vand.u32 %v1441, 4294901760
        %1443 = vmatpush1.msra.mxu0 %v1442
        %1444 = vmatprep.subr.mxu0 0.0
        %v1445 = vand.u32 %v480, 4294901760
        %v1446 = vsub.f32 %v480, %v1445
        %v1447 = vand.u32 %v1446, 4294901760
        %1448 = vmatpush1.msra.mxu0 %v1447
        %1449 = vmatprep.subr.mxu0 0.0
        %v1450 = vand.u32 %v481, 4294901760
        %v1451 = vsub.f32 %v481, %v1450
        %v1452 = vand.u32 %v1451, 4294901760
        %1453 = vmatpush1.msra.mxu0 %v1452
        %1454 = vmatprep.subr.mxu0 0.0
        %v1455 = vand.u32 %v482, 4294901760
        %v1456 = vsub.f32 %v482, %v1455
        %v1457 = vand.u32 %v1456, 4294901760
        %1458 = vmatpush1.msra.mxu0 %v1457
        %1459 = vmatprep.subr.mxu0 0.0
        %v1460 = vand.u32 %v483, 4294901760
        %v1461 = vsub.f32 %v483, %v1460
        %v1462 = vand.u32 %v1461, 4294901760
        %1463 = vmatpush1.msra.mxu0 %v1462
        %1464 = vmatprep.subr.mxu0 0.0
        %1465 = vmatpush1.msra.mxu0 0.0
        %1466 = vmatprep.subr.mxu0 0.0
        %1467 = vmatpush1.msra.mxu0 0.0
        %1468 = vmatprep.subr.mxu0 0.0
        %1469 = vmatpush1.msra.mxu0 0.0
        %1470 = vmatprep.subr.mxu0 0.0
        %1471 = vmatpush1.msra.mxu0 0.0
        %1472 = vmatprep.subr.mxu0 0.0
        %1473 = vmatpush1.msra.mxu0 0.0
        %1474 = vmatprep.subr.mxu0 0.0
        %1475 = vmatpush1.msra.mxu0 0.0
        %1476 = vmatprep.subr.mxu0 0.0
        %1477 = vmatpush1.msra.mxu0 0.0
        %1478 = vmatprep.subr.mxu0 0.0
        %1479 = vmatpush1.msra.mxu0 0.0
        %1480 = vmatprep.subr.mxu0 0.0
        %1481 = vmatpush1.msra.mxu0 0.0
        %1482 = vmatprep.subr.mxu0 0.0
        %1483 = vmatpush1.msra.mxu0 0.0
        %1484 = vmatprep.subr.mxu0 0.0
        %1485 = vmatpush1.msra.mxu0 0.0
        %1486 = vmatprep.subr.mxu0 0.0
        %1487 = vmatpush1.msra.mxu0 0.0
        %1488 = vmatprep.subr.mxu0 0.0
        %1489 = vmatpush1.msra.mxu0 0.0
        %1490 = vmatprep.subr.mxu0 0.0
        %1491 = vmatpush1.msra.mxu0 0.0
        %1492 = vmatprep.subr.mxu0 0.0
        %1493 = vmatpush1.msra.mxu0 0.0
        %1494 = vmatprep.subr.mxu0 0.0
        %1495 = vmatpush1.msra.mxu0 0.0
        %1496 = vmatprep.mubr.f32.mxu0 0.0
        %v1497 = vand.u32 %v335, 4294901760
        %1498 = vmatmul.mubr.f32.gmra.mrb[0].mxu0 %v1497
        %v1499 = vpop.f32.mrb[0].mxu0
        %v1500 = vadd.f32 %v1261, %v1499
        %v1501 = vpop.f32.mrb[0].mxu0
        %1502 = vmatprep.mubr.f32.mxu0 0.0
        %v1503 = vand.u32 %v337, 4294901760
        %1504 = vmatmul.mubr.f32.gmra.mrb[0].mxu0 %v1503
        %v1505 = vpop.f32.mrb[0].mxu0
        %v1506 = vadd.f32 %v1269, %v1505
        %v1507 = vpop.f32.mrb[0].mxu0
        %1508 = vmatprep.mubr.f32.mxu0 0.0
        %v1509 = vand.u32 %v339, 4294901760
        %1510 = vmatmul.mubr.f32.gmra.mrb[0].mxu0 %v1509
        %v1511 = vpop.f32.mrb[0].mxu0
        %v1512 = vadd.f32 %v1277, %v1511
        %v1513 = vpop.f32.mrb[0].mxu0
        %1514 = vmatprep.mubr.f32.mxu0 0.0
        %v1515 = vand.u32 %v341, 4294901760
        %1516 = vmatmul.mubr.f32.gmra.mrb[0].mxu0 %v1515
        %v1517 = vpop.f32.mrb[0].mxu0
        %v1518 = vadd.f32 %v1285, %v1517
        %v1519 = vpop.f32.mrb[0].mxu0
        %1520 = vmatprep.mubr.f32.mxu0 0.0
        %v1521 = vand.u32 %v343, 4294901760
        %1522 = vmatmul.mubr.f32.gmra.mrb[0].mxu0 %v1521
        %v1523 = vpop.f32.mrb[0].mxu0
        %v1524 = vadd.f32 %v1293, %v1523
        %v1525 = vpop.f32.mrb[0].mxu0
        %1526 = vmatprep.mubr.f32.mxu0 0.0
        %v1527 = vand.u32 %v345, 4294901760
        %1528 = vmatmul.mubr.f32.gmra.mrb[0].mxu0 %v1527
        %v1529 = vpop.f32.mrb[0].mxu0
        %v1530 = vadd.f32 %v1301, %v1529
        %v1531 = vpop.f32.mrb[0].mxu0
        %1532 = vmatprep.mubr.f32.mxu0 0.0
        %v1533 = vand.u32 %v347, 4294901760
        %1534 = vmatmul.mubr.f32.gmra.mrb[0].mxu0 %v1533
        %v1535 = vpop.f32.mrb[0].mxu0
        %v1536 = vadd.f32 %v1309, %v1535
        %v1537 = vpop.f32.mrb[0].mxu0
        %1538 = vmatprep.mubr.f32.mxu0 0.0
        %v1539 = vand.u32 %v349, 4294901760
        %1540 = vmatmul.mubr.f32.gmra.mrb[0].mxu0 %v1539
        %v1541 = vpop.f32.mrb[0].mxu0
        %v1542 = vadd.f32 %v1317, %v1541
        %v1543 = vpop.f32.mrb[0].mxu0
        %1544 = vmatprep.mubr.f32.mxu0 0.0
        %v1545 = vand.u32 %v351, 4294901760
        %1546 = vmatmul.mubr.f32.gmra.mrb[0].mxu0 %v1545
        %v1547 = vpop.f32.mrb[0].mxu0
        %v1548 = vadd.f32 %v1325, %v1547
        %v1549 = vpop.f32.mrb[0].mxu0
        %1550 = vmatprep.mubr.f32.mxu0 0.0
        %v1551 = vand.u32 %v353, 4294901760
        %1552 = vmatmul.mubr.f32.gmra.mrb[0].mxu0 %v1551
        %v1553 = vpop.f32.mrb[0].mxu0
        %v1554 = vadd.f32 %v1333, %v1553
        %v1555 = vpop.f32.mrb[0].mxu0
        %1556 = vmatprep.mubr.f32.mxu0 0.0
        %v1557 = vand.u32 %v355, 4294901760
        %1558 = vmatmul.mubr.f32.gmra.mrb[0].mxu0 %v1557
        %v1559 = vpop.f32.mrb[0].mxu0
        %v1560 = vadd.f32 %v1341, %v1559
        %v1561 = vpop.f32.mrb[0].mxu0
        %1562 = vmatprep.mubr.f32.mxu0 0.0
        %v1563 = vand.u32 %v357, 4294901760
        %1564 = vmatmul.mubr.f32.gmra.mrb[0].mxu0 %v1563
        %v1565 = vpop.f32.mrb[0].mxu0
        %v1566 = vadd.f32 %v1349, %v1565
        %v1567 = vpop.f32.mrb[0].mxu0
        %1568 = vmatprep.mubr.f32.mxu0 0.0
        %v1569 = vand.u32 %v359, 4294901760
        %1570 = vmatmul.mubr.f32.gmra.mrb[0].mxu0 %v1569
        %v1571 = vpop.f32.mrb[0].mxu0
        %v1572 = vadd.f32 %v1357, %v1571
        %v1573 = vpop.f32.mrb[0].mxu0
        %1574 = vmatprep.mubr.f32.mxu0 0.0
        %v1575 = vand.u32 %v361, 4294901760
        %1576 = vmatmul.mubr.f32.gmra.mrb[0].mxu0 %v1575
        %v1577 = vpop.f32.mrb[0].mxu0
        %v1578 = vadd.f32 %v1365, %v1577
        %v1579 = vpop.f32.mrb[0].mxu0
        %1580 = vmatprep.mubr.f32.mxu0 0.0
        %v1581 = vand.u32 %v363, 4294901760
        %1582 = vmatmul.mubr.f32.gmra.mrb[0].mxu0 %v1581
        %v1583 = vpop.f32.mrb[0].mxu0
        %v1584 = vadd.f32 %v1373, %v1583
        %v1585 = vpop.f32.mrb[0].mxu0
        %1586 = vmatprep.mubr.f32.mxu0 0.0
        %v1587 = vand.u32 %v365, 4294901760
        %1588 = vmatmul.mubr.f32.gmra.mrb[0].mxu0 %v1587
        %v1589 = vpop.f32.mrb[0].mxu0
        %v1590 = vadd.f32 %v1381, %v1589
        %v1591 = vpop.f32.mrb[0].mxu0
        %1592 = vdwg.mxu0
        %1593 = vmatprep.subr.mxu0 0.0
        %v1594 = vand.u32 %v468, 4294901760
        %1595 = vmatpush1.msra.mxu0 %v1594
        %1596 = vmatprep.subr.mxu0 0.0
        %v1597 = vand.u32 %v469, 4294901760
        %1598 = vmatpush1.msra.mxu0 %v1597
        %1599 = vmatprep.subr.mxu0 0.0
        %v1600 = vand.u32 %v470, 4294901760
        %1601 = vmatpush1.msra.mxu0 %v1600
        %1602 = vmatprep.subr.mxu0 0.0
        %v1603 = vand.u32 %v471, 4294901760
        %1604 = vmatpush1.msra.mxu0 %v1603
        %1605 = vmatprep.subr.mxu0 0.0
        %v1606 = vand.u32 %v472, 4294901760
        %1607 = vmatpush1.msra.mxu0 %v1606
        %1608 = vmatprep.subr.mxu0 0.0
        %v1609 = vand.u32 %v473, 4294901760
        %1610 = vmatpush1.msra.mxu0 %v1609
        %1611 = vmatprep.subr.mxu0 0.0
        %v1612 = vand.u32 %v474, 4294901760
        %1613 = vmatpush1.msra.mxu0 %v1612
        %1614 = vmatprep.subr.mxu0 0.0
        %v1615 = vand.u32 %v475, 4294901760
        %1616 = vmatpush1.msra.mxu0 %v1615
        %1617 = vmatprep.subr.mxu0 0.0
        %v1618 = vand.u32 %v476, 4294901760
        %1619 = vmatpush1.msra.mxu0 %v1618
        %1620 = vmatprep.subr.mxu0 0.0
        %v1621 = vand.u32 %v477, 4294901760
        %1622 = vmatpush1.msra.mxu0 %v1621
        %1623 = vmatprep.subr.mxu0 0.0
        %v1624 = vand.u32 %v478, 4294901760
        %1625 = vmatpush1.msra.mxu0 %v1624
        %1626 = vmatprep.subr.mxu0 0.0
        %v1627 = vand.u32 %v479, 4294901760
        %1628 = vmatpush1.msra.mxu0 %v1627
        %1629 = vmatprep.subr.mxu0 0.0
        %v1630 = vand.u32 %v480, 4294901760
        %1631 = vmatpush1.msra.mxu0 %v1630
        %1632 = vmatprep.subr.mxu0 0.0
        %v1633 = vand.u32 %v481, 4294901760
        %1634 = vmatpush1.msra.mxu0 %v1633
        %1635 = vmatprep.subr.mxu0 0.0
        %v1636 = vand.u32 %v482, 4294901760
        %1637 = vmatpush1.msra.mxu0 %v1636
        %1638 = vmatprep.subr.mxu0 0.0
        %v1639 = vand.u32 %v483, 4294901760
        %1640 = vmatpush1.msra.mxu0 %v1639
        %1641 = vmatprep.subr.mxu0 0.0
        %1642 = vmatpush1.msra.mxu0 0.0
        %1643 = vmatprep.subr.mxu0 0.0
        %1644 = vmatpush1.msra.mxu0 0.0
        %1645 = vmatprep.subr.mxu0 0.0
        %1646 = vmatpush1.msra.mxu0 0.0
        %1647 = vmatprep.subr.mxu0 0.0
        %1648 = vmatpush1.msra.mxu0 0.0
        %1649 = vmatprep.subr.mxu0 0.0
        %1650 = vmatpush1.msra.mxu0 0.0
        %1651 = vmatprep.subr.mxu0 0.0
        %1652 = vmatpush1.msra.mxu0 0.0
        %1653 = vmatprep.subr.mxu0 0.0
        %1654 = vmatpush1.msra.mxu0 0.0
        %1655 = vmatprep.subr.mxu0 0.0
        %1656 = vmatpush1.msra.mxu0 0.0
        %1657 = vmatprep.subr.mxu0 0.0
        %1658 = vmatpush1.msra.mxu0 0.0
        %1659 = vmatprep.subr.mxu0 0.0
        %1660 = vmatpush1.msra.mxu0 0.0
        %1661 = vmatprep.subr.mxu0 0.0
        %1662 = vmatpush1.msra.mxu0 0.0
        %1663 = vmatprep.subr.mxu0 0.0
        %1664 = vmatpush1.msra.mxu0 0.0
        %1665 = vmatprep.subr.mxu0 0.0
        %1666 = vmatpush1.msra.mxu0 0.0
        %1667 = vmatprep.subr.mxu0 0.0
        %1668 = vmatpush1.msra.mxu0 0.0
        %1669 = vmatprep.subr.mxu0 0.0
        %1670 = vmatpush1.msra.mxu0 0.0
        %1671 = vmatprep.subr.mxu0 0.0
        %1672 = vmatpush1.msra.mxu0 0.0
        %1673 = vmatprep.mubr.f32.mxu0 0.0
        %v1674 = vand.u32 %v335, 4294901760
        %1675 = vmatmul.mubr.f32.gmra.mrb[0].mxu0 %v1674
        %v1676 = vpop.f32.mrb[0].mxu0
        %v1677 = vadd.f32 %v1500, %v1676
        %v1678 = vpop.f32.mrb[0].mxu0
        %1679 = vmatprep.mubr.f32.mxu0 0.0
        %v1680 = vand.u32 %v337, 4294901760
        %1681 = vmatmul.mubr.f32.gmra.mrb[0].mxu0 %v1680
        %v1682 = vpop.f32.mrb[0].mxu0
        %v1683 = vadd.f32 %v1506, %v1682
        %v1684 = vpop.f32.mrb[0].mxu0
        %1685 = vmatprep.mubr.f32.mxu0 0.0
        %v1686 = vand.u32 %v339, 4294901760
        %1687 = vmatmul.mubr.f32.gmra.mrb[0].mxu0 %v1686
        %v1688 = vpop.f32.mrb[0].mxu0
        %v1689 = vadd.f32 %v1512, %v1688
        %v1690 = vpop.f32.mrb[0].mxu0
        %1691 = vmatprep.mubr.f32.mxu0 0.0
        %v1692 = vand.u32 %v341, 4294901760
        %1693 = vmatmul.mubr.f32.gmra.mrb[0].mxu0 %v1692
        %v1694 = vpop.f32.mrb[0].mxu0
        %v1695 = vadd.f32 %v1518, %v1694
        %v1696 = vpop.f32.mrb[0].mxu0
        %1697 = vmatprep.mubr.f32.mxu0 0.0
        %v1698 = vand.u32 %v343, 4294901760
        %1699 = vmatmul.mubr.f32.gmra.mrb[0].mxu0 %v1698
        %v1700 = vpop.f32.mrb[0].mxu0
        %v1701 = vadd.f32 %v1524, %v1700
        %v1702 = vpop.f32.mrb[0].mxu0
        %1703 = vmatprep.mubr.f32.mxu0 0.0
        %v1704 = vand.u32 %v345, 4294901760
        %1705 = vmatmul.mubr.f32.gmra.mrb[0].mxu0 %v1704
        %v1706 = vpop.f32.mrb[0].mxu0
        %v1707 = vadd.f32 %v1530, %v1706
        %v1708 = vpop.f32.mrb[0].mxu0
        %1709 = vmatprep.mubr.f32.mxu0 0.0
        %v1710 = vand.u32 %v347, 4294901760
        %1711 = vmatmul.mubr.f32.gmra.mrb[0].mxu0 %v1710
        %v1712 = vpop.f32.mrb[0].mxu0
        %v1713 = vadd.f32 %v1536, %v1712
        %v1714 = vpop.f32.mrb[0].mxu0
        %1715 = vmatprep.mubr.f32.mxu0 0.0
        %v1716 = vand.u32 %v349, 4294901760
        %1717 = vmatmul.mubr.f32.gmra.mrb[0].mxu0 %v1716
        %v1718 = vpop.f32.mrb[0].mxu0
        %v1719 = vadd.f32 %v1542, %v1718
        %v1720 = vpop.f32.mrb[0].mxu0
        %1721 = vmatprep.mubr.f32.mxu0 0.0
        %v1722 = vand.u32 %v351, 4294901760
        %1723 = vmatmul.mubr.f32.gmra.mrb[0].mxu0 %v1722
        %v1724 = vpop.f32.mrb[0].mxu0
        %v1725 = vadd.f32 %v1548, %v1724
        %v1726 = vpop.f32.mrb[0].mxu0
        %1727 = vmatprep.mubr.f32.mxu0 0.0
        %v1728 = vand.u32 %v353, 4294901760
        %1729 = vmatmul.mubr.f32.gmra.mrb[0].mxu0 %v1728
        %v1730 = vpop.f32.mrb[0].mxu0
        %v1731 = vadd.f32 %v1554, %v1730
        %v1732 = vpop.f32.mrb[0].mxu0
        %1733 = vmatprep.mubr.f32.mxu0 0.0
        %v1734 = vand.u32 %v355, 4294901760
        %1735 = vmatmul.mubr.f32.gmra.mrb[0].mxu0 %v1734
        %v1736 = vpop.f32.mrb[0].mxu0
        %v1737 = vadd.f32 %v1560, %v1736
        %v1738 = vpop.f32.mrb[0].mxu0
        %1739 = vmatprep.mubr.f32.mxu0 0.0
        %v1740 = vand.u32 %v357, 4294901760
        %1741 = vmatmul.mubr.f32.gmra.mrb[0].mxu0 %v1740
        %v1742 = vpop.f32.mrb[0].mxu0
        %v1743 = vadd.f32 %v1566, %v1742
        %v1744 = vpop.f32.mrb[0].mxu0
        %1745 = vmatprep.mubr.f32.mxu0 0.0
        %v1746 = vand.u32 %v359, 4294901760
        %1747 = vmatmul.mubr.f32.gmra.mrb[0].mxu0 %v1746
        %v1748 = vpop.f32.mrb[0].mxu0
        %v1749 = vadd.f32 %v1572, %v1748
        %v1750 = vpop.f32.mrb[0].mxu0
        %1751 = vmatprep.mubr.f32.mxu0 0.0
        %v1752 = vand.u32 %v361, 4294901760
        %1753 = vmatmul.mubr.f32.gmra.mrb[0].mxu0 %v1752
        %v1754 = vpop.f32.mrb[0].mxu0
        %v1755 = vadd.f32 %v1578, %v1754
        %v1756 = vpop.f32.mrb[0].mxu0
        %1757 = vmatprep.mubr.f32.mxu0 0.0
        %v1758 = vand.u32 %v363, 4294901760
        %1759 = vmatmul.mubr.f32.gmra.mrb[0].mxu0 %v1758
        %v1760 = vpop.f32.mrb[0].mxu0
        %v1761 = vadd.f32 %v1584, %v1760
        %v1762 = vpop.f32.mrb[0].mxu0
        %1763 = vmatprep.mubr.f32.mxu0 0.0
        %v1764 = vand.u32 %v365, 4294901760
        %1765 = vmatmul.mubr.f32.gmra.mrb[0].mxu0 %v1764
        %v1766 = vpop.f32.mrb[0].mxu0
        %v1767 = vadd.f32 %v1590, %v1766
        %v1768 = vpop.f32.mrb[0].mxu0
        %1769 = vdwg.mxu0
        %v1770 = vmul.f32 %v1677, -1.0
        %v1771 = vmul.f32 %v1683, -1.0
        %v1772 = vmul.f32 %v1689, -1.0
        %v1773 = vmul.f32 %v1695, -1.0
        %v1774 = vmul.f32 %v1701, -1.0
        %v1775 = vmul.f32 %v1707, -1.0
        %v1776 = vmul.f32 %v1713, -1.0
        %v1777 = vmul.f32 %v1719, -1.0
        %v1778 = vmul.f32 %v1725, -1.0
        %v1779 = vmul.f32 %v1731, -1.0
        %v1780 = vmul.f32 %v1737, -1.0
        %v1781 = vmul.f32 %v1743, -1.0
        %v1782 = vmul.f32 %v1749, -1.0
        %v1783 = vmul.f32 %v1755, -1.0
        %v1784 = vmul.f32 %v1761, -1.0
        %v1785 = vmul.f32 %v1767, -1.0
        %v1786 = vmul.f32 %v1770, %v398
        %v1787 = vmul.f32 %v1771, %v399
        %v1788 = vmul.f32 %v1772, %v400
        %v1789 = vmul.f32 %v1773, %v401
        %v1790 = vmul.f32 %v1774, %v402
        %v1791 = vmul.f32 %v1775, %v403
        %v1792 = vmul.f32 %v1776, %v404
        %v1793 = vmul.f32 %v1777, %v405
        %v1794 = vmul.f32 %v1778, %v406
        %v1795 = vmul.f32 %v1779, %v407
        %v1796 = vmul.f32 %v1780, %v408
        %v1797 = vmul.f32 %v1781, %v409
        %v1798 = vmul.f32 %v1782, %v410
        %v1799 = vmul.f32 %v1783, %v411
        %v1800 = vmul.f32 %v1784, %v412
        %v1801 = vmul.f32 %v1785, %v413
        %v1802 = vld [vmem:[%s266] sm:$0xff]
        %v1803 = vld [vmem:[%s266 + $0x8] sm:$0xff]
        %v1804 = vld [vmem:[%s266 + $0x10] sm:$0xff]
        %v1805 = vld [vmem:[%s266 + $0x18] sm:$0xff]
        %v1806 = vld [vmem:[%s266 + $0x20] sm:$0xff]
        %v1807 = vld [vmem:[%s266 + $0x28] sm:$0xff]
        %v1808 = vld [vmem:[%s266 + $0x30] sm:$0xff]
        %v1809 = vld [vmem:[%s266 + $0x38] sm:$0xff]
        %v1810 = vld [vmem:[%s266 + $0x40] sm:$0xff]
        %v1811 = vld [vmem:[%s266 + $0x48] sm:$0xff]
        %v1812 = vld [vmem:[%s266 + $0x50] sm:$0xff]
        %v1813 = vld [vmem:[%s266 + $0x58] sm:$0xff]
        %v1814 = vld [vmem:[%s266 + $0x60] sm:$0xff]
        %v1815 = vld [vmem:[%s266 + $0x68] sm:$0xff]
        %v1816 = vld [vmem:[%s266 + $0x70] sm:$0xff]
        %v1817 = vld [vmem:[%s266 + $0x78] sm:$0xff]
        %v1818 = vmul.f32 %v1802, 0.5
        %v1819 = vmul.f32 %v1803, 0.5
        %v1820 = vmul.f32 %v1804, 0.5
        %v1821 = vmul.f32 %v1805, 0.5
        %v1822 = vmul.f32 %v1806, 0.5
        %v1823 = vmul.f32 %v1807, 0.5
        %v1824 = vmul.f32 %v1808, 0.5
        %v1825 = vmul.f32 %v1809, 0.5
        %v1826 = vmul.f32 %v1810, 0.5
        %v1827 = vmul.f32 %v1811, 0.5
        %v1828 = vmul.f32 %v1812, 0.5
        %v1829 = vmul.f32 %v1813, 0.5
        %v1830 = vmul.f32 %v1814, 0.5
        %v1831 = vmul.f32 %v1815, 0.5
        %v1832 = vmul.f32 %v1816, 0.5
        %v1833 = vmul.f32 %v1817, 0.5
        %1850 = vrot.lane.b32.xlu0 %v1818, 126
        %v1851 = vpop.permute.xlu0 %1850
        %1852 = vrot.lane.b32.xlu0 %v1819, 126
        %v1853 = vpop.permute.xlu0 %1852
        %1854 = vrot.lane.b32.xlu0 %v1820, 126
        %v1855 = vpop.permute.xlu0 %1854
        %1856 = vrot.lane.b32.xlu0 %v1821, 126
        %v1857 = vpop.permute.xlu0 %1856
        %1858 = vrot.lane.b32.xlu0 %v1822, 126
        %v1859 = vpop.permute.xlu0 %1858
        %1860 = vrot.lane.b32.xlu0 %v1823, 126
        %v1861 = vpop.permute.xlu0 %1860
        %1862 = vrot.lane.b32.xlu0 %v1824, 126
        %v1863 = vpop.permute.xlu0 %1862
        %1864 = vrot.lane.b32.xlu0 %v1825, 126
        %v1865 = vpop.permute.xlu0 %1864
        %1866 = vrot.lane.b32.xlu0 %v1826, 126
        %v1867 = vpop.permute.xlu0 %1866
        %1868 = vrot.lane.b32.xlu0 %v1827, 126
        %v1869 = vpop.permute.xlu0 %1868
        %1870 = vrot.lane.b32.xlu0 %v1828, 126
        %v1871 = vpop.permute.xlu0 %1870
        %1872 = vrot.lane.b32.xlu0 %v1829, 126
        %v1873 = vpop.permute.xlu0 %1872
        %1874 = vrot.lane.b32.xlu0 %v1830, 126
        %v1875 = vpop.permute.xlu0 %1874
        %1876 = vrot.lane.b32.xlu0 %v1831, 126
        %v1877 = vpop.permute.xlu0 %1876
        %1878 = vrot.lane.b32.xlu0 %v1832, 126
        %v1879 = vpop.permute.xlu0 %1878
        %1880 = vrot.lane.b32.xlu0 %v1833, 126
        %v1881 = vpop.permute.xlu0 %1880
        %v1898 = vsub.f32 %v1802, %v1851
        %v1899 = vsub.f32 %v1803, %v1853
        %v1900 = vsub.f32 %v1804, %v1855
        %v1901 = vsub.f32 %v1805, %v1857
        %v1902 = vsub.f32 %v1806, %v1859
        %v1903 = vsub.f32 %v1807, %v1861
        %v1904 = vsub.f32 %v1808, %v1863
        %v1905 = vsub.f32 %v1809, %v1865
        %v1906 = vsub.f32 %v1810, %v1867
        %v1907 = vsub.f32 %v1811, %v1869
        %v1908 = vsub.f32 %v1812, %v1871
        %v1909 = vsub.f32 %v1813, %v1873
        %v1910 = vsub.f32 %v1814, %v1875
        %v1911 = vsub.f32 %v1815, %v1877
        %v1912 = vsub.f32 %v1816, %v1879
        %v1913 = vsub.f32 %v1817, %v1881
        %v1914 = vadd.f32 %v1802, %v1851
        %v1915 = vadd.f32 %v1803, %v1853
        %v1916 = vadd.f32 %v1804, %v1855
        %v1917 = vadd.f32 %v1805, %v1857
        %v1918 = vadd.f32 %v1806, %v1859
        %v1919 = vadd.f32 %v1807, %v1861
        %v1920 = vadd.f32 %v1808, %v1863
        %v1921 = vadd.f32 %v1809, %v1865
        %v1922 = vadd.f32 %v1810, %v1867
        %v1923 = vadd.f32 %v1811, %v1869
        %v1924 = vadd.f32 %v1812, %v1871
        %v1925 = vadd.f32 %v1813, %v1873
        %v1926 = vadd.f32 %v1814, %v1875
        %v1927 = vadd.f32 %v1815, %v1877
        %v1928 = vadd.f32 %v1816, %v1879
        %v1929 = vadd.f32 %v1817, %v1881
        %v1930 = vld [vmem:[%s219] sm:$0xff]
        %v1931 = vld [vmem:[%s219 + $0x8] sm:$0xff]
        %1933 = vset.pattern.permute.xlu0 0
        %1934 = vperm.xlu0 %1933, %v1802
        %v1935 = vpop.permute.xlu0 %1934
        %1938 = vset.pattern.permute.xlu0 0
        %1939 = vperm.xlu0 %1938, %v1803
        %v1940 = vpop.permute.xlu0 %1939
        %1943 = vset.pattern.permute.xlu0 0
        %1944 = vperm.xlu0 %1943, %v1804
        %v1945 = vpop.permute.xlu0 %1944
        %1948 = vset.pattern.permute.xlu0 0
        %1949 = vperm.xlu0 %1948, %v1805
        %v1950 = vpop.permute.xlu0 %1949
        %1953 = vset.pattern.permute.xlu0 0
        %1954 = vperm.xlu0 %1953, %v1806
        %v1955 = vpop.permute.xlu0 %1954
        %1958 = vset.pattern.permute.xlu0 0
        %1959 = vperm.xlu0 %1958, %v1807
        %v1960 = vpop.permute.xlu0 %1959
        %1963 = vset.pattern.permute.xlu0 0
        %1964 = vperm.xlu0 %1963, %v1808
        %v1965 = vpop.permute.xlu0 %1964
        %1968 = vset.pattern.permute.xlu0 0
        %1969 = vperm.xlu0 %1968, %v1809
        %v1970 = vpop.permute.xlu0 %1969
        %1973 = vset.pattern.permute.xlu0 0
        %1974 = vperm.xlu0 %1973, %v1810
        %v1975 = vpop.permute.xlu0 %1974
        %1978 = vset.pattern.permute.xlu0 0
        %1979 = vperm.xlu0 %1978, %v1811
        %v1980 = vpop.permute.xlu0 %1979
        %1983 = vset.pattern.permute.xlu0 0
        %1984 = vperm.xlu0 %1983, %v1812
        %v1985 = vpop.permute.xlu0 %1984
        %1988 = vset.pattern.permute.xlu0 0
        %1989 = vperm.xlu0 %1988, %v1813
        %v1990 = vpop.permute.xlu0 %1989
        %1993 = vset.pattern.permute.xlu0 0
        %1994 = vperm.xlu0 %1993, %v1814
        %v1995 = vpop.permute.xlu0 %1994
        %1998 = vset.pattern.permute.xlu0 0
        %1999 = vperm.xlu0 %1998, %v1815
        %v2000 = vpop.permute.xlu0 %1999
        %2003 = vset.pattern.permute.xlu0 0
        %2004 = vperm.xlu0 %2003, %v1816
        %v2005 = vpop.permute.xlu0 %2004
        %2008 = vset.pattern.permute.xlu0 0
        %2009 = vperm.xlu0 %2008, %v1817
        %v2010 = vpop.permute.xlu0 %2009
        %v2012 = vlaneseq
        %v2013 = vshrl.u32 %v2012, 7
        %v2014 = vsub.s32 0, %v2013
        %v2015 = vrot.slane %v1930, %v2014
        %v2016 = vsub.f32 %v1935, %v2015
        %v2017 = vsub.f32 %v1940, %v2015
        %v2018 = vsub.f32 %v1945, %v2015
        %v2019 = vsub.f32 %v1950, %v2015
        %v2020 = vsub.f32 %v1955, %v2015
        %v2021 = vsub.f32 %v1960, %v2015
        %v2022 = vsub.f32 %v1965, %v2015
        %v2023 = vsub.f32 %v1970, %v2015
        %v2024 = vsub.f32 %v1975, %v2015
        %v2025 = vsub.f32 %v1980, %v2015
        %v2026 = vsub.f32 %v1985, %v2015
        %v2027 = vsub.f32 %v1990, %v2015
        %v2028 = vsub.f32 %v1995, %v2015
        %v2029 = vsub.f32 %v2000, %v2015
        %v2030 = vsub.f32 %v2005, %v2015
        %v2031 = vsub.f32 %v2010, %v2015
        %v2032 = vand.u32 2147483647, %v2016
        %v2033 = vand.u32 2147483647, %v2017
        %v2034 = vand.u32 2147483647, %v2018
        %v2035 = vand.u32 2147483647, %v2019
        %v2036 = vand.u32 2147483647, %v2020
        %v2037 = vand.u32 2147483647, %v2021
        %v2038 = vand.u32 2147483647, %v2022
        %v2039 = vand.u32 2147483647, %v2023
        %v2040 = vand.u32 2147483647, %v2024
        %v2041 = vand.u32 2147483647, %v2025
        %v2042 = vand.u32 2147483647, %v2026
        %v2043 = vand.u32 2147483647, %v2027
        %v2044 = vand.u32 2147483647, %v2028
        %v2045 = vand.u32 2147483647, %v2029
        %v2046 = vand.u32 2147483647, %v2030
        %v2047 = vand.u32 2147483647, %v2031
        %2048 = vset.pattern.permute.xlu0 1
        %2049 = vperm.xlu0 %2048, %v1802
        %v2050 = vpop.permute.xlu0 %2049
        %2052 = vset.pattern.permute.xlu0 1
        %2053 = vperm.xlu0 %2052, %v1803
        %v2054 = vpop.permute.xlu0 %2053
        %2056 = vset.pattern.permute.xlu0 1
        %2057 = vperm.xlu0 %2056, %v1804
        %v2058 = vpop.permute.xlu0 %2057
        %2060 = vset.pattern.permute.xlu0 1
        %2061 = vperm.xlu0 %2060, %v1805
        %v2062 = vpop.permute.xlu0 %2061
        %2064 = vset.pattern.permute.xlu0 1
        %2065 = vperm.xlu0 %2064, %v1806
        %v2066 = vpop.permute.xlu0 %2065
        %2068 = vset.pattern.permute.xlu0 1
        %2069 = vperm.xlu0 %2068, %v1807
        %v2070 = vpop.permute.xlu0 %2069
        %2072 = vset.pattern.permute.xlu0 1
        %2073 = vperm.xlu0 %2072, %v1808
        %v2074 = vpop.permute.xlu0 %2073
        %2076 = vset.pattern.permute.xlu0 1
        %2077 = vperm.xlu0 %2076, %v1809
        %v2078 = vpop.permute.xlu0 %2077
        %2080 = vset.pattern.permute.xlu0 1
        %2081 = vperm.xlu0 %2080, %v1810
        %v2082 = vpop.permute.xlu0 %2081
        %2084 = vset.pattern.permute.xlu0 1
        %2085 = vperm.xlu0 %2084, %v1811
        %v2086 = vpop.permute.xlu0 %2085
        %2088 = vset.pattern.permute.xlu0 1
        %2089 = vperm.xlu0 %2088, %v1812
        %v2090 = vpop.permute.xlu0 %2089
        %2092 = vset.pattern.permute.xlu0 1
        %2093 = vperm.xlu0 %2092, %v1813
        %v2094 = vpop.permute.xlu0 %2093
        %2096 = vset.pattern.permute.xlu0 1
        %2097 = vperm.xlu0 %2096, %v1814
        %v2098 = vpop.permute.xlu0 %2097
        %2100 = vset.pattern.permute.xlu0 1
        %2101 = vperm.xlu0 %2100, %v1815
        %v2102 = vpop.permute.xlu0 %2101
        %2104 = vset.pattern.permute.xlu0 1
        %2105 = vperm.xlu0 %2104, %v1816
        %v2106 = vpop.permute.xlu0 %2105
        %2108 = vset.pattern.permute.xlu0 1
        %2109 = vperm.xlu0 %2108, %v1817
        %v2110 = vpop.permute.xlu0 %2109
        %v2112 = vlaneseq
        %v2113 = vshrl.u32 %v2112, 7
        %v2114 = vsub.s32 1, %v2113
        %v2115 = vrot.slane %v1930, %v2114
        %v2116 = vsub.f32 %v2050, %v2115
        %v2117 = vsub.f32 %v2054, %v2115
        %v2118 = vsub.f32 %v2058, %v2115
        %v2119 = vsub.f32 %v2062, %v2115
        %v2120 = vsub.f32 %v2066, %v2115
        %v2121 = vsub.f32 %v2070, %v2115
        %v2122 = vsub.f32 %v2074, %v2115
        %v2123 = vsub.f32 %v2078, %v2115
        %v2124 = vsub.f32 %v2082, %v2115
        %v2125 = vsub.f32 %v2086, %v2115
        %v2126 = vsub.f32 %v2090, %v2115
        %v2127 = vsub.f32 %v2094, %v2115
        %v2128 = vsub.f32 %v2098, %v2115
        %v2129 = vsub.f32 %v2102, %v2115
        %v2130 = vsub.f32 %v2106, %v2115
        %v2131 = vsub.f32 %v2110, %v2115
        %v2132 = vand.u32 2147483647, %v2116
        %v2133 = vand.u32 2147483647, %v2117
        %v2134 = vand.u32 2147483647, %v2118
        %v2135 = vand.u32 2147483647, %v2119
        %v2136 = vand.u32 2147483647, %v2120
        %v2137 = vand.u32 2147483647, %v2121
        %v2138 = vand.u32 2147483647, %v2122
        %v2139 = vand.u32 2147483647, %v2123
        %v2140 = vand.u32 2147483647, %v2124
        %v2141 = vand.u32 2147483647, %v2125
        %v2142 = vand.u32 2147483647, %v2126
        %v2143 = vand.u32 2147483647, %v2127
        %v2144 = vand.u32 2147483647, %v2128
        %v2145 = vand.u32 2147483647, %v2129
        %v2146 = vand.u32 2147483647, %v2130
        %v2147 = vand.u32 2147483647, %v2131
        %v2148 = vadd.f32 %v2032, %v2132
        %v2149 = vadd.f32 %v2033, %v2133
        %v2150 = vadd.f32 %v2034, %v2134
        %v2151 = vadd.f32 %v2035, %v2135
        %v2152 = vadd.f32 %v2036, %v2136
        %v2153 = vadd.f32 %v2037, %v2137
        %v2154 = vadd.f32 %v2038, %v2138
        %v2155 = vadd.f32 %v2039, %v2139
        %v2156 = vadd.f32 %v2040, %v2140
        %v2157 = vadd.f32 %v2041, %v2141
        %v2158 = vadd.f32 %v2042, %v2142
        %v2159 = vadd.f32 %v2043, %v2143
        %v2160 = vadd.f32 %v2044, %v2144
        %v2161 = vadd.f32 %v2045, %v2145
        %v2162 = vadd.f32 %v2046, %v2146
        %v2163 = vadd.f32 %v2047, %v2147
        %2164 = vset.pattern.permute.xlu0 2
        %2165 = vperm.xlu0 %2164, %v1802
        %v2166 = vpop.permute.xlu0 %2165
        %2168 = vset.pattern.permute.xlu0 2
        %2169 = vperm.xlu0 %2168, %v1803
        %v2170 = vpop.permute.xlu0 %2169
        %2172 = vset.pattern.permute.xlu0 2
        %2173 = vperm.xlu0 %2172, %v1804
        %v2174 = vpop.permute.xlu0 %2173
        %2176 = vset.pattern.permute.xlu0 2
        %2177 = vperm.xlu0 %2176, %v1805
        %v2178 = vpop.permute.xlu0 %2177
        %2180 = vset.pattern.permute.xlu0 2
        %2181 = vperm.xlu0 %2180, %v1806
        %v2182 = vpop.permute.xlu0 %2181
        %2184 = vset.pattern.permute.xlu0 2
        %2185 = vperm.xlu0 %2184, %v1807
        %v2186 = vpop.permute.xlu0 %2185
        %2188 = vset.pattern.permute.xlu0 2
        %2189 = vperm.xlu0 %2188, %v1808
        %v2190 = vpop.permute.xlu0 %2189
        %2192 = vset.pattern.permute.xlu0 2
        %2193 = vperm.xlu0 %2192, %v1809
        %v2194 = vpop.permute.xlu0 %2193
        %2196 = vset.pattern.permute.xlu0 2
        %2197 = vperm.xlu0 %2196, %v1810
        %v2198 = vpop.permute.xlu0 %2197
        %2200 = vset.pattern.permute.xlu0 2
        %2201 = vperm.xlu0 %2200, %v1811
        %v2202 = vpop.permute.xlu0 %2201
        %2204 = vset.pattern.permute.xlu0 2
        %2205 = vperm.xlu0 %2204, %v1812
        %v2206 = vpop.permute.xlu0 %2205
        %2208 = vset.pattern.permute.xlu0 2
        %2209 = vperm.xlu0 %2208, %v1813
        %v2210 = vpop.permute.xlu0 %2209
        %2212 = vset.pattern.permute.xlu0 2
        %2213 = vperm.xlu0 %2212, %v1814
        %v2214 = vpop.permute.xlu0 %2213
        %2216 = vset.pattern.permute.xlu0 2
        %2217 = vperm.xlu0 %2216, %v1815
        %v2218 = vpop.permute.xlu0 %2217
        %2220 = vset.pattern.permute.xlu0 2
        %2221 = vperm.xlu0 %2220, %v1816
        %v2222 = vpop.permute.xlu0 %2221
        %2224 = vset.pattern.permute.xlu0 2
        %2225 = vperm.xlu0 %2224, %v1817
        %v2226 = vpop.permute.xlu0 %2225
        %v2228 = vlaneseq
        %v2229 = vshrl.u32 %v2228, 7
        %v2230 = vsub.s32 2, %v2229
        %v2231 = vrot.slane %v1930, %v2230
        %v2232 = vsub.f32 %v2166, %v2231
        %v2233 = vsub.f32 %v2170, %v2231
        %v2234 = vsub.f32 %v2174, %v2231
        %v2235 = vsub.f32 %v2178, %v2231
        %v2236 = vsub.f32 %v2182, %v2231
        %v2237 = vsub.f32 %v2186, %v2231
        %v2238 = vsub.f32 %v2190, %v2231
        %v2239 = vsub.f32 %v2194, %v2231
        %v2240 = vsub.f32 %v2198, %v2231
        %v2241 = vsub.f32 %v2202, %v2231
        %v2242 = vsub.f32 %v2206, %v2231
        %v2243 = vsub.f32 %v2210, %v2231
        %v2244 = vsub.f32 %v2214, %v2231
        %v2245 = vsub.f32 %v2218, %v2231
        %v2246 = vsub.f32 %v2222, %v2231
        %v2247 = vsub.f32 %v2226, %v2231
        %v2248 = vand.u32 2147483647, %v2232
        %v2249 = vand.u32 2147483647, %v2233
        %v2250 = vand.u32 2147483647, %v2234
        %v2251 = vand.u32 2147483647, %v2235
        %v2252 = vand.u32 2147483647, %v2236
        %v2253 = vand.u32 2147483647, %v2237
        %v2254 = vand.u32 2147483647, %v2238
        %v2255 = vand.u32 2147483647, %v2239
        %v2256 = vand.u32 2147483647, %v2240
        %v2257 = vand.u32 2147483647, %v2241
        %v2258 = vand.u32 2147483647, %v2242
        %v2259 = vand.u32 2147483647, %v2243
        %v2260 = vand.u32 2147483647, %v2244
        %v2261 = vand.u32 2147483647, %v2245
        %v2262 = vand.u32 2147483647, %v2246
        %v2263 = vand.u32 2147483647, %v2247
        %v2264 = vadd.f32 %v2148, %v2248
        %v2265 = vadd.f32 %v2149, %v2249
        %v2266 = vadd.f32 %v2150, %v2250
        %v2267 = vadd.f32 %v2151, %v2251
        %v2268 = vadd.f32 %v2152, %v2252
        %v2269 = vadd.f32 %v2153, %v2253
        %v2270 = vadd.f32 %v2154, %v2254
        %v2271 = vadd.f32 %v2155, %v2255
        %v2272 = vadd.f32 %v2156, %v2256
        %v2273 = vadd.f32 %v2157, %v2257
        %v2274 = vadd.f32 %v2158, %v2258
        %v2275 = vadd.f32 %v2159, %v2259
        %v2276 = vadd.f32 %v2160, %v2260
        %v2277 = vadd.f32 %v2161, %v2261
        %v2278 = vadd.f32 %v2162, %v2262
        %v2279 = vadd.f32 %v2163, %v2263
        %2280 = vset.pattern.permute.xlu0 3
        %2281 = vperm.xlu0 %2280, %v1802
        %v2282 = vpop.permute.xlu0 %2281
        %2284 = vset.pattern.permute.xlu0 3
        %2285 = vperm.xlu0 %2284, %v1803
        %v2286 = vpop.permute.xlu0 %2285
        %2288 = vset.pattern.permute.xlu0 3
        %2289 = vperm.xlu0 %2288, %v1804
        %v2290 = vpop.permute.xlu0 %2289
        %2292 = vset.pattern.permute.xlu0 3
        %2293 = vperm.xlu0 %2292, %v1805
        %v2294 = vpop.permute.xlu0 %2293
        %2296 = vset.pattern.permute.xlu0 3
        %2297 = vperm.xlu0 %2296, %v1806
        %v2298 = vpop.permute.xlu0 %2297
        %2300 = vset.pattern.permute.xlu0 3
        %2301 = vperm.xlu0 %2300, %v1807
        %v2302 = vpop.permute.xlu0 %2301
        %2304 = vset.pattern.permute.xlu0 3
        %2305 = vperm.xlu0 %2304, %v1808
        %v2306 = vpop.permute.xlu0 %2305
        %2308 = vset.pattern.permute.xlu0 3
        %2309 = vperm.xlu0 %2308, %v1809
        %v2310 = vpop.permute.xlu0 %2309
        %2312 = vset.pattern.permute.xlu0 3
        %2313 = vperm.xlu0 %2312, %v1810
        %v2314 = vpop.permute.xlu0 %2313
        %2316 = vset.pattern.permute.xlu0 3
        %2317 = vperm.xlu0 %2316, %v1811
        %v2318 = vpop.permute.xlu0 %2317
        %2320 = vset.pattern.permute.xlu0 3
        %2321 = vperm.xlu0 %2320, %v1812
        %v2322 = vpop.permute.xlu0 %2321
        %2324 = vset.pattern.permute.xlu0 3
        %2325 = vperm.xlu0 %2324, %v1813
        %v2326 = vpop.permute.xlu0 %2325
        %2328 = vset.pattern.permute.xlu0 3
        %2329 = vperm.xlu0 %2328, %v1814
        %v2330 = vpop.permute.xlu0 %2329
        %2332 = vset.pattern.permute.xlu0 3
        %2333 = vperm.xlu0 %2332, %v1815
        %v2334 = vpop.permute.xlu0 %2333
        %2336 = vset.pattern.permute.xlu0 3
        %2337 = vperm.xlu0 %2336, %v1816
        %v2338 = vpop.permute.xlu0 %2337
        %2340 = vset.pattern.permute.xlu0 3
        %2341 = vperm.xlu0 %2340, %v1817
        %v2342 = vpop.permute.xlu0 %2341
        %v2344 = vlaneseq
        %v2345 = vshrl.u32 %v2344, 7
        %v2346 = vsub.s32 3, %v2345
        %v2347 = vrot.slane %v1930, %v2346
        %v2348 = vsub.f32 %v2282, %v2347
        %v2349 = vsub.f32 %v2286, %v2347
        %v2350 = vsub.f32 %v2290, %v2347
        %v2351 = vsub.f32 %v2294, %v2347
        %v2352 = vsub.f32 %v2298, %v2347
        %v2353 = vsub.f32 %v2302, %v2347
        %v2354 = vsub.f32 %v2306, %v2347
        %v2355 = vsub.f32 %v2310, %v2347
        %v2356 = vsub.f32 %v2314, %v2347
        %v2357 = vsub.f32 %v2318, %v2347
        %v2358 = vsub.f32 %v2322, %v2347
        %v2359 = vsub.f32 %v2326, %v2347
        %v2360 = vsub.f32 %v2330, %v2347
        %v2361 = vsub.f32 %v2334, %v2347
        %v2362 = vsub.f32 %v2338, %v2347
        %v2363 = vsub.f32 %v2342, %v2347
        %v2364 = vand.u32 2147483647, %v2348
        %v2365 = vand.u32 2147483647, %v2349
        %v2366 = vand.u32 2147483647, %v2350
        %v2367 = vand.u32 2147483647, %v2351
        %v2368 = vand.u32 2147483647, %v2352
        %v2369 = vand.u32 2147483647, %v2353
        %v2370 = vand.u32 2147483647, %v2354
        %v2371 = vand.u32 2147483647, %v2355
        %v2372 = vand.u32 2147483647, %v2356
        %v2373 = vand.u32 2147483647, %v2357
        %v2374 = vand.u32 2147483647, %v2358
        %v2375 = vand.u32 2147483647, %v2359
        %v2376 = vand.u32 2147483647, %v2360
        %v2377 = vand.u32 2147483647, %v2361
        %v2378 = vand.u32 2147483647, %v2362
        %v2379 = vand.u32 2147483647, %v2363
        %v2380 = vadd.f32 %v2264, %v2364
        %v2381 = vadd.f32 %v2265, %v2365
        %v2382 = vadd.f32 %v2266, %v2366
        %v2383 = vadd.f32 %v2267, %v2367
        %v2384 = vadd.f32 %v2268, %v2368
        %v2385 = vadd.f32 %v2269, %v2369
        %v2386 = vadd.f32 %v2270, %v2370
        %v2387 = vadd.f32 %v2271, %v2371
        %v2388 = vadd.f32 %v2272, %v2372
        %v2389 = vadd.f32 %v2273, %v2373
        %v2390 = vadd.f32 %v2274, %v2374
        %v2391 = vadd.f32 %v2275, %v2375
        %v2392 = vadd.f32 %v2276, %v2376
        %v2393 = vadd.f32 %v2277, %v2377
        %v2394 = vadd.f32 %v2278, %v2378
        %v2395 = vadd.f32 %v2279, %v2379
        %v2396 = vmul.f32 %v2380, 5.0
        %v2397 = vmul.f32 %v2381, 5.0
        %v2398 = vmul.f32 %v2382, 5.0
        %v2399 = vmul.f32 %v2383, 5.0
        %v2400 = vmul.f32 %v2384, 5.0
        %v2401 = vmul.f32 %v2385, 5.0
        %v2402 = vmul.f32 %v2386, 5.0
        %v2403 = vmul.f32 %v2387, 5.0
        %v2404 = vmul.f32 %v2388, 5.0
        %v2405 = vmul.f32 %v2389, 5.0
        %v2406 = vmul.f32 %v2390, 5.0
        %v2407 = vmul.f32 %v2391, 5.0
        %v2408 = vmul.f32 %v2392, 5.0
        %v2409 = vmul.f32 %v2393, 5.0
        %v2410 = vmul.f32 %v2394, 5.0
        %v2411 = vmul.f32 %v2395, 5.0
        %v2412 = vadd.f32 %v1786, %v2396
        %v2413 = vadd.f32 %v1787, %v2397
        %v2414 = vadd.f32 %v1788, %v2398
        %v2415 = vadd.f32 %v1789, %v2399
        %v2416 = vadd.f32 %v1790, %v2400
        %v2417 = vadd.f32 %v1791, %v2401
        %v2418 = vadd.f32 %v1792, %v2402
        %v2419 = vadd.f32 %v1793, %v2403
        %v2420 = vadd.f32 %v1794, %v2404
        %v2421 = vadd.f32 %v1795, %v2405
        %v2422 = vadd.f32 %v1796, %v2406
        %v2423 = vadd.f32 %v1797, %v2407
        %v2424 = vadd.f32 %v1798, %v2408
        %v2425 = vadd.f32 %v1799, %v2409
        %v2426 = vadd.f32 %v1800, %v2410
        %v2427 = vadd.f32 %v1801, %v2411
        %v2428 = vsub.f32 %v1914, %v1898
        %v2429 = vsub.f32 %v1915, %v1899
        %v2430 = vsub.f32 %v1916, %v1900
        %v2431 = vsub.f32 %v1917, %v1901
        %v2432 = vsub.f32 %v1918, %v1902
        %v2433 = vsub.f32 %v1919, %v1903
        %v2434 = vsub.f32 %v1920, %v1904
        %v2435 = vsub.f32 %v1921, %v1905
        %v2436 = vsub.f32 %v1922, %v1906
        %v2437 = vsub.f32 %v1923, %v1907
        %v2438 = vsub.f32 %v1924, %v1908
        %v2439 = vsub.f32 %v1925, %v1909
        %v2440 = vsub.f32 %v1926, %v1910
        %v2441 = vsub.f32 %v1927, %v1911
        %v2442 = vsub.f32 %v1928, %v1912
        %v2443 = vsub.f32 %v1929, %v1913
        %2460 = vrot.lane.b32.xlu0 %v2428, 127
        %v2461 = vpop.permute.xlu0 %2460
        %2462 = vrot.lane.b32.xlu0 %v2429, 127
        %v2463 = vpop.permute.xlu0 %2462
        %2464 = vrot.lane.b32.xlu0 %v2430, 127
        %v2465 = vpop.permute.xlu0 %2464
        %2466 = vrot.lane.b32.xlu0 %v2431, 127
        %v2467 = vpop.permute.xlu0 %2466
        %2468 = vrot.lane.b32.xlu0 %v2432, 127
        %v2469 = vpop.permute.xlu0 %2468
        %2470 = vrot.lane.b32.xlu0 %v2433, 127
        %v2471 = vpop.permute.xlu0 %2470
        %2472 = vrot.lane.b32.xlu0 %v2434, 127
        %v2473 = vpop.permute.xlu0 %2472
        %2474 = vrot.lane.b32.xlu0 %v2435, 127
        %v2475 = vpop.permute.xlu0 %2474
        %2476 = vrot.lane.b32.xlu0 %v2436, 127
        %v2477 = vpop.permute.xlu0 %2476
        %2478 = vrot.lane.b32.xlu0 %v2437, 127
        %v2479 = vpop.permute.xlu0 %2478
        %2480 = vrot.lane.b32.xlu0 %v2438, 127
        %v2481 = vpop.permute.xlu0 %2480
        %2482 = vrot.lane.b32.xlu0 %v2439, 127
        %v2483 = vpop.permute.xlu0 %2482
        %2484 = vrot.lane.b32.xlu0 %v2440, 127
        %v2485 = vpop.permute.xlu0 %2484
        %2486 = vrot.lane.b32.xlu0 %v2441, 127
        %v2487 = vpop.permute.xlu0 %2486
        %2488 = vrot.lane.b32.xlu0 %v2442, 127
        %v2489 = vpop.permute.xlu0 %2488
        %2490 = vrot.lane.b32.xlu0 %v2443, 127
        %v2491 = vpop.permute.xlu0 %2490
        %v2508 = vmul.f32 %v2428, %v2461
        %v2509 = vmul.f32 %v2429, %v2463
        %v2510 = vmul.f32 %v2430, %v2465
        %v2511 = vmul.f32 %v2431, %v2467
        %v2512 = vmul.f32 %v2432, %v2469
        %v2513 = vmul.f32 %v2433, %v2471
        %v2514 = vmul.f32 %v2434, %v2473
        %v2515 = vmul.f32 %v2435, %v2475
        %v2516 = vmul.f32 %v2436, %v2477
        %v2517 = vmul.f32 %v2437, %v2479
        %v2518 = vmul.f32 %v2438, %v2481
        %v2519 = vmul.f32 %v2439, %v2483
        %v2520 = vmul.f32 %v2440, %v2485
        %v2521 = vmul.f32 %v2441, %v2487
        %v2522 = vmul.f32 %v2442, %v2489
        %v2523 = vmul.f32 %v2443, %v2491
        %2525 = vset.pattern.permute.xlu0 0
        %2526 = vperm.xlu0 %2525, %v1898
        %v2527 = vpop.permute.xlu0 %2526
        %2530 = vset.pattern.permute.xlu0 0
        %2531 = vperm.xlu0 %2530, %v1899
        %v2532 = vpop.permute.xlu0 %2531
        %2535 = vset.pattern.permute.xlu0 0
        %2536 = vperm.xlu0 %2535, %v1900
        %v2537 = vpop.permute.xlu0 %2536
        %2540 = vset.pattern.permute.xlu0 0
        %2541 = vperm.xlu0 %2540, %v1901
        %v2542 = vpop.permute.xlu0 %2541
        %2545 = vset.pattern.permute.xlu0 0
        %2546 = vperm.xlu0 %2545, %v1902
        %v2547 = vpop.permute.xlu0 %2546
        %2550 = vset.pattern.permute.xlu0 0
        %2551 = vperm.xlu0 %2550, %v1903
        %v2552 = vpop.permute.xlu0 %2551
        %2555 = vset.pattern.permute.xlu0 0
        %2556 = vperm.xlu0 %2555, %v1904
        %v2557 = vpop.permute.xlu0 %2556
        %2560 = vset.pattern.permute.xlu0 0
        %2561 = vperm.xlu0 %2560, %v1905
        %v2562 = vpop.permute.xlu0 %2561
        %2565 = vset.pattern.permute.xlu0 0
        %2566 = vperm.xlu0 %2565, %v1906
        %v2567 = vpop.permute.xlu0 %2566
        %2570 = vset.pattern.permute.xlu0 0
        %2571 = vperm.xlu0 %2570, %v1907
        %v2572 = vpop.permute.xlu0 %2571
        %2575 = vset.pattern.permute.xlu0 0
        %2576 = vperm.xlu0 %2575, %v1908
        %v2577 = vpop.permute.xlu0 %2576
        %2580 = vset.pattern.permute.xlu0 0
        %2581 = vperm.xlu0 %2580, %v1909
        %v2582 = vpop.permute.xlu0 %2581
        %2585 = vset.pattern.permute.xlu0 0
        %2586 = vperm.xlu0 %2585, %v1910
        %v2587 = vpop.permute.xlu0 %2586
        %2590 = vset.pattern.permute.xlu0 0
        %2591 = vperm.xlu0 %2590, %v1911
        %v2592 = vpop.permute.xlu0 %2591
        %2595 = vset.pattern.permute.xlu0 0
        %2596 = vperm.xlu0 %2595, %v1912
        %v2597 = vpop.permute.xlu0 %2596
        %2600 = vset.pattern.permute.xlu0 0
        %2601 = vperm.xlu0 %2600, %v1913
        %v2602 = vpop.permute.xlu0 %2601
        %v2604 = vlaneseq
        %v2605 = vshrl.u32 %v2604, 7
        %v2606 = vsub.s32 4, %v2605
        %v2607 = vrot.slane %v1930, %v2606
        %v2608 = vmax.f32 %v2527, %v2607
        %v2609 = vmax.f32 %v2532, %v2607
        %v2610 = vmax.f32 %v2537, %v2607
        %v2611 = vmax.f32 %v2542, %v2607
        %v2612 = vmax.f32 %v2547, %v2607
        %v2613 = vmax.f32 %v2552, %v2607
        %v2614 = vmax.f32 %v2557, %v2607
        %v2615 = vmax.f32 %v2562, %v2607
        %v2616 = vmax.f32 %v2567, %v2607
        %v2617 = vmax.f32 %v2572, %v2607
        %v2618 = vmax.f32 %v2577, %v2607
        %v2619 = vmax.f32 %v2582, %v2607
        %v2620 = vmax.f32 %v2587, %v2607
        %v2621 = vmax.f32 %v2592, %v2607
        %v2622 = vmax.f32 %v2597, %v2607
        %v2623 = vmax.f32 %v2602, %v2607
        %2624 = vset.pattern.permute.xlu0 1
        %2625 = vperm.xlu0 %2624, %v1898
        %v2626 = vpop.permute.xlu0 %2625
        %2628 = vset.pattern.permute.xlu0 1
        %2629 = vperm.xlu0 %2628, %v1899
        %v2630 = vpop.permute.xlu0 %2629
        %2632 = vset.pattern.permute.xlu0 1
        %2633 = vperm.xlu0 %2632, %v1900
        %v2634 = vpop.permute.xlu0 %2633
        %2636 = vset.pattern.permute.xlu0 1
        %2637 = vperm.xlu0 %2636, %v1901
        %v2638 = vpop.permute.xlu0 %2637
        %2640 = vset.pattern.permute.xlu0 1
        %2641 = vperm.xlu0 %2640, %v1902
        %v2642 = vpop.permute.xlu0 %2641
        %2644 = vset.pattern.permute.xlu0 1
        %2645 = vperm.xlu0 %2644, %v1903
        %v2646 = vpop.permute.xlu0 %2645
        %2648 = vset.pattern.permute.xlu0 1
        %2649 = vperm.xlu0 %2648, %v1904
        %v2650 = vpop.permute.xlu0 %2649
        %2652 = vset.pattern.permute.xlu0 1
        %2653 = vperm.xlu0 %2652, %v1905
        %v2654 = vpop.permute.xlu0 %2653
        %2656 = vset.pattern.permute.xlu0 1
        %2657 = vperm.xlu0 %2656, %v1906
        %v2658 = vpop.permute.xlu0 %2657
        %2660 = vset.pattern.permute.xlu0 1
        %2661 = vperm.xlu0 %2660, %v1907
        %v2662 = vpop.permute.xlu0 %2661
        %2664 = vset.pattern.permute.xlu0 1
        %2665 = vperm.xlu0 %2664, %v1908
        %v2666 = vpop.permute.xlu0 %2665
        %2668 = vset.pattern.permute.xlu0 1
        %2669 = vperm.xlu0 %2668, %v1909
        %v2670 = vpop.permute.xlu0 %2669
        %2672 = vset.pattern.permute.xlu0 1
        %2673 = vperm.xlu0 %2672, %v1910
        %v2674 = vpop.permute.xlu0 %2673
        %2676 = vset.pattern.permute.xlu0 1
        %2677 = vperm.xlu0 %2676, %v1911
        %v2678 = vpop.permute.xlu0 %2677
        %2680 = vset.pattern.permute.xlu0 1
        %2681 = vperm.xlu0 %2680, %v1912
        %v2682 = vpop.permute.xlu0 %2681
        %2684 = vset.pattern.permute.xlu0 1
        %2685 = vperm.xlu0 %2684, %v1913
        %v2686 = vpop.permute.xlu0 %2685
        %v2688 = vlaneseq
        %v2689 = vshrl.u32 %v2688, 7
        %v2690 = vsub.s32 5, %v2689
        %v2691 = vrot.slane %v1930, %v2690
        %v2692 = vmax.f32 %v2626, %v2691
        %v2693 = vmax.f32 %v2630, %v2691
        %v2694 = vmax.f32 %v2634, %v2691
        %v2695 = vmax.f32 %v2638, %v2691
        %v2696 = vmax.f32 %v2642, %v2691
        %v2697 = vmax.f32 %v2646, %v2691
        %v2698 = vmax.f32 %v2650, %v2691
        %v2699 = vmax.f32 %v2654, %v2691
        %v2700 = vmax.f32 %v2658, %v2691
        %v2701 = vmax.f32 %v2662, %v2691
        %v2702 = vmax.f32 %v2666, %v2691
        %v2703 = vmax.f32 %v2670, %v2691
        %v2704 = vmax.f32 %v2674, %v2691
        %v2705 = vmax.f32 %v2678, %v2691
        %v2706 = vmax.f32 %v2682, %v2691
        %v2707 = vmax.f32 %v2686, %v2691
        %2709 = vset.pattern.permute.xlu0 0
        %2710 = vperm.xlu0 %2709, %v1914
        %v2711 = vpop.permute.xlu0 %2710
        %2714 = vset.pattern.permute.xlu0 0
        %2715 = vperm.xlu0 %2714, %v1915
        %v2716 = vpop.permute.xlu0 %2715
        %2719 = vset.pattern.permute.xlu0 0
        %2720 = vperm.xlu0 %2719, %v1916
        %v2721 = vpop.permute.xlu0 %2720
        %2724 = vset.pattern.permute.xlu0 0
        %2725 = vperm.xlu0 %2724, %v1917
        %v2726 = vpop.permute.xlu0 %2725
        %2729 = vset.pattern.permute.xlu0 0
        %2730 = vperm.xlu0 %2729, %v1918
        %v2731 = vpop.permute.xlu0 %2730
        %2734 = vset.pattern.permute.xlu0 0
        %2735 = vperm.xlu0 %2734, %v1919
        %v2736 = vpop.permute.xlu0 %2735
        %2739 = vset.pattern.permute.xlu0 0
        %2740 = vperm.xlu0 %2739, %v1920
        %v2741 = vpop.permute.xlu0 %2740
        %2744 = vset.pattern.permute.xlu0 0
        %2745 = vperm.xlu0 %2744, %v1921
        %v2746 = vpop.permute.xlu0 %2745
        %2749 = vset.pattern.permute.xlu0 0
        %2750 = vperm.xlu0 %2749, %v1922
        %v2751 = vpop.permute.xlu0 %2750
        %2754 = vset.pattern.permute.xlu0 0
        %2755 = vperm.xlu0 %2754, %v1923
        %v2756 = vpop.permute.xlu0 %2755
        %2759 = vset.pattern.permute.xlu0 0
        %2760 = vperm.xlu0 %2759, %v1924
        %v2761 = vpop.permute.xlu0 %2760
        %2764 = vset.pattern.permute.xlu0 0
        %2765 = vperm.xlu0 %2764, %v1925
        %v2766 = vpop.permute.xlu0 %2765
        %2769 = vset.pattern.permute.xlu0 0
        %2770 = vperm.xlu0 %2769, %v1926
        %v2771 = vpop.permute.xlu0 %2770
        %2774 = vset.pattern.permute.xlu0 0
        %2775 = vperm.xlu0 %2774, %v1927
        %v2776 = vpop.permute.xlu0 %2775
        %2779 = vset.pattern.permute.xlu0 0
        %2780 = vperm.xlu0 %2779, %v1928
        %v2781 = vpop.permute.xlu0 %2780
        %2784 = vset.pattern.permute.xlu0 0
        %2785 = vperm.xlu0 %2784, %v1929
        %v2786 = vpop.permute.xlu0 %2785
        %v2788 = vlaneseq
        %v2789 = vshrl.u32 %v2788, 7
        %v2790 = vsub.s32 6, %v2789
        %v2791 = vrot.slane %v1930, %v2790
        %v2792 = vmin.f32 %v2711, %v2791
        %v2793 = vmin.f32 %v2716, %v2791
        %v2794 = vmin.f32 %v2721, %v2791
        %v2795 = vmin.f32 %v2726, %v2791
        %v2796 = vmin.f32 %v2731, %v2791
        %v2797 = vmin.f32 %v2736, %v2791
        %v2798 = vmin.f32 %v2741, %v2791
        %v2799 = vmin.f32 %v2746, %v2791
        %v2800 = vmin.f32 %v2751, %v2791
        %v2801 = vmin.f32 %v2756, %v2791
        %v2802 = vmin.f32 %v2761, %v2791
        %v2803 = vmin.f32 %v2766, %v2791
        %v2804 = vmin.f32 %v2771, %v2791
        %v2805 = vmin.f32 %v2776, %v2791
        %v2806 = vmin.f32 %v2781, %v2791
        %v2807 = vmin.f32 %v2786, %v2791
        %2808 = vset.pattern.permute.xlu0 1
        %2809 = vperm.xlu0 %2808, %v1914
        %v2810 = vpop.permute.xlu0 %2809
        %2812 = vset.pattern.permute.xlu0 1
        %2813 = vperm.xlu0 %2812, %v1915
        %v2814 = vpop.permute.xlu0 %2813
        %2816 = vset.pattern.permute.xlu0 1
        %2817 = vperm.xlu0 %2816, %v1916
        %v2818 = vpop.permute.xlu0 %2817
        %2820 = vset.pattern.permute.xlu0 1
        %2821 = vperm.xlu0 %2820, %v1917
        %v2822 = vpop.permute.xlu0 %2821
        %2824 = vset.pattern.permute.xlu0 1
        %2825 = vperm.xlu0 %2824, %v1918
        %v2826 = vpop.permute.xlu0 %2825
        %2828 = vset.pattern.permute.xlu0 1
        %2829 = vperm.xlu0 %2828, %v1919
        %v2830 = vpop.permute.xlu0 %2829
        %2832 = vset.pattern.permute.xlu0 1
        %2833 = vperm.xlu0 %2832, %v1920
        %v2834 = vpop.permute.xlu0 %2833
        %2836 = vset.pattern.permute.xlu0 1
        %2837 = vperm.xlu0 %2836, %v1921
        %v2838 = vpop.permute.xlu0 %2837
        %2840 = vset.pattern.permute.xlu0 1
        %2841 = vperm.xlu0 %2840, %v1922
        %v2842 = vpop.permute.xlu0 %2841
        %2844 = vset.pattern.permute.xlu0 1
        %2845 = vperm.xlu0 %2844, %v1923
        %v2846 = vpop.permute.xlu0 %2845
        %2848 = vset.pattern.permute.xlu0 1
        %2849 = vperm.xlu0 %2848, %v1924
        %v2850 = vpop.permute.xlu0 %2849
        %2852 = vset.pattern.permute.xlu0 1
        %2853 = vperm.xlu0 %2852, %v1925
        %v2854 = vpop.permute.xlu0 %2853
        %2856 = vset.pattern.permute.xlu0 1
        %2857 = vperm.xlu0 %2856, %v1926
        %v2858 = vpop.permute.xlu0 %2857
        %2860 = vset.pattern.permute.xlu0 1
        %2861 = vperm.xlu0 %2860, %v1927
        %v2862 = vpop.permute.xlu0 %2861
        %2864 = vset.pattern.permute.xlu0 1
        %2865 = vperm.xlu0 %2864, %v1928
        %v2866 = vpop.permute.xlu0 %2865
        %2868 = vset.pattern.permute.xlu0 1
        %2869 = vperm.xlu0 %2868, %v1929
        %v2870 = vpop.permute.xlu0 %2869
        %v2872 = vlaneseq
        %v2873 = vshrl.u32 %v2872, 7
        %v2874 = vsub.s32 7, %v2873
        %v2875 = vrot.slane %v1930, %v2874
        %v2876 = vmin.f32 %v2810, %v2875
        %v2877 = vmin.f32 %v2814, %v2875
        %v2878 = vmin.f32 %v2818, %v2875
        %v2879 = vmin.f32 %v2822, %v2875
        %v2880 = vmin.f32 %v2826, %v2875
        %v2881 = vmin.f32 %v2830, %v2875
        %v2882 = vmin.f32 %v2834, %v2875
        %v2883 = vmin.f32 %v2838, %v2875
        %v2884 = vmin.f32 %v2842, %v2875
        %v2885 = vmin.f32 %v2846, %v2875
        %v2886 = vmin.f32 %v2850, %v2875
        %v2887 = vmin.f32 %v2854, %v2875
        %v2888 = vmin.f32 %v2858, %v2875
        %v2889 = vmin.f32 %v2862, %v2875
        %v2890 = vmin.f32 %v2866, %v2875
        %v2891 = vmin.f32 %v2870, %v2875
        %v2892 = vsub.f32 %v2792, %v2608
        %v2893 = vsub.f32 %v2793, %v2609
        %v2894 = vsub.f32 %v2794, %v2610
        %v2895 = vsub.f32 %v2795, %v2611
        %v2896 = vsub.f32 %v2796, %v2612
        %v2897 = vsub.f32 %v2797, %v2613
        %v2898 = vsub.f32 %v2798, %v2614
        %v2899 = vsub.f32 %v2799, %v2615
        %v2900 = vsub.f32 %v2800, %v2616
        %v2901 = vsub.f32 %v2801, %v2617
        %v2902 = vsub.f32 %v2802, %v2618
        %v2903 = vsub.f32 %v2803, %v2619
        %v2904 = vsub.f32 %v2804, %v2620
        %v2905 = vsub.f32 %v2805, %v2621
        %v2906 = vsub.f32 %v2806, %v2622
        %v2907 = vsub.f32 %v2807, %v2623
        %v2908 = vmax.f32 %v2892, 0.0
        %v2909 = vmax.f32 %v2893, 0.0
        %v2910 = vmax.f32 %v2894, 0.0
        %v2911 = vmax.f32 %v2895, 0.0
        %v2912 = vmax.f32 %v2896, 0.0
        %v2913 = vmax.f32 %v2897, 0.0
        %v2914 = vmax.f32 %v2898, 0.0
        %v2915 = vmax.f32 %v2899, 0.0
        %v2916 = vmax.f32 %v2900, 0.0
        %v2917 = vmax.f32 %v2901, 0.0
        %v2918 = vmax.f32 %v2902, 0.0
        %v2919 = vmax.f32 %v2903, 0.0
        %v2920 = vmax.f32 %v2904, 0.0
        %v2921 = vmax.f32 %v2905, 0.0
        %v2922 = vmax.f32 %v2906, 0.0
        %v2923 = vmax.f32 %v2907, 0.0
        %v2924 = vsub.f32 %v2876, %v2692
        %v2925 = vsub.f32 %v2877, %v2693
        %v2926 = vsub.f32 %v2878, %v2694
        %v2927 = vsub.f32 %v2879, %v2695
        %v2928 = vsub.f32 %v2880, %v2696
        %v2929 = vsub.f32 %v2881, %v2697
        %v2930 = vsub.f32 %v2882, %v2698
        %v2931 = vsub.f32 %v2883, %v2699
        %v2932 = vsub.f32 %v2884, %v2700
        %v2933 = vsub.f32 %v2885, %v2701
        %v2934 = vsub.f32 %v2886, %v2702
        %v2935 = vsub.f32 %v2887, %v2703
        %v2936 = vsub.f32 %v2888, %v2704
        %v2937 = vsub.f32 %v2889, %v2705
        %v2938 = vsub.f32 %v2890, %v2706
        %v2939 = vsub.f32 %v2891, %v2707
        %v2940 = vmax.f32 %v2924, 0.0
        %v2941 = vmax.f32 %v2925, 0.0
        %v2942 = vmax.f32 %v2926, 0.0
        %v2943 = vmax.f32 %v2927, 0.0
        %v2944 = vmax.f32 %v2928, 0.0
        %v2945 = vmax.f32 %v2929, 0.0
        %v2946 = vmax.f32 %v2930, 0.0
        %v2947 = vmax.f32 %v2931, 0.0
        %v2948 = vmax.f32 %v2932, 0.0
        %v2949 = vmax.f32 %v2933, 0.0
        %v2950 = vmax.f32 %v2934, 0.0
        %v2951 = vmax.f32 %v2935, 0.0
        %v2952 = vmax.f32 %v2936, 0.0
        %v2953 = vmax.f32 %v2937, 0.0
        %v2954 = vmax.f32 %v2938, 0.0
        %v2955 = vmax.f32 %v2939, 0.0
        %v2956 = vmul.f32 %v2908, %v2940
        %v2957 = vmul.f32 %v2909, %v2941
        %v2958 = vmul.f32 %v2910, %v2942
        %v2959 = vmul.f32 %v2911, %v2943
        %v2960 = vmul.f32 %v2912, %v2944
        %v2961 = vmul.f32 %v2913, %v2945
        %v2962 = vmul.f32 %v2914, %v2946
        %v2963 = vmul.f32 %v2915, %v2947
        %v2964 = vmul.f32 %v2916, %v2948
        %v2965 = vmul.f32 %v2917, %v2949
        %v2966 = vmul.f32 %v2918, %v2950
        %v2967 = vmul.f32 %v2919, %v2951
        %v2968 = vmul.f32 %v2920, %v2952
        %v2969 = vmul.f32 %v2921, %v2953
        %v2970 = vmul.f32 %v2922, %v2954
        %v2971 = vmul.f32 %v2923, %v2955
        %2973 = vset.pattern.permute.xlu0 0
        %2974 = vperm.xlu0 %2973, %v2508
        %v2975 = vpop.permute.xlu0 %2974
        %2978 = vset.pattern.permute.xlu0 0
        %2979 = vperm.xlu0 %2978, %v2509
        %v2980 = vpop.permute.xlu0 %2979
        %2983 = vset.pattern.permute.xlu0 0
        %2984 = vperm.xlu0 %2983, %v2510
        %v2985 = vpop.permute.xlu0 %2984
        %2988 = vset.pattern.permute.xlu0 0
        %2989 = vperm.xlu0 %2988, %v2511
        %v2990 = vpop.permute.xlu0 %2989
        %2993 = vset.pattern.permute.xlu0 0
        %2994 = vperm.xlu0 %2993, %v2512
        %v2995 = vpop.permute.xlu0 %2994
        %2998 = vset.pattern.permute.xlu0 0
        %2999 = vperm.xlu0 %2998, %v2513
        %v3000 = vpop.permute.xlu0 %2999
        %3003 = vset.pattern.permute.xlu0 0
        %3004 = vperm.xlu0 %3003, %v2514
        %v3005 = vpop.permute.xlu0 %3004
        %3008 = vset.pattern.permute.xlu0 0
        %3009 = vperm.xlu0 %3008, %v2515
        %v3010 = vpop.permute.xlu0 %3009
        %3013 = vset.pattern.permute.xlu0 0
        %3014 = vperm.xlu0 %3013, %v2516
        %v3015 = vpop.permute.xlu0 %3014
        %3018 = vset.pattern.permute.xlu0 0
        %3019 = vperm.xlu0 %3018, %v2517
        %v3020 = vpop.permute.xlu0 %3019
        %3023 = vset.pattern.permute.xlu0 0
        %3024 = vperm.xlu0 %3023, %v2518
        %v3025 = vpop.permute.xlu0 %3024
        %3028 = vset.pattern.permute.xlu0 0
        %3029 = vperm.xlu0 %3028, %v2519
        %v3030 = vpop.permute.xlu0 %3029
        %3033 = vset.pattern.permute.xlu0 0
        %3034 = vperm.xlu0 %3033, %v2520
        %v3035 = vpop.permute.xlu0 %3034
        %3038 = vset.pattern.permute.xlu0 0
        %3039 = vperm.xlu0 %3038, %v2521
        %v3040 = vpop.permute.xlu0 %3039
        %3043 = vset.pattern.permute.xlu0 0
        %3044 = vperm.xlu0 %3043, %v2522
        %v3045 = vpop.permute.xlu0 %3044
        %3048 = vset.pattern.permute.xlu0 0
        %3049 = vperm.xlu0 %3048, %v2523
        %v3050 = vpop.permute.xlu0 %3049
        %v3052 = vlaneseq
        %v3053 = vshrl.u32 %v3052, 7
        %v3054 = vsub.s32 0, %v3053
        %v3055 = vrot.slane %v1931, %v3054
        %v3056 = vadd.f32 %v2975, %v3055
        %v3057 = vadd.f32 %v2980, %v3055
        %v3058 = vadd.f32 %v2985, %v3055
        %v3059 = vadd.f32 %v2990, %v3055
        %v3060 = vadd.f32 %v2995, %v3055
        %v3061 = vadd.f32 %v3000, %v3055
        %v3062 = vadd.f32 %v3005, %v3055
        %v3063 = vadd.f32 %v3010, %v3055
        %v3064 = vadd.f32 %v3015, %v3055
        %v3065 = vadd.f32 %v3020, %v3055
        %v3066 = vadd.f32 %v3025, %v3055
        %v3067 = vadd.f32 %v3030, %v3055
        %v3068 = vadd.f32 %v3035, %v3055
        %v3069 = vadd.f32 %v3040, %v3055
        %v3070 = vadd.f32 %v3045, %v3055
        %v3071 = vadd.f32 %v3050, %v3055
        %v3072 = vsub.f32 %v3056, %v2956
        %v3073 = vsub.f32 %v3057, %v2957
        %v3074 = vsub.f32 %v3058, %v2958
        %v3075 = vsub.f32 %v3059, %v2959
        %v3076 = vsub.f32 %v3060, %v2960
        %v3077 = vsub.f32 %v3061, %v2961
        %v3078 = vsub.f32 %v3062, %v2962
        %v3079 = vsub.f32 %v3063, %v2963
        %v3080 = vsub.f32 %v3064, %v2964
        %v3081 = vsub.f32 %v3065, %v2965
        %v3082 = vsub.f32 %v3066, %v2966
        %v3083 = vsub.f32 %v3067, %v2967
        %v3084 = vsub.f32 %v3068, %v2968
        %v3085 = vsub.f32 %v3069, %v2969
        %v3086 = vsub.f32 %v3070, %v2970
        %v3087 = vsub.f32 %v3071, %v2971
        %v3088 = vrcp.pop %v3072
        %v3089 = vrcp.pop %v3073
        %v3090 = vrcp.pop %v3074
        %v3091 = vrcp.pop %v3075
        %v3092 = vrcp.pop %v3076
        %v3093 = vrcp.pop %v3077
        %v3094 = vrcp.pop %v3078
        %v3095 = vrcp.pop %v3079
        %v3096 = vrcp.pop %v3080
        %v3097 = vrcp.pop %v3081
        %v3098 = vrcp.pop %v3082
        %v3099 = vrcp.pop %v3083
        %v3100 = vrcp.pop %v3084
        %v3101 = vrcp.pop %v3085
        %v3102 = vrcp.pop %v3086
        %v3103 = vrcp.pop %v3087
        %v3104 = vmul.f32 %v2956, %v3088
        %v3105 = vmul.f32 %v2957, %v3089
        %v3106 = vmul.f32 %v2958, %v3090
        %v3107 = vmul.f32 %v2959, %v3091
        %v3108 = vmul.f32 %v2960, %v3092
        %v3109 = vmul.f32 %v2961, %v3093
        %v3110 = vmul.f32 %v2962, %v3094
        %v3111 = vmul.f32 %v2963, %v3095
        %v3112 = vmul.f32 %v2964, %v3096
        %v3113 = vmul.f32 %v2965, %v3097
        %v3114 = vmul.f32 %v2966, %v3098
        %v3115 = vmul.f32 %v2967, %v3099
        %v3116 = vmul.f32 %v2968, %v3100
        %v3117 = vmul.f32 %v2969, %v3101
        %v3118 = vmul.f32 %v2970, %v3102
        %v3119 = vmul.f32 %v2971, %v3103
        %v3120 = vmul.f32 %v3104, 2.0
        %v3121 = vmul.f32 %v3105, 2.0
        %v3122 = vmul.f32 %v3106, 2.0
        %v3123 = vmul.f32 %v3107, 2.0
        %v3124 = vmul.f32 %v3108, 2.0
        %v3125 = vmul.f32 %v3109, 2.0
        %v3126 = vmul.f32 %v3110, 2.0
        %v3127 = vmul.f32 %v3111, 2.0
        %v3128 = vmul.f32 %v3112, 2.0
        %v3129 = vmul.f32 %v3113, 2.0
        %v3130 = vmul.f32 %v3114, 2.0
        %v3131 = vmul.f32 %v3115, 2.0
        %v3132 = vmul.f32 %v3116, 2.0
        %v3133 = vmul.f32 %v3117, 2.0
        %v3134 = vmul.f32 %v3118, 2.0
        %v3135 = vmul.f32 %v3119, 2.0
        %v3136 = vsub.f32 1.0, %v3120
        %v3137 = vsub.f32 1.0, %v3121
        %v3138 = vsub.f32 1.0, %v3122
        %v3139 = vsub.f32 1.0, %v3123
        %v3140 = vsub.f32 1.0, %v3124
        %v3141 = vsub.f32 1.0, %v3125
        %v3142 = vsub.f32 1.0, %v3126
        %v3143 = vsub.f32 1.0, %v3127
        %v3144 = vsub.f32 1.0, %v3128
        %v3145 = vsub.f32 1.0, %v3129
        %v3146 = vsub.f32 1.0, %v3130
        %v3147 = vsub.f32 1.0, %v3131
        %v3148 = vsub.f32 1.0, %v3132
        %v3149 = vsub.f32 1.0, %v3133
        %v3150 = vsub.f32 1.0, %v3134
        %v3151 = vsub.f32 1.0, %v3135
        %v3152 = vmul.f32 %v3136, 2.0
        %v3153 = vmul.f32 %v3137, 2.0
        %v3154 = vmul.f32 %v3138, 2.0
        %v3155 = vmul.f32 %v3139, 2.0
        %v3156 = vmul.f32 %v3140, 2.0
        %v3157 = vmul.f32 %v3141, 2.0
        %v3158 = vmul.f32 %v3142, 2.0
        %v3159 = vmul.f32 %v3143, 2.0
        %v3160 = vmul.f32 %v3144, 2.0
        %v3161 = vmul.f32 %v3145, 2.0
        %v3162 = vmul.f32 %v3146, 2.0
        %v3163 = vmul.f32 %v3147, 2.0
        %v3164 = vmul.f32 %v3148, 2.0
        %v3165 = vmul.f32 %v3149, 2.0
        %v3166 = vmul.f32 %v3150, 2.0
        %v3167 = vmul.f32 %v3151, 2.0
        %v3168 = vadd.f32 %v2412, %v3152
        %v3169 = vadd.f32 %v2413, %v3153
        %v3170 = vadd.f32 %v2414, %v3154
        %v3171 = vadd.f32 %v2415, %v3155
        %v3172 = vadd.f32 %v2416, %v3156
        %v3173 = vadd.f32 %v2417, %v3157
        %v3174 = vadd.f32 %v2418, %v3158
        %v3175 = vadd.f32 %v2419, %v3159
        %v3176 = vadd.f32 %v2420, %v3160
        %v3177 = vadd.f32 %v2421, %v3161
        %v3178 = vadd.f32 %v2422, %v3162
        %v3179 = vadd.f32 %v2423, %v3163
        %v3180 = vadd.f32 %v2424, %v3164
        %v3181 = vadd.f32 %v2425, %v3165
        %v3182 = vadd.f32 %v2426, %v3166
        %v3183 = vadd.f32 %v2427, %v3167
        %3184 = vst [vmem:[%s256] sm:$0xff] %v3168
        %3185 = vst [vmem:[%s256 + $0x8] sm:$0xff] %v3169
        %3186 = vst [vmem:[%s256 + $0x10] sm:$0xff] %v3170
        %3187 = vst [vmem:[%s256 + $0x18] sm:$0xff] %v3171
        %3188 = vst [vmem:[%s256 + $0x20] sm:$0xff] %v3172
        %3189 = vst [vmem:[%s256 + $0x28] sm:$0xff] %v3173
        %3190 = vst [vmem:[%s256 + $0x30] sm:$0xff] %v3174
        %3191 = vst [vmem:[%s256 + $0x38] sm:$0xff] %v3175
        %3192 = vst [vmem:[%s256 + $0x40] sm:$0xff] %v3176
        %3193 = vst [vmem:[%s256 + $0x48] sm:$0xff] %v3177
        %3194 = vst [vmem:[%s256 + $0x50] sm:$0xff] %v3178
        %3195 = vst [vmem:[%s256 + $0x58] sm:$0xff] %v3179
        %3196 = vst [vmem:[%s256 + $0x60] sm:$0xff] %v3180
        %3197 = vst [vmem:[%s256 + $0x68] sm:$0xff] %v3181
        %3198 = vst [vmem:[%s256 + $0x70] sm:$0xff] %v3182
        %3199 = vst [vmem:[%s256 + $0x78] sm:$0xff] %v3183
        %s3200 = sand.u32 %s133, 1
        %s3201 = scalar_lea.sflag [#allocation4], %s3200
        %s3202 = sand.u32 %s133, 1
        %s3203 = smul.addr %s3202, 128
        %s3204 = scalar_lea.vmem [#allocation5], %s3203
        // Predicated region
        $region41: #{tpu_custom_call.1} parent=35 // pred_check
          %p3205 = pneg %p143
        $region42: #{tpu_custom_call.1} parent=35 // pred_check_branch
          %3207 = sbr.rel (%p3205) target = $region44
        $region43: #{tpu_custom_call.1} parent=35 // pred_region
          %s3209 = ssub.s32 2048, 2048
          %3210 = vsyncadd %s3201, %s3209
          %s3211 = smul.addr %s21, 16
          %s3212 = smul.addr %s3211, 128
          %s3213 = scalar_lea.hbm %s4, %s3212
          %s3214 = sshll.u32 %s3204, 4
          %s3215 = int_to_ptr.vmem [resolvable:$true] %s3214
          %3220 = dma.vmem_to_hbm [thread:$0]  %s3215, 2048, %s3213, %s3201, 128, 128, 8
        $region44: #{tpu_custom_call.1} parent=35 // pred_fallthru
          _
      $region36: #{tpu_custom_call.1} parent=5 // pred_fallthru
        _
      %p3221 = scmp.le.s32.totalorder 2, %s16
      // Predicated region
      $region45: #{tpu_custom_call.1} parent=5 // pred_check
        %p3222 = pneg %p3221
      $region46: #{tpu_custom_call.1} parent=5 // pred_check_branch
        %3224 = sbr.rel (%p3222) target = $region48
      $region47: #{tpu_custom_call.1} parent=5 // pred_region
        %s3225 = ssub.s32 %s16, 2
        // Predicated region
        $region49: #{tpu_custom_call.1} parent=47 // pred_check
          %p3226 = pneg %p149
        $region50: #{tpu_custom_call.1} parent=47 // pred_check_branch
          %3228 = sbr.rel (%p3226) target = $region52
        $region51: #{tpu_custom_call.1} parent=47 // pred_region
          %s3229 = sand.u32 %s134, 1
          %s3230 = scalar_lea.sflag [#allocation4], %s3229
          %s3231 = sand.u32 %s134, 1
          %s3232 = smul.addr %s3231, 128
          %s3233 = scalar_lea.vmem [#allocation5], %s3232
          %3234 = dma.done %s3230, 2048
        $region52: #{tpu_custom_call.1} parent=47 // pred_fallthru
          _
      $region48: #{tpu_custom_call.1} parent=5 // pred_fallthru
        _
    $region6: #{tpu_custom_call.1} parent=1 // loop_footer
      %s20 = sadd.s32 1, %s16
    $region7: #{tpu_custom_call.1} parent=1 // loop_footer_branch
      %15 = sbr.rel target = $region3
    $region8: #{tpu_custom_call.1} parent=1 // loop_exit
      _
    %3235 = vsyncpa [#allocation3], 1
    %s3236 = scalar_lea.sflag [#allocation3], 1
    %3237 = vsyncpa %s3236, 1
    %3238 = vsyncpa [#allocation4], 1
    %s3239 = scalar_lea.sflag [#allocation4], 1
    %3240 = vsyncpa %s3239, 1

</llo_original>
